<compile_context>
chip_gen: v7x
topology: tpu7x:2x2x1
jax: 0.10.0
libtpu: 0.0.40
codegen_flags: <defaults>
</compile_context>

<pallas_src>
import jax
import jax.numpy as jnp
from jax.experimental import pallas as pl
from jax.experimental.pallas import tpu as pltpu


_VMEM_LIMIT_BYTES = 48 * 1024 * 1024          # < v7x 64 MiB physical, ample on v5e/v6e
_DEFAULT_VMEM_BUDGET = 24 * 1024 * 1024       # target for blocks + weights + live values

_MM_WEIGHTS = ("wq", "wk", "wv", "wo", "w1", "w2")
_PARAM_ORDER = ("wq", "bq", "wk", "bk", "wv", "bv", "wo", "bo",
                "g1", "be1", "w1", "b1", "w2", "b2", "g2", "be2")


# ----------------------------------------------------------------------------
# helpers
# ----------------------------------------------------------------------------
def _layer_norm(x, gamma, beta, eps=1e-5):
    mu = jnp.mean(x, axis=-1, keepdims=True)
    var = jnp.mean((x - mu) ** 2, axis=-1, keepdims=True)
    return (x - mu) * jax.lax.rsqrt(var + eps) * gamma + beta


_BUFFERED_SINGLE = None


def _single_buffered_supported():
    """Probe whether pipeline_mode=pl.Buffered(1) works for grid-invariant
    inputs on this jax/Mosaic build; fall back quietly if it does not."""
    global _BUFFERED_SINGLE
    if _BUFFERED_SINGLE is None:
        def _probe(x_ref, o_ref):
            o_ref[...] = x_ref[...] + 1.0
        try:
            spec = pl.BlockSpec((8, 128), lambda i: (0, 0),
                                pipeline_mode=pl.Buffered(1))
            out = pl.pallas_call(
                _probe,
                out_shape=jax.ShapeDtypeStruct((8, 128), jnp.float32),
                grid=(2,),
                in_specs=[spec],
                out_specs=pl.BlockSpec((8, 128), lambda i: (0, 0)),
            )(jnp.zeros((8, 128), jnp.float32))
            jax.block_until_ready(out)
            _BUFFERED_SINGLE = True
        except Exception:
            _BUFFERED_SINGLE = False
    return _BUFFERED_SINGLE


def _param_spec(shape):
    """Full-array, grid-invariant input; single-buffered when supported."""
    nd = len(shape)
    idx = lambda i, _nd=nd: (0,) * _nd
    if _single_buffered_supported():
        return pl.BlockSpec(shape, idx, pipeline_mode=pl.Buffered(1))
    return pl.BlockSpec(shape, idx)


def _vmem_estimate(tb, *, seq, d, d_ff, n_heads, n_nodes, has_gcn,
                   return_attn, mm_bytes, weight_bufs):
    """Rough per-grid-step VMEM footprint (bytes) for a TB-row tile."""
    f32 = 4
    m = tb * seq
    # pipelined blocks: x in + out, double-buffered
    blocks = 2 * m * d * f32 * 2
    if return_attn:
        blocks += 2 * tb * n_heads * seq * seq * f32
    # grid-invariant params
    w = (4 * d * d + 2 * d * d_ff + (d * d if has_gcn else 0)) * mm_bytes
    w += (10 * d + d_ff + (n_nodes * n_nodes + d if has_gcn else 0)) * f32
    w *= weight_bufs
    # live intermediates inside the body (q/k/v + casts, ffn hidden, ctx, ...)
    live = m * d * (4 * f32 + 4 * mm_bytes)
    live += m * d_ff * (f32 + mm_bytes)
    live += m * d * 3 * f32
    live += tb * seq * seq * f32 * (n_heads + 2 if return_attn else 3)
    if has_gcn:
        live += m * d * 2 * f32
    return int(blocks + w + 1.25 * live)


def _pick_tb(bn, seq, n_nodes, est_fn, budget):
    """Largest multiple of N dividing B*N that fits the VMEM budget, preferring
    >= 4 grid steps (v7x: 2 TensorCores) and M = TB*P >= 256 MXU rows."""
    cands = [t for t in range(n_nodes, bn + 1, n_nodes)
             if bn % t == 0 and ((t * seq) % 8 == 0 or t == bn)]
    if not cands:
        cands = [bn]
    fits = [t for t in cands if est_fn(t) <= budget] or cands[:1]
    for want_steps, want_rows in ((4, 256), (2, 256), (4, 0), (2, 0), (1, 0)):
        pool = [t for t in fits if bn // t >= want_steps and t * seq >= want_rows]
        if pool:
            return max(pool)
    return fits[-1]


# ----------------------------------------------------------------------------
# graph learning:  adj = softmax(relu(E @ E^T), axis=-1)
# (N x node_dim is tiny -> plain JAX; a dedicated pallas_call costs more in
#  launch/DMA setup than the compute.)
# ----------------------------------------------------------------------------
def graph_learning(node_embs):
    s = jnp.maximum(node_embs @ node_embs.T, 0.0)
    return jax.nn.softmax(s, axis=-1)


# ----------------------------------------------------------------------------
# fused encoder layer kernel:
#   MHSA + residual + norm1 + ReLU-FFN + norm2 (+ GCN on cls tokens) + self.norm
# grid over (B*N)//TB slabs of (TB*P, D) lane-dense rows
# ----------------------------------------------------------------------------
def _make_encoder_layer_kernel(*, tb, seq, d, n_heads, d_head, cls_len,
                               n_nodes, has_gcn, return_attn, compute_dtype):
    n_groups = tb // n_nodes
    m = tb * seq
    scale = 1.0 / float(d_head) ** 0.5

    def c(a):  # cast MXU operands (bf16 by default); stats/residuals stay f32
        return a.astype(compute_dtype)

    def kernel(*refs):
        pos = 0
        x_ref = refs[pos]; pos += 1
        if has_gcn:
            adj_ref, gw_ref, gb_ref = refs[pos:pos + 3]; pos += 3
        (wq, bq, wk, bk, wv, bv, wo, bo,
         g1, be1, w1, b1, w2, b2, g2, be2,
         ng, nbt) = refs[pos:pos + 18]; pos += 18
        out_ref = refs[pos]; pos += 1
        attn_ref = refs[pos] if return_attn else None

        # ---- multi-head self attention over a lane-dense (TB*P, D) slab ----
        xf = x_ref[...]                               # (M, D) f32
        xc = c(xf)                                    # single cast, reused 3x

        q = jnp.dot(xc, wq[...], preferred_element_type=jnp.float32) + bq[...]
        k = jnp.dot(xc, wk[...], preferred_element_type=jnp.float32) + bk[...]
        v = jnp.dot(xc, wv[...], preferred_element_type=jnp.float32) + bv[...]
        qc, kc, vc = c(q), c(k), c(v)                 # one cast each

        # NOTE: heads stay a static loop with leading-batch 3-D einsums; a
        # (tb, H, seq, dh) multi-batch dot_general / non-minor transpose is not
        # a guaranteed Mosaic lowering, so we keep per-head lane slices while
        # the full-width QKV projections keep the MXU fed.
        ctx_cols = []
        attn_heads = [] if return_attn else None
        for h in range(n_heads):                      # static unroll, H small
            lo = h * d_head
            qh = qc[:, lo:lo + d_head].reshape(tb, seq, d_head)
            kh = kc[:, lo:lo + d_head].reshape(tb, seq, d_head)
            vh = vc[:, lo:lo + d_head].reshape(tb, seq, d_head)
            s = jnp.einsum("bqe,bke->bqk", qh, kh,
                           preferred_element_type=jnp.float32) * scale
            mx = jnp.max(s, axis=-1, keepdims=True)
            e = jnp.exp(s - mx)
            a = e * pl.reciprocal(jnp.sum(e, axis=-1, keepdims=True), approx=True)
            if return_attn:
                attn_heads.append(a)
            ctx_h = jnp.einsum("bqk,bke->bqe", c(a), vh,
                               preferred_element_type=jnp.float32)
            ctx_cols.append(ctx_h.reshape(m, d_head))

        if return_attn:
            # all heads stacked and stored once per block (no per-head
            # lane-sparse partial stores)
            attn_ref[...] = jnp.stack(attn_heads, axis=1).astype(attn_ref.dtype)

        ctx = jnp.concatenate(ctx_cols, axis=-1)      # (M, D)
        new_x = jnp.dot(c(ctx), wo[...], preferred_element_type=jnp.float32) + bo[...]
        xn = _layer_norm(xf + new_x, g1[...], be1[...])       # residual + norm1

        # ---- ReLU feed-forward (Conv1d kernel_size=1 == per-token linear) ---
        y = jnp.dot(c(xn), w1[...], preferred_element_type=jnp.float32) + b1[...]
        y = jnp.maximum(y, 0.0)
        y = jnp.dot(c(y), w2[...], preferred_element_type=jnp.float32) + b2[...]
        y2 = _layer_norm(xn + y, g2[...], be2[...])           # encoder-layer output

        if has_gcn:
            # ---- fused graph conv on the cls tokens + residual + self.norm.
            # relu(adj @ (g @ W) + b) + g; the big W matmul runs on the flat
            # (M, D) activations; the adj mix is a tiny batched (N x N) matmul
            # per cls position (f32).  Output written with ONE dense store.
            y3 = y2.reshape(tb, seq, d)
            u = jnp.dot(c(y2), gw_ref[...], preferred_element_type=jnp.float32)
            u3 = u.reshape(tb, seq, d)
            adj_b = jnp.broadcast_to(adj_ref[...], (n_groups, n_nodes, n_nodes))
            cls_rows = []
            for p in range(cls_len):                  # static, cls_len is tiny
                up = u3[:, p, :].reshape(n_groups, n_nodes, d)
                mixed = jnp.einsum("bnm,bme->bne", adj_b, up,
                                   preferred_element_type=jnp.float32)
                hp = jnp.maximum(mixed + gb_ref[...], 0.0)
                gp = hp.reshape(tb, d) + y3[:, p, :]  # + g residual
                cls_rows.append(_layer_norm(gp, ng[...], nbt[...]))
            cls_slab = jnp.stack(cls_rows, axis=1)               # (TB, cls, D)
            if cls_len == seq:
                full = cls_slab
            else:
                rest = _layer_norm(y3[:, cls_len:, :], ng[...], nbt[...])
                full = jnp.concatenate([cls_slab, rest], axis=1)  # (TB, P, D)
            out_ref[...] = full.reshape(m, d)
        else:
            out_ref[...] = _layer_norm(y2, ng[...], nbt[...])     # flat dense store

    return kernel


def encoder_layer_call(xf, p, *, bn, seq, norm, n_heads, cls_len, n_nodes,
                       adj=None, gcn=None, tb=None, return_attn=False,
                       compute_dtype=jnp.bfloat16, attn_dtype=jnp.float32,
                       vmem_budget_bytes=_DEFAULT_VMEM_BUDGET):
    """One fused encoder layer on flattened activations xf of shape (B*N*P, D).

    NOTE: the leading B*N axis must be flattened b-major / n-minor ('(b n)'),
    exactly as the PyTorch module's rearrange assumes; the fused graph conv
    mixes the wrong rows otherwise.
    """
    rows, d = xf.shape
    if rows != bn * seq:
        raise ValueError("xf must be the (B*N*P, D) flattening of x")
    if bn % n_nodes:
        raise ValueError("B*N must be a multiple of the node count N")
    d_head = d // n_heads
    d_ff = p["w1"].shape[1]
    has_gcn = gcn is not None
    if has_gcn and adj is None:
        raise ValueError("adj is required when a graph layer is fused")

    mm_bytes = jnp.dtype(compute_dtype).itemsize
    weight_bufs = 1 if _single_buffered_supported() else 2
    est = lambda t: _vmem_estimate(t, seq=seq, d=d, d_ff=d_ff, n_heads=n_heads,
                                   n_nodes=n_nodes, has_gcn=has_gcn,
                                   return_attn=return_attn, mm_bytes=mm_bytes,
                                   weight_bufs=weight_bufs)
    if tb is None:
        tb = _pick_tb(bn, seq, n_nodes, est, vmem_budget_bytes)
    if bn % tb or tb % n_nodes:
        raise ValueError("tb must divide B*N and be a multiple of N")
    if (tb * seq) % 8 and tb != bn:
        raise ValueError("tb*P must be a multiple of 8 (sublane) unless tb == B*N")

    if compute_dtype != jnp.float32:
        p = {k_: (v_.astype(compute_dtype) if k_ in _MM_WEIGHTS else v_)
             for k_, v_ in p.items()}
        if has_gcn:
            gcn = {"w": gcn["w"].astype(compute_dtype), "b": gcn["b"]}

    inputs = [xf]
    in_specs = [pl.BlockSpec((tb * seq, d), lambda i: (i, 0))]
    if has_gcn:
        extra = [adj, gcn["w"], gcn["b"]]
        inputs += extra
        in_specs += [_param_spec(a.shape) for a in extra]
    tail = [p[nm] for nm in _PARAM_ORDER] + [norm["g"], norm["b"]]
    inputs += tail
    in_specs += [_param_spec(a.shape) for a in tail]

    kernel = _make_encoder_layer_kernel(
        tb=tb, seq=seq, d=d, n_heads=n_heads, d_head=d_head, cls_len=cls_len,
        n_nodes=n_nodes, has_gcn=has_gcn, return_attn=return_attn,
        compute_dtype=compute_dtype)

    grid = (bn // tb,)
    shape_x = jax.ShapeDtypeStruct((bn * seq, d), jnp.float32)
    out_spec_x = pl.BlockSpec((tb * seq, d), lambda i: (i, 0))
    cparams = pltpu.CompilerParams(dimension_semantics=("parallel",),
                                   vmem_limit_bytes=_VMEM_LIMIT_BYTES)

    if return_attn:
        shape_a = jax.ShapeDtypeStruct((bn, n_heads, seq, seq), attn_dtype)
        out_spec_a = pl.BlockSpec((tb, n_heads, seq, seq),
                                  lambda i: (i, 0, 0, 0))
        out, attn = pl.pallas_call(
            kernel,
            out_shape=(shape_x, shape_a),
            grid=grid,
            in_specs=in_specs,
            out_specs=(out_spec_x, out_spec_a),
            compiler_params=cparams,
        )(*inputs)
        return out, attn

    out = pl.pallas_call(
        kernel,
        out_shape=shape_x,
        grid=grid,
        in_specs=in_specs,
        out_specs=out_spec_x,
        compiler_params=cparams,
    )(*inputs)
    return out, None


# ----------------------------------------------------------------------------
# GraphEncoder.forward
# ----------------------------------------------------------------------------
def graph_encoder_forward(x, node_embs, params, *, cls_len, n_nodes, n_heads,
                          tb=None, return_attn=False,
                          compute_dtype=jnp.bfloat16, attn_dtype=jnp.float32):
    bn, seq, d = x.shape
    adj = graph_learning(node_embs)          # gl_layer(node_embs), once per forward
    xf = x.reshape(bn * seq, d)              # keep activations lane-dense/flat
    n_gnn = len(params["gnn"])
    attns = []
    for i, layer_p in enumerate(params["attn"]):
        gcn_p = params["gnn"][i] if i < n_gnn else None
        xf, attn = encoder_layer_call(
            xf, layer_p, bn=bn, seq=seq, norm=params["norm"], n_heads=n_heads,
            cls_len=cls_len, n_nodes=n_nodes,
            adj=adj if gcn_p is not None else None, gcn=gcn_p, tb=tb,
            return_attn=return_attn, compute_dtype=compute_dtype,
            attn_dtype=attn_dtype)
        attns.append(attn)
    return xf.reshape(bn, seq, d), attns


# ----------------------------------------------------------------------------
# deterministic parameter construction
# ----------------------------------------------------------------------------
def init_params(key, *, d_model, n_heads, d_ff, n_attn_layers, n_gnn_layers):
    def nrm(k, shape, scale):
        return jax.random.normal(k, shape, jnp.float32) * scale

    keys = iter(jax.random.split(key, 16 * n_attn_layers + 4 * n_gnn_layers + 8))
    attn_params = []
    for _ in range(n_attn_layers):
        attn_params.append({
            "wq": nrm(next(keys), (d_model, d_model), 0.1),
            "bq": nrm(next(keys), (1, d_model), 0.02),
            "wk": nrm(next(keys), (d_model, d_model), 0.1),
            "bk": nrm(next(keys), (1, d_model), 0.02),
            "wv": nrm(next(keys), (d_model, d_model), 0.1),
            "bv": nrm(next(keys), (1, d_model), 0.02),
            "wo": nrm(next(keys), (d_model, d_model), 0.1),
            "bo": nrm(next(keys), (1, d_model), 0.02),
            "g1": jnp.ones((1, d_model), jnp.float32),
            "be1": jnp.zeros((1, d_model), jnp.float32),
            "w1": nrm(next(keys), (d_model, d_ff), 0.1),
            "b1": nrm(next(keys), (1, d_ff), 0.02),
            "w2": nrm(next(keys), (d_ff, d_model), 0.1),
            "b2": nrm(next(keys), (1, d_model), 0.02),
            "g2": jnp.ones((1, d_model), jnp.float32),
            "be2": jnp.zeros((1, d_model), jnp.float32),
        })

    gnn_params = []
    for _ in range(n_gnn_layers):
        gnn_params.append({
            "w": nrm(next(keys), (d_model, d_model), 0.1),
            "b": nrm(next(keys), (1, d_model), 0.02),
        })

    norm_params = {
        "g": jnp.ones((1, d_model), jnp.float32),
        "b": jnp.zeros((1, d_model), jnp.float32),
    }
    return {"attn": attn_params, "gnn": gnn_params, "norm": norm_params}


# ----------------------------------------------------------------------------
if __name__ == "__main__":
    key = jax.random.PRNGKey(0)
    k_x, k_e, k_p = jax.random.split(key, 3)

    # small shapes consistent with the module's forward
    B, N, cls_len, patch_num = 2, 4, 2, 6
    P = cls_len + patch_num          # sequence length per (batch, node) row
    D, H, d_ff, node_dim = 32, 4, 64, 16
    n_attn_layers, n_gnn_layers = 2, 1

    x = jax.random.normal(k_x, (B * N, P, D), jnp.float32)
    node_embs = jax.random.normal(k_e, (N, node_dim), jnp.float32)
    params = init_params(k_p, d_model=D, n_heads=H, d_ff=d_ff,
                         n_attn_layers=n_attn_layers, n_gnn_layers=n_gnn_layers)

    # default path: bf16 MXU operands, attention maps not materialized
    out, attns = graph_encoder_forward(x, node_embs, params,
                                       cls_len=cls_len, n_nodes=N, n_heads=H)
    jax.block_until_ready(out)
    assert out.shape == (B * N, P, D)
    assert len(attns) == n_attn_layers and all(a is None for a in attns)
    assert bool(jnp.all(jnp.isfinite(out)))

    # optional attention-map path (module semantics when maps are requested)
    out_a, attns_a = graph_encoder_forward(x, node_embs, params,
                                           cls_len=cls_len, n_nodes=N,
                                           n_heads=H, return_attn=True)
    jax.block_until_ready(out_a)
    jax.block_until_ready(attns_a)
    assert out_a.shape == (B * N, P, D)
    assert attns_a[0].shape == (B * N, H, P, P)
    assert bool(jnp.all(jnp.isfinite(out_a)))
    print("KERNEL_OK")
</pallas_src>

<mosaic_0001>
module attributes {stable_mosaic.version = 11 : i64} {
  func.func @_probe(%arg0: i32, %arg1: memref<8x128xf32, #tpu.memory_space<vmem>>, %arg2: memref<8x128xf32, #tpu.memory_space<vmem>>) attributes {dimension_semantics = [#tpu.dimension_semantics<arbitrary>], iteration_bounds = array<i64: 2>, scalar_prefetch = 0 : i64, scratch_operands = 0 : i64, tpu.core_type = #tpu.core_type<tc>, window_params = [{pipeline_mode = #tpu.pipeline_mode<synchronous>, transform_indices = @transform_0, window_bounds = array<i64: 8, 128>}, {pipeline_mode = #tpu.pipeline_mode<synchronous>, transform_indices = @transform_1, window_bounds = array<i64: 8, 128>}]} {
    %c0 = arith.constant 0 : index
    %c0_0 = arith.constant 0 : index
    %0 = vector.load %arg1[%c0, %c0_0] : memref<8x128xf32, #tpu.memory_space<vmem>>, vector<8x128xf32>
    %cst = arith.constant 1.000000e+00 : f32
    %1 = vector.broadcast %cst : f32 to vector<8x128xf32>
    %2 = arith.addf %0, %1 : vector<8x128xf32>
    %c0_1 = arith.constant 0 : index
    %c0_2 = arith.constant 0 : index
    %3 = vector.load %arg2[%c0_1, %c0_2] : memref<8x128xf32, #tpu.memory_space<vmem>>, vector<8x128xf32>
    tpu.vector_store %arg2[%c0_1, %c0_2], %2 {strides = array<i32>} : memref<8x128xf32, #tpu.memory_space<vmem>>, vector<8x128xf32>,
    return
  }
  func.func @transform_0(%arg0: i32) -> (i32, i32) {
    %c0_i32 = arith.constant 0 : i32
    %c0_i32_0 = arith.constant 0 : i32
    %c0_i32_1 = arith.constant 0 : i32
    return %c0_i32, %c0_i32_0 : i32, i32
  }
  func.func @transform_1(%arg0: i32) -> (i32, i32) {
    %c0_i32 = arith.constant 0 : i32
    %c0_i32_0 = arith.constant 0 : i32
    %c0_i32_1 = arith.constant 0 : i32
    return %c0_i32, %c0_i32_0 : i32, i32
  }
}

module attributes {stable_mosaic.version = 11 : i64} {
  func.func @kernel(%arg0: i32, %arg1: memref<32x32xf32, #tpu.memory_space<vmem>>, %arg2: memref<4x4xf32, #tpu.memory_space<vmem>>, %arg3: memref<32x32xbf16, #tpu.memory_space<vmem>>, %arg4: memref<1x32xf32, #tpu.memory_space<vmem>>, %arg5: memref<32x32xbf16, #tpu.memory_space<vmem>>, %arg6: memref<1x32xf32, #tpu.memory_space<vmem>>, %arg7: memref<32x32xbf16, #tpu.memory_space<vmem>>, %arg8: memref<1x32xf32, #tpu.memory_space<vmem>>, %arg9: memref<32x32xbf16, #tpu.memory_space<vmem>>, %arg10: memref<1x32xf32, #tpu.memory_space<vmem>>, %arg11: memref<32x32xbf16, #tpu.memory_space<vmem>>, %arg12: memref<1x32xf32, #tpu.memory_space<vmem>>, %arg13: memref<1x32xf32, #tpu.memory_space<vmem>>, %arg14: memref<1x32xf32, #tpu.memory_space<vmem>>, %arg15: memref<32x64xbf16, #tpu.memory_space<vmem>>, %arg16: memref<1x64xf32, #tpu.memory_space<vmem>>, %arg17: memref<64x32xbf16, #tpu.memory_space<vmem>>, %arg18: memref<1x32xf32, #tpu.memory_space<vmem>>, %arg19: memref<1x32xf32, #tpu.memory_space<vmem>>, %arg20: memref<1x32xf32, #tpu.memory_space<vmem>>, %arg21: memref<1x32xf32, #tpu.memory_space<vmem>>, %arg22: memref<1x32xf32, #tpu.memory_space<vmem>>, %arg23: memref<32x32xf32, #tpu.memory_space<vmem>>) attributes {dimension_semantics = [#tpu.dimension_semantics<parallel>], iteration_bounds = array<i64: 2>, scalar_prefetch = 0 : i64, scratch_operands = 0 : i64, tpu.core_type = #tpu.core_type<tc>, window_params = [{transform_indices = @transform_0, window_bounds = array<i64: 32, 32>}, {pipeline_mode = #tpu.pipeline_mode<synchronous>, transform_indices = @transform_1, window_bounds = array<i64: 4, 4>}, {pipeline_mode = #tpu.pipeline_mode<synchronous>, transform_indices = @transform_2, window_bounds = array<i64: 32, 32>}, {pipeline_mode = #tpu.pipeline_mode<synchronous>, transform_indices = @transform_3, window_bounds = array<i64: 1, 32>}, {pipeline_mode = #tpu.pipeline_mode<synchronous>, transform_indices = @transform_4, window_bounds = array<i64: 32, 32>}, {pipeline_mode = #tpu.pipeline_mode<synchronous>, transform_indices = @transform_5, window_bounds = array<i64: 1, 32>}, {pipeline_mode = #tpu.pipeline_mode<synchronous>, transform_indices = @transform_6, window_bounds = array<i64: 32, 32>}, {pipeline_mode = #tpu.pipeline_mode<synchronous>, transform_indices = @transform_7, window_bounds = array<i64: 1, 32>}, {pipeline_mode = #tpu.pipeline_mode<synchronous>, transform_indices = @transform_8, window_bounds = array<i64: 32, 32>}, {pipeline_mode = #tpu.pipeline_mode<synchronous>, transform_indices = @transform_9, window_bounds = array<i64: 1, 32>}, {pipeline_mode = #tpu.pipeline_mode<synchronous>, transform_indices = @transform_10, window_bounds = array<i64: 32, 32>}, {pipeline_mode = #tpu.pipeline_mode<synchronous>, transform_indices = @transform_11, window_bounds = array<i64: 1, 32>}, {pipeline_mode = #tpu.pipeline_mode<synchronous>, transform_indices = @transform_12, window_bounds = array<i64: 1, 32>}, {pipeline_mode = #tpu.pipeline_mode<synchronous>, transform_indices = @transform_13, window_bounds = array<i64: 1, 32>}, {pipeline_mode = #tpu.pipeline_mode<synchronous>, transform_indices = @transform_14, window_bounds = array<i64: 32, 64>}, {pipeline_mode = #tpu.pipeline_mode<synchronous>, transform_indices = @transform_15, window_bounds = array<i64: 1, 64>}, {pipeline_mode = #tpu.pipeline_mode<synchronous>, transform_indices = @transform_16, window_bounds = array<i64: 64, 32>}, {pipeline_mode = #tpu.pipeline_mode<synchronous>, transform_indices = @transform_17, window_bounds = array<i64: 1, 32>}, {pipeline_mode = #tpu.pipeline_mode<synchronous>, transform_indices = @transform_18, window_bounds = array<i64: 1, 32>}, {pipeline_mode = #tpu.pipeline_mode<synchronous>, transform_indices = @transform_19, window_bounds = array<i64: 1, 32>}, {pipeline_mode = #tpu.pipeline_mode<synchronous>, transform_indices = @transform_20, window_bounds = array<i64: 1, 32>}, {pipeline_mode = #tpu.pipeline_mode<synchronous>, transform_indices = @transform_21, window_bounds = array<i64: 1, 32>}, {transform_indices = @transform_22, window_bounds = array<i64: 32, 32>}]} {
    %c0 = arith.constant 0 : index
    %c0_0 = arith.constant 0 : index
    %0 = vector.load %arg1[%c0, %c0_0] : memref<32x32xf32, #tpu.memory_space<vmem>>, vector<32x32xf32>
    %1 = arith.truncf %0 : vector<32x32xf32> to vector<32x32xbf16>
    %c0_1 = arith.constant 0 : index
    %c0_2 = arith.constant 0 : index
    %2 = vector.load %arg5[%c0_1, %c0_2] : memref<32x32xbf16, #tpu.memory_space<vmem>>, vector<32x32xbf16>
    %cst = arith.constant dense<0.000000e+00> : vector<32x32xf32>
    %3 = tpu.matmul %1, %2, %cst {dimension_numbers = #tpu.dot_dimension_numbers<[1], [0], [0], [1], [0, 0, 1, 1], [], []>} : vector<32x32xbf16>, vector<32x32xbf16>, vector<32x32xf32> -> vector<32x32xf32>
    %c0_3 = arith.constant 0 : index
    %c0_4 = arith.constant 0 : index
    %4 = vector.load %arg6[%c0_3, %c0_4] : memref<1x32xf32, #tpu.memory_space<vmem>>, vector<1x32xf32>
    %5 = vector.broadcast %4 : vector<1x32xf32> to vector<32x32xf32>
    %6 = arith.addf %3, %5 : vector<32x32xf32>
    %c0_5 = arith.constant 0 : index
    %c0_6 = arith.constant 0 : index
    %7 = vector.load %arg7[%c0_5, %c0_6] : memref<32x32xbf16, #tpu.memory_space<vmem>>, vector<32x32xbf16>
    %cst_7 = arith.constant dense<0.000000e+00> : vector<32x32xf32>
    %8 = tpu.matmul %1, %7, %cst_7 {dimension_numbers = #tpu.dot_dimension_numbers<[1], [0], [0], [1], [0, 0, 1, 1], [], []>} : vector<32x32xbf16>, vector<32x32xbf16>, vector<32x32xf32> -> vector<32x32xf32>
    %c0_8 = arith.constant 0 : index
    %c0_9 = arith.constant 0 : index
    %9 = vector.load %arg8[%c0_8, %c0_9] : memref<1x32xf32, #tpu.memory_space<vmem>>, vector<1x32xf32>
    %10 = vector.broadcast %9 : vector<1x32xf32> to vector<32x32xf32>
    %11 = arith.addf %8, %10 : vector<32x32xf32>
    %c0_10 = arith.constant 0 : index
    %c0_11 = arith.constant 0 : index
    %12 = vector.load %arg9[%c0_10, %c0_11] : memref<32x32xbf16, #tpu.memory_space<vmem>>, vector<32x32xbf16>
    %cst_12 = arith.constant dense<0.000000e+00> : vector<32x32xf32>
    %13 = tpu.matmul %1, %12, %cst_12 {dimension_numbers = #tpu.dot_dimension_numbers<[1], [0], [0], [1], [0, 0, 1, 1], [], []>} : vector<32x32xbf16>, vector<32x32xbf16>, vector<32x32xf32> -> vector<32x32xf32>
    %c0_13 = arith.constant 0 : index
    %c0_14 = arith.constant 0 : index
    %14 = vector.load %arg10[%c0_13, %c0_14] : memref<1x32xf32, #tpu.memory_space<vmem>>, vector<1x32xf32>
    %15 = vector.broadcast %14 : vector<1x32xf32> to vector<32x32xf32>
    %16 = arith.addf %13, %15 : vector<32x32xf32>
    %17 = arith.truncf %6 : vector<32x32xf32> to vector<32x32xbf16>
    %18 = arith.truncf %11 : vector<32x32xf32> to vector<32x32xbf16>
    %19 = arith.truncf %16 : vector<32x32xf32> to vector<32x32xbf16>
    %20 = vector.extract_strided_slice %17 {offsets = [0, 0], sizes = [32, 8], strides = [1, 1]} : vector<32x32xbf16> to vector<32x8xbf16>
    %21 = vector.shape_cast %20 : vector<32x8xbf16> to vector<4x8x8xbf16>
    %22 = vector.extract_strided_slice %18 {offsets = [0, 0], sizes = [32, 8], strides = [1, 1]} : vector<32x32xbf16> to vector<32x8xbf16>
    %23 = vector.shape_cast %22 : vector<32x8xbf16> to vector<4x8x8xbf16>
    %24 = vector.extract_strided_slice %19 {offsets = [0, 0], sizes = [32, 8], strides = [1, 1]} : vector<32x32xbf16> to vector<32x8xbf16>
    %25 = vector.shape_cast %24 : vector<32x8xbf16> to vector<4x8x8xbf16>
    "tpu.trace_start"() <{level = 10 : i32, message = "bqe,bke->bqk"}> : () -> ()
    %cst_15 = arith.constant dense<0.000000e+00> : vector<4x8x8xf32>
    %26 = tpu.matmul %21, %23, %cst_15 {dimension_numbers = #tpu.dot_dimension_numbers<[2], [2], [1], [1], [0, 0, 0, 1, 1, 1], [0], [0]>} : vector<4x8x8xbf16>, vector<4x8x8xbf16>, vector<4x8x8xf32> -> vector<4x8x8xf32>
    "tpu.trace_stop"() : () -> ()
    %cst_16 = arith.constant 0.353553385 : f32
    %27 = vector.broadcast %cst_16 : f32 to vector<4x8x8xf32>
    %28 = arith.mulf %26, %27 : vector<4x8x8xf32>
    %cst_17 = arith.constant dense<0xFF800000> : vector<4x8xf32>
    %29 = vector.multi_reduction <maximumf>, %28, %cst_17 [2] : vector<4x8x8xf32> to vector<4x8xf32>
    %30 = vector.shape_cast %29 : vector<4x8xf32> to vector<4x8x1xf32>
    %31 = vector.broadcast %30 : vector<4x8x1xf32> to vector<4x8x8xf32>
    %32 = arith.subf %28, %31 : vector<4x8x8xf32>
    %33 = math.exp %32 : vector<4x8x8xf32>
    %cst_18 = arith.constant dense<0.000000e+00> : vector<4x8xf32>
    %34 = vector.multi_reduction <add>, %33, %cst_18 [2] : vector<4x8x8xf32> to vector<4x8xf32>
    %35 = vector.shape_cast %34 : vector<4x8xf32> to vector<4x8x1xf32>
    %36 = tpu.reciprocal %35 {approx = true} : vector<4x8x1xf32> -> vector<4x8x1xf32>
    %37 = vector.broadcast %36 : vector<4x8x1xf32> to vector<4x8x8xf32>
    %38 = arith.mulf %33, %37 : vector<4x8x8xf32>
    %39 = arith.truncf %38 : vector<4x8x8xf32> to vector<4x8x8xbf16>
    "tpu.trace_start"() <{level = 10 : i32, message = "bqk,bke->bqe"}> : () -> ()
    %cst_19 = arith.constant dense<0.000000e+00> : vector<4x8x8xf32>
    %40 = tpu.matmul %39, %25, %cst_19 {dimension_numbers = #tpu.dot_dimension_numbers<[2], [1], [1], [2], [0, 0, 0, 1, 1, 2], [0], [0]>} : vector<4x8x8xbf16>, vector<4x8x8xbf16>, vector<4x8x8xf32> -> vector<4x8x8xf32>
    "tpu.trace_stop"() : () -> ()
    %41 = vector.shape_cast %40 : vector<4x8x8xf32> to vector<32x8xf32>
    %42 = vector.extract_strided_slice %17 {offsets = [0, 8], sizes = [32, 8], strides = [1, 1]} : vector<32x32xbf16> to vector<32x8xbf16>
    %43 = vector.shape_cast %42 : vector<32x8xbf16> to vector<4x8x8xbf16>
    %44 = vector.extract_strided_slice %18 {offsets = [0, 8], sizes = [32, 8], strides = [1, 1]} : vector<32x32xbf16> to vector<32x8xbf16>
    %45 = vector.shape_cast %44 : vector<32x8xbf16> to vector<4x8x8xbf16>
    %46 = vector.extract_strided_slice %19 {offsets = [0, 8], sizes = [32, 8], strides = [1, 1]} : vector<32x32xbf16> to vector<32x8xbf16>
    %47 = vector.shape_cast %46 : vector<32x8xbf16> to vector<4x8x8xbf16>
    "tpu.trace_start"() <{level = 10 : i32, message = "bqe,bke->bqk"}> : () -> ()
    %cst_20 = arith.constant dense<0.000000e+00> : vector<4x8x8xf32>
    %48 = tpu.matmul %43, %45, %cst_20 {dimension_numbers = #tpu.dot_dimension_numbers<[2], [2], [1], [1], [0, 0, 0, 1, 1, 1], [0], [0]>} : vector<4x8x8xbf16>, vector<4x8x8xbf16>, vector<4x8x8xf32> -> vector<4x8x8xf32>
    "tpu.trace_stop"() : () -> ()
    %cst_21 = arith.constant 0.353553385 : f32
    %49 = vector.broadcast %cst_21 : f32 to vector<4x8x8xf32>
    %50 = arith.mulf %48, %49 : vector<4x8x8xf32>
    %cst_22 = arith.constant dense<0xFF800000> : vector<4x8xf32>
    %51 = vector.multi_reduction <maximumf>, %50, %cst_22 [2] : vector<4x8x8xf32> to vector<4x8xf32>
    %52 = vector.shape_cast %51 : vector<4x8xf32> to vector<4x8x1xf32>
    %53 = vector.broadcast %52 : vector<4x8x1xf32> to vector<4x8x8xf32>
    %54 = arith.subf %50, %53 : vector<4x8x8xf32>
    %55 = math.exp %54 : vector<4x8x8xf32>
    %cst_23 = arith.constant dense<0.000000e+00> : vector<4x8xf32>
    %56 = vector.multi_reduction <add>, %55, %cst_23 [2] : vector<4x8x8xf32> to vector<4x8xf32>
    %57 = vector.shape_cast %56 : vector<4x8xf32> to vector<4x8x1xf32>
    %58 = tpu.reciprocal %57 {approx = true} : vector<4x8x1xf32> -> vector<4x8x1xf32>
    %59 = vector.broadcast %58 : vector<4x8x1xf32> to vector<4x8x8xf32>
    %60 = arith.mulf %55, %59 : vector<4x8x8xf32>
    %61 = arith.truncf %60 : vector<4x8x8xf32> to vector<4x8x8xbf16>
    "tpu.trace_start"() <{level = 10 : i32, message = "bqk,bke->bqe"}> : () -> ()
    %cst_24 = arith.constant dense<0.000000e+00> : vector<4x8x8xf32>
    %62 = tpu.matmul %61, %47, %cst_24 {dimension_numbers = #tpu.dot_dimension_numbers<[2], [1], [1], [2], [0, 0, 0, 1, 1, 2], [0], [0]>} : vector<4x8x8xbf16>, vector<4x8x8xbf16>, vector<4x8x8xf32> -> vector<4x8x8xf32>
    "tpu.trace_stop"() : () -> ()
    %63 = vector.shape_cast %62 : vector<4x8x8xf32> to vector<32x8xf32>
    %64 = vector.extract_strided_slice %17 {offsets = [0, 16], sizes = [32, 8], strides = [1, 1]} : vector<32x32xbf16> to vector<32x8xbf16>
    %65 = vector.shape_cast %64 : vector<32x8xbf16> to vector<4x8x8xbf16>
    %66 = vector.extract_strided_slice %18 {offsets = [0, 16], sizes = [32, 8], strides = [1, 1]} : vector<32x32xbf16> to vector<32x8xbf16>
    %67 = vector.shape_cast %66 : vector<32x8xbf16> to vector<4x8x8xbf16>
    %68 = vector.extract_strided_slice %19 {offsets = [0, 16], sizes = [32, 8], strides = [1, 1]} : vector<32x32xbf16> to vector<32x8xbf16>
    %69 = vector.shape_cast %68 : vector<32x8xbf16> to vector<4x8x8xbf16>
    "tpu.trace_start"() <{level = 10 : i32, message = "bqe,bke->bqk"}> : () -> ()
    %cst_25 = arith.constant dense<0.000000e+00> : vector<4x8x8xf32>
    %70 = tpu.matmul %65, %67, %cst_25 {dimension_numbers = #tpu.dot_dimension_numbers<[2], [2], [1], [1], [0, 0, 0, 1, 1, 1], [0], [0]>} : vector<4x8x8xbf16>, vector<4x8x8xbf16>, vector<4x8x8xf32> -> vector<4x8x8xf32>
    "tpu.trace_stop"() : () -> ()
    %cst_26 = arith.constant 0.353553385 : f32
    %71 = vector.broadcast %cst_26 : f32 to vector<4x8x8xf32>
    %72 = arith.mulf %70, %71 : vector<4x8x8xf32>
    %cst_27 = arith.constant dense<0xFF800000> : vector<4x8xf32>
    %73 = vector.multi_reduction <maximumf>, %72, %cst_27 [2] : vector<4x8x8xf32> to vector<4x8xf32>
    %74 = vector.shape_cast %73 : vector<4x8xf32> to vector<4x8x1xf32>
    %75 = vector.broadcast %74 : vector<4x8x1xf32> to vector<4x8x8xf32>
    %76 = arith.subf %72, %75 : vector<4x8x8xf32>
    %77 = math.exp %76 : vector<4x8x8xf32>
    %cst_28 = arith.constant dense<0.000000e+00> : vector<4x8xf32>
    %78 = vector.multi_reduction <add>, %77, %cst_28 [2] : vector<4x8x8xf32> to vector<4x8xf32>
    %79 = vector.shape_cast %78 : vector<4x8xf32> to vector<4x8x1xf32>
    %80 = tpu.reciprocal %79 {approx = true} : vector<4x8x1xf32> -> vector<4x8x1xf32>
    %81 = vector.broadcast %80 : vector<4x8x1xf32> to vector<4x8x8xf32>
    %82 = arith.mulf %77, %81 : vector<4x8x8xf32>
    %83 = arith.truncf %82 : vector<4x8x8xf32> to vector<4x8x8xbf16>
    "tpu.trace_start"() <{level = 10 : i32, message = "bqk,bke->bqe"}> : () -> ()
    %cst_29 = arith.constant dense<0.000000e+00> : vector<4x8x8xf32>
    %84 = tpu.matmul %83, %69, %cst_29 {dimension_numbers = #tpu.dot_dimension_numbers<[2], [1], [1], [2], [0, 0, 0, 1, 1, 2], [0], [0]>} : vector<4x8x8xbf16>, vector<4x8x8xbf16>, vector<4x8x8xf32> -> vector<4x8x8xf32>
    "tpu.trace_stop"() : () -> ()
    %85 = vector.shape_cast %84 : vector<4x8x8xf32> to vector<32x8xf32>
    %86 = vector.extract_strided_slice %17 {offsets = [0, 24], sizes = [32, 8], strides = [1, 1]} : vector<32x32xbf16> to vector<32x8xbf16>
    %87 = vector.shape_cast %86 : vector<32x8xbf16> to vector<4x8x8xbf16>
    %88 = vector.extract_strided_slice %18 {offsets = [0, 24], sizes = [32, 8], strides = [1, 1]} : vector<32x32xbf16> to vector<32x8xbf16>
    %89 = vector.shape_cast %88 : vector<32x8xbf16> to vector<4x8x8xbf16>
    %90 = vector.extract_strided_slice %19 {offsets = [0, 24], sizes = [32, 8], strides = [1, 1]} : vector<32x32xbf16> to vector<32x8xbf16>
    %91 = vector.shape_cast %90 : vector<32x8xbf16> to vector<4x8x8xbf16>
    "tpu.trace_start"() <{level = 10 : i32, message = "bqe,bke->bqk"}> : () -> ()
    %cst_30 = arith.constant dense<0.000000e+00> : vector<4x8x8xf32>
    %92 = tpu.matmul %87, %89, %cst_30 {dimension_numbers = #tpu.dot_dimension_numbers<[2], [2], [1], [1], [0, 0, 0, 1, 1, 1], [0], [0]>} : vector<4x8x8xbf16>, vector<4x8x8xbf16>, vector<4x8x8xf32> -> vector<4x8x8xf32>
    "tpu.trace_stop"() : () -> ()
    %cst_31 = arith.constant 0.353553385 : f32
    %93 = vector.broadcast %cst_31 : f32 to vector<4x8x8xf32>
    %94 = arith.mulf %92, %93 : vector<4x8x8xf32>
    %cst_32 = arith.constant dense<0xFF800000> : vector<4x8xf32>
    %95 = vector.multi_reduction <maximumf>, %94, %cst_32 [2] : vector<4x8x8xf32> to vector<4x8xf32>
    %96 = vector.shape_cast %95 : vector<4x8xf32> to vector<4x8x1xf32>
    %97 = vector.broadcast %96 : vector<4x8x1xf32> to vector<4x8x8xf32>
    %98 = arith.subf %94, %97 : vector<4x8x8xf32>
    %99 = math.exp %98 : vector<4x8x8xf32>
    %cst_33 = arith.constant dense<0.000000e+00> : vector<4x8xf32>
    %100 = vector.multi_reduction <add>, %99, %cst_33 [2] : vector<4x8x8xf32> to vector<4x8xf32>
    %101 = vector.shape_cast %100 : vector<4x8xf32> to vector<4x8x1xf32>
    %102 = tpu.reciprocal %101 {approx = true} : vector<4x8x1xf32> -> vector<4x8x1xf32>
    %103 = vector.broadcast %102 : vector<4x8x1xf32> to vector<4x8x8xf32>
    %104 = arith.mulf %99, %103 : vector<4x8x8xf32>
    %105 = arith.truncf %104 : vector<4x8x8xf32> to vector<4x8x8xbf16>
    "tpu.trace_start"() <{level = 10 : i32, message = "bqk,bke->bqe"}> : () -> ()
    %cst_34 = arith.constant dense<0.000000e+00> : vector<4x8x8xf32>
    %106 = tpu.matmul %105, %91, %cst_34 {dimension_numbers = #tpu.dot_dimension_numbers<[2], [1], [1], [2], [0, 0, 0, 1, 1, 2], [0], [0]>} : vector<4x8x8xbf16>, vector<4x8x8xbf16>, vector<4x8x8xf32> -> vector<4x8x8xf32>
    "tpu.trace_stop"() : () -> ()
    %107 = vector.shape_cast %106 : vector<4x8x8xf32> to vector<32x8xf32>
    %108 = tpu.concatenate %41, %63, %85, %107 in 1 : vector<32x8xf32>, vector<32x8xf32>, vector<32x8xf32>, vector<32x8xf32> -> vector<32x32xf32>
    %109 = arith.truncf %108 : vector<32x32xf32> to vector<32x32xbf16>
    %c0_35 = arith.constant 0 : index
    %c0_36 = arith.constant 0 : index
    %110 = vector.load %arg11[%c0_35, %c0_36] : memref<32x32xbf16, #tpu.memory_space<vmem>>, vector<32x32xbf16>
    %cst_37 = arith.constant dense<0.000000e+00> : vector<32x32xf32>
    %111 = tpu.matmul %109, %110, %cst_37 {dimension_numbers = #tpu.dot_dimension_numbers<[1], [0], [0], [1], [0, 0, 1, 1], [], []>} : vector<32x32xbf16>, vector<32x32xbf16>, vector<32x32xf32> -> vector<32x32xf32>
    %c0_38 = arith.constant 0 : index
    %c0_39 = arith.constant 0 : index
    %112 = vector.load %arg12[%c0_38, %c0_39] : memref<1x32xf32, #tpu.memory_space<vmem>>, vector<1x32xf32>
    %113 = vector.broadcast %112 : vector<1x32xf32> to vector<32x32xf32>
    %114 = arith.addf %111, %113 : vector<32x32xf32>
    %115 = arith.addf %0, %114 : vector<32x32xf32>
    %c0_40 = arith.constant 0 : index
    %c0_41 = arith.constant 0 : index
    %116 = vector.load %arg13[%c0_40, %c0_41] : memref<1x32xf32, #tpu.memory_space<vmem>>, vector<1x32xf32>
    %c0_42 = arith.constant 0 : index
    %c0_43 = arith.constant 0 : index
    %117 = vector.load %arg14[%c0_42, %c0_43] : memref<1x32xf32, #tpu.memory_space<vmem>>, vector<1x32xf32>
    %cst_44 = arith.constant dense<0.000000e+00> : vector<32xf32>
    %118 = vector.multi_reduction <add>, %115, %cst_44 [1] : vector<32x32xf32> to vector<32xf32>
    %119 = vector.shape_cast %118 : vector<32xf32> to vector<32x1xf32>
    %cst_45 = arith.constant 3.200000e+01 : f32
    %120 = vector.broadcast %cst_45 : f32 to vector<32x1xf32>
    %121 = arith.divf %119, %120 : vector<32x1xf32>
    %122 = vector.broadcast %121 : vector<32x1xf32> to vector<32x32xf32>
    %123 = arith.subf %115, %122 : vector<32x32xf32>
    %124 = arith.mulf %123, %123 : vector<32x32xf32>
    %cst_46 = arith.constant dense<0.000000e+00> : vector<32xf32>
    %125 = vector.multi_reduction <add>, %124, %cst_46 [1] : vector<32x32xf32> to vector<32xf32>
    %126 = vector.shape_cast %125 : vector<32xf32> to vector<32x1xf32>
    %cst_47 = arith.constant 3.200000e+01 : f32
    %127 = vector.broadcast %cst_47 : f32 to vector<32x1xf32>
    %128 = arith.divf %126, %127 : vector<32x1xf32>
    %129 = vector.broadcast %121 : vector<32x1xf32> to vector<32x32xf32>
    %130 = arith.subf %115, %129 : vector<32x32xf32>
    %cst_48 = arith.constant 9.99999974E-6 : f32
    %131 = vector.broadcast %cst_48 : f32 to vector<32x1xf32>
    %132 = arith.addf %128, %131 : vector<32x1xf32>
    %133 = math.rsqrt %132 : vector<32x1xf32>
    %134 = vector.broadcast %133 : vector<32x1xf32> to vector<32x32xf32>
    %135 = arith.mulf %130, %134 : vector<32x32xf32>
    %136 = vector.broadcast %116 : vector<1x32xf32> to vector<32x32xf32>
    %137 = arith.mulf %135, %136 : vector<32x32xf32>
    %138 = vector.broadcast %117 : vector<1x32xf32> to vector<32x32xf32>
    %139 = arith.addf %137, %138 : vector<32x32xf32>
    %140 = arith.truncf %139 : vector<32x32xf32> to vector<32x32xbf16>
    %c0_49 = arith.constant 0 : index
    %c0_50 = arith.constant 0 : index
    %141 = vector.load %arg15[%c0_49, %c0_50] : memref<32x64xbf16, #tpu.memory_space<vmem>>, vector<32x64xbf16>
    %cst_51 = arith.constant dense<0.000000e+00> : vector<32x64xf32>
    %142 = tpu.matmul %140, %141, %cst_51 {dimension_numbers = #tpu.dot_dimension_numbers<[1], [0], [0], [1], [0, 0, 1, 1], [], []>} : vector<32x32xbf16>, vector<32x64xbf16>, vector<32x64xf32> -> vector<32x64xf32>
    %c0_52 = arith.constant 0 : index
    %c0_53 = arith.constant 0 : index
    %143 = vector.load %arg16[%c0_52, %c0_53] : memref<1x64xf32, #tpu.memory_space<vmem>>, vector<1x64xf32>
    %144 = vector.broadcast %143 : vector<1x64xf32> to vector<32x64xf32>
    %145 = arith.addf %142, %144 : vector<32x64xf32>
    %cst_54 = arith.constant 0.000000e+00 : f32
    %146 = vector.broadcast %cst_54 : f32 to vector<32x64xf32>
    %147 = arith.maximumf %145, %146 : vector<32x64xf32>
    %148 = arith.truncf %147 : vector<32x64xf32> to vector<32x64xbf16>
    %c0_55 = arith.constant 0 : index
    %c0_56 = arith.constant 0 : index
    %149 = vector.load %arg17[%c0_55, %c0_56] : memref<64x32xbf16, #tpu.memory_space<vmem>>, vector<64x32xbf16>
    %cst_57 = arith.constant dense<0.000000e+00> : vector<32x32xf32>
    %150 = tpu.matmul %148, %149, %cst_57 {dimension_numbers = #tpu.dot_dimension_numbers<[1], [0], [0], [1], [0, 0, 1, 1], [], []>} : vector<32x64xbf16>, vector<64x32xbf16>, vector<32x32xf32> -> vector<32x32xf32>
    %c0_58 = arith.constant 0 : index
    %c0_59 = arith.constant 0 : index
    %151 = vector.load %arg18[%c0_58, %c0_59] : memref<1x32xf32, #tpu.memory_space<vmem>>, vector<1x32xf32>
    %152 = vector.broadcast %151 : vector<1x32xf32> to vector<32x32xf32>
    %153 = arith.addf %150, %152 : vector<32x32xf32>
    %154 = arith.addf %139, %153 : vector<32x32xf32>
    %c0_60 = arith.constant 0 : index
    %c0_61 = arith.constant 0 : index
    %155 = vector.load %arg19[%c0_60, %c0_61] : memref<1x32xf32, #tpu.memory_space<vmem>>, vector<1x32xf32>
    %c0_62 = arith.constant 0 : index
    %c0_63 = arith.constant 0 : index
    %156 = vector.load %arg20[%c0_62, %c0_63] : memref<1x32xf32, #tpu.memory_space<vmem>>, vector<1x32xf32>
    %cst_64 = arith.constant dense<0.000000e+00> : vector<32xf32>
    %157 = vector.multi_reduction <add>, %154, %cst_64 [1] : vector<32x32xf32> to vector<32xf32>
    %158 = vector.shape_cast %157 : vector<32xf32> to vector<32x1xf32>
    %cst_65 = arith.constant 3.200000e+01 : f32
    %159 = vector.broadcast %cst_65 : f32 to vector<32x1xf32>
    %160 = arith.divf %158, %159 : vector<32x1xf32>
    %161 = vector.broadcast %160 : vector<32x1xf32> to vector<32x32xf32>
    %162 = arith.subf %154, %161 : vector<32x32xf32>
    %163 = arith.mulf %162, %162 : vector<32x32xf32>
    %cst_66 = arith.constant dense<0.000000e+00> : vector<32xf32>
    %164 = vector.multi_reduction <add>, %163, %cst_66 [1] : vector<32x32xf32> to vector<32xf32>
    %165 = vector.shape_cast %164 : vector<32xf32> to vector<32x1xf32>
    %cst_67 = arith.constant 3.200000e+01 : f32
    %166 = vector.broadcast %cst_67 : f32 to vector<32x1xf32>
    %167 = arith.divf %165, %166 : vector<32x1xf32>
    %168 = vector.broadcast %160 : vector<32x1xf32> to vector<32x32xf32>
    %169 = arith.subf %154, %168 : vector<32x32xf32>
    %cst_68 = arith.constant 9.99999974E-6 : f32
    %170 = vector.broadcast %cst_68 : f32 to vector<32x1xf32>
    %171 = arith.addf %167, %170 : vector<32x1xf32>
    %172 = math.rsqrt %171 : vector<32x1xf32>
    %173 = vector.broadcast %172 : vector<32x1xf32> to vector<32x32xf32>
    %174 = arith.mulf %169, %173 : vector<32x32xf32>
    %175 = vector.broadcast %155 : vector<1x32xf32> to vector<32x32xf32>
    %176 = arith.mulf %174, %175 : vector<32x32xf32>
    %177 = vector.broadcast %156 : vector<1x32xf32> to vector<32x32xf32>
    %178 = arith.addf %176, %177 : vector<32x32xf32>
    %179 = vector.shape_cast %178 : vector<32x32xf32> to vector<4x8x32xf32>
    %180 = arith.truncf %178 : vector<32x32xf32> to vector<32x32xbf16>
    %c0_69 = arith.constant 0 : index
    %c0_70 = arith.constant 0 : index
    %181 = vector.load %arg3[%c0_69, %c0_70] : memref<32x32xbf16, #tpu.memory_space<vmem>>, vector<32x32xbf16>
    %cst_71 = arith.constant dense<0.000000e+00> : vector<32x32xf32>
    %182 = tpu.matmul %180, %181, %cst_71 {dimension_numbers = #tpu.dot_dimension_numbers<[1], [0], [0], [1], [0, 0, 1, 1], [], []>} : vector<32x32xbf16>, vector<32x32xbf16>, vector<32x32xf32> -> vector<32x32xf32>
    %183 = vector.shape_cast %182 : vector<32x32xf32> to vector<4x8x32xf32>
    %c0_72 = arith.constant 0 : index
    %c0_73 = arith.constant 0 : index
    %184 = vector.load %arg2[%c0_72, %c0_73] : memref<4x4xf32, #tpu.memory_space<vmem>>, vector<4x4xf32>
    %185 = vector.shape_cast %184 : vector<4x4xf32> to vector<1x4x4xf32>
    %186 = vector.extract_strided_slice %183 {offsets = [0, 0, 0], sizes = [4, 1, 32], strides = [1, 1, 1]} : vector<4x8x32xf32> to vector<4x1x32xf32>
    %187 = vector.shape_cast %186 : vector<4x1x32xf32> to vector<4x32xf32>
    %188 = vector.shape_cast %187 : vector<4x32xf32> to vector<1x4x32xf32>
    "tpu.trace_start"() <{level = 10 : i32, message = "bnm,bme->bne"}> : () -> ()
    %cst_74 = arith.constant dense<0.000000e+00> : vector<1x4x32xf32>
    %189 = tpu.matmul %185, %188, %cst_74 {dimension_numbers = #tpu.dot_dimension_numbers<[2], [1], [1], [2], [0, 0, 0, 1, 1, 2], [0], [0]>} : vector<1x4x4xf32>, vector<1x4x32xf32>, vector<1x4x32xf32> -> vector<1x4x32xf32>
    "tpu.trace_stop"() : () -> ()
    %c0_75 = arith.constant 0 : index
    %c0_76 = arith.constant 0 : index
    %190 = vector.load %arg4[%c0_75, %c0_76] : memref<1x32xf32, #tpu.memory_space<vmem>>, vector<1x32xf32>
    %191 = vector.shape_cast %190 : vector<1x32xf32> to vector<1x1x32xf32>
    %192 = vector.broadcast %191 : vector<1x1x32xf32> to vector<1x4x32xf32>
    %193 = arith.addf %189, %192 : vector<1x4x32xf32>
    %cst_77 = arith.constant 0.000000e+00 : f32
    %194 = vector.broadcast %cst_77 : f32 to vector<1x4x32xf32>
    %195 = arith.maximumf %193, %194 : vector<1x4x32xf32>
    %196 = vector.shape_cast %195 : vector<1x4x32xf32> to vector<4x32xf32>
    %197 = vector.extract_strided_slice %179 {offsets = [0, 0, 0], sizes = [4, 1, 32], strides = [1, 1, 1]} : vector<4x8x32xf32> to vector<4x1x32xf32>
    %198 = vector.shape_cast %197 : vector<4x1x32xf32> to vector<4x32xf32>
    %199 = arith.addf %196, %198 : vector<4x32xf32>
    %c0_78 = arith.constant 0 : index
    %c0_79 = arith.constant 0 : index
    %200 = vector.load %arg21[%c0_78, %c0_79] : memref<1x32xf32, #tpu.memory_space<vmem>>, vector<1x32xf32>
    %c0_80 = arith.constant 0 : index
    %c0_81 = arith.constant 0 : index
    %201 = vector.load %arg22[%c0_80, %c0_81] : memref<1x32xf32, #tpu.memory_space<vmem>>, vector<1x32xf32>
    %cst_82 = arith.constant dense<0.000000e+00> : vector<4xf32>
    %202 = vector.multi_reduction <add>, %199, %cst_82 [1] : vector<4x32xf32> to vector<4xf32>
    %203 = vector.shape_cast %202 : vector<4xf32> to vector<4x1xf32>
    %cst_83 = arith.constant 3.200000e+01 : f32
    %204 = vector.broadcast %cst_83 : f32 to vector<4x1xf32>
    %205 = arith.divf %203, %204 : vector<4x1xf32>
    %206 = vector.broadcast %205 : vector<4x1xf32> to vector<4x32xf32>
    %207 = arith.subf %199, %206 : vector<4x32xf32>
    %208 = arith.mulf %207, %207 : vector<4x32xf32>
    %cst_84 = arith.constant dense<0.000000e+00> : vector<4xf32>
    %209 = vector.multi_reduction <add>, %208, %cst_84 [1] : vector<4x32xf32> to vector<4xf32>
    %210 = vector.shape_cast %209 : vector<4xf32> to vector<4x1xf32>
    %cst_85 = arith.constant 3.200000e+01 : f32
    %211 = vector.broadcast %cst_85 : f32 to vector<4x1xf32>
    %212 = arith.divf %210, %211 : vector<4x1xf32>
    %213 = vector.broadcast %205 : vector<4x1xf32> to vector<4x32xf32>
    %214 = arith.subf %199, %213 : vector<4x32xf32>
    %cst_86 = arith.constant 9.99999974E-6 : f32
    %215 = vector.broadcast %cst_86 : f32 to vector<4x1xf32>
    %216 = arith.addf %212, %215 : vector<4x1xf32>
    %217 = math.rsqrt %216 : vector<4x1xf32>
    %218 = vector.broadcast %217 : vector<4x1xf32> to vector<4x32xf32>
    %219 = arith.mulf %214, %218 : vector<4x32xf32>
    %220 = vector.broadcast %200 : vector<1x32xf32> to vector<4x32xf32>
    %221 = arith.mulf %219, %220 : vector<4x32xf32>
    %222 = vector.broadcast %201 : vector<1x32xf32> to vector<4x32xf32>
    %223 = arith.addf %221, %222 : vector<4x32xf32>
    %224 = vector.extract_strided_slice %183 {offsets = [0, 1, 0], sizes = [4, 1, 32], strides = [1, 1, 1]} : vector<4x8x32xf32> to vector<4x1x32xf32>
    %225 = vector.shape_cast %224 : vector<4x1x32xf32> to vector<4x32xf32>
    %226 = vector.shape_cast %225 : vector<4x32xf32> to vector<1x4x32xf32>
    "tpu.trace_start"() <{level = 10 : i32, message = "bnm,bme->bne"}> : () -> ()
    %cst_87 = arith.constant dense<0.000000e+00> : vector<1x4x32xf32>
    %227 = tpu.matmul %185, %226, %cst_87 {dimension_numbers = #tpu.dot_dimension_numbers<[2], [1], [1], [2], [0, 0, 0, 1, 1, 2], [0], [0]>} : vector<1x4x4xf32>, vector<1x4x32xf32>, vector<1x4x32xf32> -> vector<1x4x32xf32>
    "tpu.trace_stop"() : () -> ()
    %c0_88 = arith.constant 0 : index
    %c0_89 = arith.constant 0 : index
    %228 = vector.load %arg4[%c0_88, %c0_89] : memref<1x32xf32, #tpu.memory_space<vmem>>, vector<1x32xf32>
    %229 = vector.shape_cast %228 : vector<1x32xf32> to vector<1x1x32xf32>
    %230 = vector.broadcast %229 : vector<1x1x32xf32> to vector<1x4x32xf32>
    %231 = arith.addf %227, %230 : vector<1x4x32xf32>
    %cst_90 = arith.constant 0.000000e+00 : f32
    %232 = vector.broadcast %cst_90 : f32 to vector<1x4x32xf32>
    %233 = arith.maximumf %231, %232 : vector<1x4x32xf32>
    %234 = vector.shape_cast %233 : vector<1x4x32xf32> to vector<4x32xf32>
    %235 = vector.extract_strided_slice %179 {offsets = [0, 1, 0], sizes = [4, 1, 32], strides = [1, 1, 1]} : vector<4x8x32xf32> to vector<4x1x32xf32>
    %236 = vector.shape_cast %235 : vector<4x1x32xf32> to vector<4x32xf32>
    %237 = arith.addf %234, %236 : vector<4x32xf32>
    %c0_91 = arith.constant 0 : index
    %c0_92 = arith.constant 0 : index
    %238 = vector.load %arg21[%c0_91, %c0_92] : memref<1x32xf32, #tpu.memory_space<vmem>>, vector<1x32xf32>
    %c0_93 = arith.constant 0 : index
    %c0_94 = arith.constant 0 : index
    %239 = vector.load %arg22[%c0_93, %c0_94] : memref<1x32xf32, #tpu.memory_space<vmem>>, vector<1x32xf32>
    %cst_95 = arith.constant dense<0.000000e+00> : vector<4xf32>
    %240 = vector.multi_reduction <add>, %237, %cst_95 [1] : vector<4x32xf32> to vector<4xf32>
    %241 = vector.shape_cast %240 : vector<4xf32> to vector<4x1xf32>
    %cst_96 = arith.constant 3.200000e+01 : f32
    %242 = vector.broadcast %cst_96 : f32 to vector<4x1xf32>
    %243 = arith.divf %241, %242 : vector<4x1xf32>
    %244 = vector.broadcast %243 : vector<4x1xf32> to vector<4x32xf32>
    %245 = arith.subf %237, %244 : vector<4x32xf32>
    %246 = arith.mulf %245, %245 : vector<4x32xf32>
    %cst_97 = arith.constant dense<0.000000e+00> : vector<4xf32>
    %247 = vector.multi_reduction <add>, %246, %cst_97 [1] : vector<4x32xf32> to vector<4xf32>
    %248 = vector.shape_cast %247 : vector<4xf32> to vector<4x1xf32>
    %cst_98 = arith.constant 3.200000e+01 : f32
    %249 = vector.broadcast %cst_98 : f32 to vector<4x1xf32>
    %250 = arith.divf %248, %249 : vector<4x1xf32>
    %251 = vector.broadcast %243 : vector<4x1xf32> to vector<4x32xf32>
    %252 = arith.subf %237, %251 : vector<4x32xf32>
    %cst_99 = arith.constant 9.99999974E-6 : f32
    %253 = vector.broadcast %cst_99 : f32 to vector<4x1xf32>
    %254 = arith.addf %250, %253 : vector<4x1xf32>
    %255 = math.rsqrt %254 : vector<4x1xf32>
    %256 = vector.broadcast %255 : vector<4x1xf32> to vector<4x32xf32>
    %257 = arith.mulf %252, %256 : vector<4x32xf32>
    %258 = vector.broadcast %238 : vector<1x32xf32> to vector<4x32xf32>
    %259 = arith.mulf %257, %258 : vector<4x32xf32>
    %260 = vector.broadcast %239 : vector<1x32xf32> to vector<4x32xf32>
    %261 = arith.addf %259, %260 : vector<4x32xf32>
    %262 = vector.shape_cast %223 : vector<4x32xf32> to vector<4x1x32xf32>
    %263 = vector.shape_cast %261 : vector<4x32xf32> to vector<4x1x32xf32>
    %264 = tpu.concatenate %262, %263 in 1 : vector<4x1x32xf32>, vector<4x1x32xf32> -> vector<4x2x32xf32>
    %265 = vector.extract_strided_slice %179 {offsets = [0, 2, 0], sizes = [4, 6, 32], strides = [1, 1, 1]} : vector<4x8x32xf32> to vector<4x6x32xf32>
    %c0_100 = arith.constant 0 : index
    %c0_101 = arith.constant 0 : index
    %266 = vector.load %arg21[%c0_100, %c0_101] : memref<1x32xf32, #tpu.memory_space<vmem>>, vector<1x32xf32>
    %c0_102 = arith.constant 0 : index
    %c0_103 = arith.constant 0 : index
    %267 = vector.load %arg22[%c0_102, %c0_103] : memref<1x32xf32, #tpu.memory_space<vmem>>, vector<1x32xf32>
    %cst_104 = arith.constant dense<0.000000e+00> : vector<4x6xf32>
    %268 = vector.multi_reduction <add>, %265, %cst_104 [2] : vector<4x6x32xf32> to vector<4x6xf32>
    %269 = vector.shape_cast %268 : vector<4x6xf32> to vector<4x6x1xf32>
    %cst_105 = arith.constant 3.200000e+01 : f32
    %270 = vector.broadcast %cst_105 : f32 to vector<4x6x1xf32>
    %271 = arith.divf %269, %270 : vector<4x6x1xf32>
    %272 = vector.broadcast %271 : vector<4x6x1xf32> to vector<4x6x32xf32>
    %273 = arith.subf %265, %272 : vector<4x6x32xf32>
    %274 = arith.mulf %273, %273 : vector<4x6x32xf32>
    %cst_106 = arith.constant dense<0.000000e+00> : vector<4x6xf32>
    %275 = vector.multi_reduction <add>, %274, %cst_106 [2] : vector<4x6x32xf32> to vector<4x6xf32>
    %276 = vector.shape_cast %275 : vector<4x6xf32> to vector<4x6x1xf32>
    %cst_107 = arith.constant 3.200000e+01 : f32
    %277 = vector.broadcast %cst_107 : f32 to vector<4x6x1xf32>
    %278 = arith.divf %276, %277 : vector<4x6x1xf32>
    %279 = vector.broadcast %271 : vector<4x6x1xf32> to vector<4x6x32xf32>
    %280 = arith.subf %265, %279 : vector<4x6x32xf32>
    %cst_108 = arith.constant 9.99999974E-6 : f32
    %281 = vector.broadcast %cst_108 : f32 to vector<4x6x1xf32>
    %282 = arith.addf %278, %281 : vector<4x6x1xf32>
    %283 = math.rsqrt %282 : vector<4x6x1xf32>
    %284 = vector.broadcast %283 : vector<4x6x1xf32> to vector<4x6x32xf32>
    %285 = arith.mulf %280, %284 : vector<4x6x32xf32>
    %286 = vector.shape_cast %266 : vector<1x32xf32> to vector<1x1x32xf32>
    %287 = vector.broadcast %286 : vector<1x1x32xf32> to vector<4x6x32xf32>
    %288 = arith.mulf %285, %287 : vector<4x6x32xf32>
    %289 = vector.shape_cast %267 : vector<1x32xf32> to vector<1x1x32xf32>
    %290 = vector.broadcast %289 : vector<1x1x32xf32> to vector<4x6x32xf32>
    %291 = arith.addf %288, %290 : vector<4x6x32xf32>
    %292 = tpu.concatenate %264, %291 in 1 : vector<4x2x32xf32>, vector<4x6x32xf32> -> vector<4x8x32xf32>
    %293 = vector.shape_cast %292 : vector<4x8x32xf32> to vector<32x32xf32>
    %c0_109 = arith.constant 0 : index
    %c0_110 = arith.constant 0 : index
    %294 = vector.load %arg23[%c0_109, %c0_110] : memref<32x32xf32, #tpu.memory_space<vmem>>, vector<32x32xf32>
    tpu.vector_store %arg23[%c0_109, %c0_110], %293 {strides = array<i32>} : memref<32x32xf32, #tpu.memory_space<vmem>>, vector<32x32xf32>,
    return
  }
  func.func @transform_0(%arg0: i32) -> (i32, i32) {
    %c0_i32 = arith.constant 0 : i32
    %c0_i32_0 = arith.constant 0 : i32
    return %arg0, %c0_i32 : i32, i32
  }
  func.func @transform_1(%arg0: i32) -> (i32, i32) {
    %c0_i32 = arith.constant 0 : i32
    %c0_i32_0 = arith.constant 0 : i32
    %c0_i32_1 = arith.constant 0 : i32
    return %c0_i32, %c0_i32_0 : i32, i32
  }
  func.func @transform_2(%arg0: i32) -> (i32, i32) {
    %c0_i32 = arith.constant 0 : i32
    %c0_i32_0 = arith.constant 0 : i32
    %c0_i32_1 = arith.constant 0 : i32
    return %c0_i32, %c0_i32_0 : i32, i32
  }
  func.func @transform_3(%arg0: i32) -> (i32, i32) {
    %c0_i32 = arith.constant 0 : i32
    %c0_i32_0 = arith.constant 0 : i32
    %c0_i32_1 = arith.constant 0 : i32
    return %c0_i32, %c0_i32_0 : i32, i32
  }
  func.func @transform_4(%arg0: i32) -> (i32, i32) {
    %c0_i32 = arith.constant 0 : i32
    %c0_i32_0 = arith.constant 0 : i32
    %c0_i32_1 = arith.constant 0 : i32
    return %c0_i32, %c0_i32_0 : i32, i32
  }
  func.func @transform_5(%arg0: i32) -> (i32, i32) {
    %c0_i32 = arith.constant 0 : i32
    %c0_i32_0 = arith.constant 0 : i32
    %c0_i32_1 = arith.constant 0 : i32
    return %c0_i32, %c0_i32_0 : i32, i32
  }
  func.func @transform_6(%arg0: i32) -> (i32, i32) {
    %c0_i32 = arith.constant 0 : i32
    %c0_i32_0 = arith.constant 0 : i32
    %c0_i32_1 = arith.constant 0 : i32
    return %c0_i32, %c0_i32_0 : i32, i32
  }
  func.func @transform_7(%arg0: i32) -> (i32, i32) {
    %c0_i32 = arith.constant 0 : i32
    %c0_i32_0 = arith.constant 0 : i32
    %c0_i32_1 = arith.constant 0 : i32
    return %c0_i32, %c0_i32_0 : i32, i32
  }
  func.func @transform_8(%arg0: i32) -> (i32, i32) {
    %c0_i32 = arith.constant 0 : i32
    %c0_i32_0 = arith.constant 0 : i32
    %c0_i32_1 = arith.constant 0 : i32
    return %c0_i32, %c0_i32_0 : i32, i32
  }
  func.func @transform_9(%arg0: i32) -> (i32, i32) {
    %c0_i32 = arith.constant 0 : i32
    %c0_i32_0 = arith.constant 0 : i32
    %c0_i32_1 = arith.constant 0 : i32
    return %c0_i32, %c0_i32_0 : i32, i32
  }
  func.func @transform_10(%arg0: i32) -> (i32, i32) {
    %c0_i32 = arith.constant 0 : i32
    %c0_i32_0 = arith.constant 0 : i32
    %c0_i32_1 = arith.constant 0 : i32
    return %c0_i32, %c0_i32_0 : i32, i32
  }
  func.func @transform_11(%arg0: i32) -> (i32, i32) {
    %c0_i32 = arith.constant 0 : i32
    %c0_i32_0 = arith.constant 0 : i32
    %c0_i32_1 = arith.constant 0 : i32
    return %c0_i32, %c0_i32_0 : i32, i32
  }
  func.func @transform_12(%arg0: i32) -> (i32, i32) {
    %c0_i32 = arith.constant 0 : i32
    %c0_i32_0 = arith.constant 0 : i32
    %c0_i32_1 = arith.constant 0 : i32
    return %c0_i32, %c0_i32_0 : i32, i32
  }
  func.func @transform_13(%arg0: i32) -> (i32, i32) {
    %c0_i32 = arith.constant 0 : i32
    %c0_i32_0 = arith.constant 0 : i32
    %c0_i32_1 = arith.constant 0 : i32
    return %c0_i32, %c0_i32_0 : i32, i32
  }
  func.func @transform_14(%arg0: i32) -> (i32, i32) {
    %c0_i32 = arith.constant 0 : i32
    %c0_i32_0 = arith.constant 0 : i32
    %c0_i32_1 = arith.constant 0 : i32
    return %c0_i32, %c0_i32_0 : i32, i32
  }
  func.func @transform_15(%arg0: i32) -> (i32, i32) {
    %c0_i32 = arith.constant 0 : i32
    %c0_i32_0 = arith.constant 0 : i32
    %c0_i32_1 = arith.constant 0 : i32
    return %c0_i32, %c0_i32_0 : i32, i32
  }
  func.func @transform_16(%arg0: i32) -> (i32, i32) {
    %c0_i32 = arith.constant 0 : i32
    %c0_i32_0 = arith.constant 0 : i32
    %c0_i32_1 = arith.constant 0 : i32
    return %c0_i32, %c0_i32_0 : i32, i32
  }
  func.func @transform_17(%arg0: i32) -> (i32, i32) {
    %c0_i32 = arith.constant 0 : i32
    %c0_i32_0 = arith.constant 0 : i32
    %c0_i32_1 = arith.constant 0 : i32
    return %c0_i32, %c0_i32_0 : i32, i32
  }
  func.func @transform_18(%arg0: i32) -> (i32, i32) {
    %c0_i32 = arith.constant 0 : i32
    %c0_i32_0 = arith.constant 0 : i32
    %c0_i32_1 = arith.constant 0 : i32
    return %c0_i32, %c0_i32_0 : i32, i32
  }
  func.func @transform_19(%arg0: i32) -> (i32, i32) {
    %c0_i32 = arith.constant 0 : i32
    %c0_i32_0 = arith.constant 0 : i32
    %c0_i32_1 = arith.constant 0 : i32
    return %c0_i32, %c0_i32_0 : i32, i32
  }
  func.func @transform_20(%arg0: i32) -> (i32, i32) {
    %c0_i32 = arith.constant 0 : i32
    %c0_i32_0 = arith.constant 0 : i32
    %c0_i32_1 = arith.constant 0 : i32
    return %c0_i32, %c0_i32_0 : i32, i32
  }
  func.func @transform_21(%arg0: i32) -> (i32, i32) {
    %c0_i32 = arith.constant 0 : i32
    %c0_i32_0 = arith.constant 0 : i32
    %c0_i32_1 = arith.constant 0 : i32
    return %c0_i32, %c0_i32_0 : i32, i32
  }
  func.func @transform_22(%arg0: i32) -> (i32, i32) {
    %c0_i32 = arith.constant 0 : i32
    %c0_i32_0 = arith.constant 0 : i32
    return %arg0, %c0_i32 : i32, i32
  }
}

</mosaic_0001>

<llo_original>
// kernel: tpu_custom_call.1
$region0: #{tpu_custom_call.1}
  #allocation0 [shape = 'u32[]', space=smem, size = 0x4, offset = 0x4, fixed_abs, tag = 'smem constant byte address 0x4 - core index']
  #allocation1 [shape = 'u32[144,128]{1,0:T(1,128)}', space=vmem, size = 0x12000, scoped, tag = 'internal scratch']
  %s0 = inlined_call_operand.hbm [shape: f32[8,128], index: 0, kind: input, shape index: {}]
  %s1 = inlined_call_operand.hbm [shape: f32[8,128], index: 1, kind: output, shape index: {}]
  %s2 = sld [smem:[#allocation0]]
  $region41: #{tpu_custom_call.1} parent=0
    _
  %s4 = ssub.s32 1, %s2
  %s5 = scalar_select 0, %s4, %s2
  $region1: #{tpu_custom_call.1} parent=0
    #allocation2 [shape = 'u8[4096]{0}', space=vmem, size = 0x1000, scoped, tag = 'input window, operand 0, single buffered']
    #allocation3 [shape = 's32[2]{0}', space=sflag, size = 0x8, scoped, tag = 'scoped memory for tpu_custom_call.1']
    #allocation4 [shape = 's32[2]{0}', space=sflag, size = 0x8, scoped, tag = 'scoped memory for tpu_custom_call.1']
    #allocation5 [shape = 'u8[4096]{0}', space=vmem, size = 0x1000, scoped, tag = 'output window, operand 0, single buffered']
    %6 = vsyncpa [#allocation3], 0
    %7 = vsyncpa [#allocation4], 0
    loop: start=0, step=1, limit=4
    $region2: #{tpu_custom_call.1} parent=1 // loop_pre_header
      _
    $region3: #{tpu_custom_call.1} parent=1 // loop_header
      %s9 = sphi 0, %s13
      %p10 = scmp.ge.s32.totalorder %s9, 4
      %s17 = sphi 0, %s17
      %s19 = sphi 0, %s17
      %s20 = sphi 0, %s19
      %s34 = sphi 0, %s20
      %s38 = sphi 0, %s38
      %s40 = sphi 0, %s38
      %s41 = sphi 0, %s40
      %s55 = sphi 0, %s41
    $region4: #{tpu_custom_call.1} parent=1 // loop_header_branch
      %12 = sbr.rel (%p10) target = $region8
    $region5: #{tpu_custom_call.1} parent=1 // loop_body
      %s14 = ssub.s32 %s9, 1
      %s15 = ssub.s32 %s9, 2
      %s16 = sadd.s32 %s9, 1
      %s18 = sadd.s32 %s17, 1
      %p21 = scmp.eq.s32.totalorder %s9, 1
      %p22 = scmp.ne.s32.totalorder %s17, %s19
      %p23 = scmp.eq.s32.totalorder %s9, 0
      %p24 = por %p22, %p23
      %p25 = scmp.ne.s32.totalorder %s17, %s19
      %p26 = scmp.eq.s32.totalorder %s14, 1
      %p27 = por %p25, %p26
      %p28 = scmp.ne.s32.totalorder %s19, %s20
      %p29 = scmp.eq.s32.totalorder %s14, 0
      %p30 = por %p28, %p29
      %p31 = scmp.ne.s32.totalorder %s19, %s20
      %p32 = scmp.eq.s32.totalorder %s15, 1
      %p33 = por %p31, %p32
      %p35 = scmp.ne.s32.totalorder %s20, %s34
      %p36 = scmp.eq.s32.totalorder %s15, 0
      %p37 = por %p35, %p36
      %s39 = sadd.s32 %s38, 1
      %p42 = scmp.eq.s32.totalorder %s9, 1
      %p43 = scmp.ne.s32.totalorder %s38, %s40
      %p44 = scmp.eq.s32.totalorder %s9, 0
      %p45 = por %p43, %p44
      %p46 = scmp.ne.s32.totalorder %s38, %s40
      %p47 = scmp.eq.s32.totalorder %s14, 1
      %p48 = por %p46, %p47
      %p49 = scmp.ne.s32.totalorder %s40, %s41
      %p50 = scmp.eq.s32.totalorder %s14, 0
      %p51 = por %p49, %p50
      %p52 = scmp.ne.s32.totalorder %s40, %s41
      %p53 = scmp.eq.s32.totalorder %s15, 1
      %p54 = por %p52, %p53
      %p56 = scmp.ne.s32.totalorder %s41, %s55
      %p57 = scmp.eq.s32.totalorder %s15, 0
      %p58 = por %p56, %p57
      %p59 = scmp.le.s32.totalorder 1, %s9
      %p60 = scmp.lt.s32.totalorder %s9, 3
      %p61 = pnand %p59, %p60
      %p62 = pneg %p61
      // Predicated region
      $region9: #{tpu_custom_call.1} parent=5 // pred_check
        _
      $region10: #{tpu_custom_call.1} parent=5 // pred_check_branch
        %64 = sbr.rel (%p61) target = $region12
      $region11: #{tpu_custom_call.1} parent=5 // pred_region
        %s65 = ssub.s32 %s9, 1
        // Predicated region
        $region13: #{tpu_custom_call.1} parent=11 // pred_check
          %p66 = pneg %p30
        $region14: #{tpu_custom_call.1} parent=11 // pred_check_branch
          %68 = sbr.rel (%p66) target = $region16
        $region15: #{tpu_custom_call.1} parent=11 // pred_region
          %s70 = ssub.s32 128, 128
          %71 = vsyncadd [#allocation3], %s70
          %s73 = sshll.u32 [#allocation2], 4
          %s74 = int_to_ptr.vmem [resolvable:$true] %s73
          %76 = dma.hbm_to_vmem [thread:$0]  %s0, 128, %s74, [#allocation3]
        $region16: #{tpu_custom_call.1} parent=11 // pred_fallthru
          _
      $region12: #{tpu_custom_call.1} parent=5 // pred_fallthru
        _
      %p77 = scmp.lt.s32.totalorder %s9, 2
      // Predicated region
      $region17: #{tpu_custom_call.1} parent=5 // pred_check
        %p78 = pneg %p77
      $region18: #{tpu_custom_call.1} parent=5 // pred_check_branch
        %80 = sbr.rel (%p78) target = $region20
      $region19: #{tpu_custom_call.1} parent=5 // pred_region
        _
      $region20: #{tpu_custom_call.1} parent=5 // pred_fallthru
        _
      %p81 = scmp.le.s32.totalorder 1, %s9
      %p82 = scmp.lt.s32.totalorder %s9, 3
      %p83 = pnand %p81, %p82
      %p84 = pneg %p83
      // Predicated region
      $region21: #{tpu_custom_call.1} parent=5 // pred_check
        _
      $region22: #{tpu_custom_call.1} parent=5 // pred_check_branch
        %86 = sbr.rel (%p83) target = $region24
      $region23: #{tpu_custom_call.1} parent=5 // pred_region
        %s87 = ssub.s32 %s9, 1
        // Predicated region
        $region25: #{tpu_custom_call.1} parent=23 // pred_check
          %p88 = pneg %p30
        $region26: #{tpu_custom_call.1} parent=23 // pred_check_branch
          %90 = sbr.rel (%p88) target = $region28
        $region27: #{tpu_custom_call.1} parent=23 // pred_region
          %91 = dma.done [#allocation3], 128
        $region28: #{tpu_custom_call.1} parent=23 // pred_fallthru
          _
        %p92 = pneg %p30
        %p93 = pneg %p27
        %p94 = pneg %p51
        %p95 = pneg %p48
        %v96 = vld [vmem:[#allocation2] sm:$0xff]
        %v97 = vadd.f32 %v96, 1.0
        %98 = vst [vmem:[#allocation5] sm:$0xff] %v97
        // Predicated region
        $region29: #{tpu_custom_call.1} parent=23 // pred_check
          %p99 = pneg %p48
        $region30: #{tpu_custom_call.1} parent=23 // pred_check_branch
          %101 = sbr.rel (%p99) target = $region32
        $region31: #{tpu_custom_call.1} parent=23 // pred_region
          %s103 = ssub.s32 128, 128
          %104 = vsyncadd [#allocation4], %s103
          %s106 = sshll.u32 [#allocation5], 4
          %s107 = int_to_ptr.vmem [resolvable:$true] %s106
          %109 = dma.vmem_to_hbm [thread:$0]  %s107, 128, %s1, [#allocation4]
        $region32: #{tpu_custom_call.1} parent=23 // pred_fallthru
          _
        // Predicated region
        $region33: #{tpu_custom_call.1} parent=23 // pred_check
          %p110 = pneg %p48
        $region34: #{tpu_custom_call.1} parent=23 // pred_check_branch
          %112 = sbr.rel (%p110) target = $region36
        $region35: #{tpu_custom_call.1} parent=23 // pred_region
          %113 = dma.done [#allocation4], 128
        $region36: #{tpu_custom_call.1} parent=23 // pred_fallthru
          _
      $region24: #{tpu_custom_call.1} parent=5 // pred_fallthru
        _
      %p114 = scmp.le.s32.totalorder 2, %s9
      // Predicated region
      $region37: #{tpu_custom_call.1} parent=5 // pred_check
        %p115 = pneg %p114
      $region38: #{tpu_custom_call.1} parent=5 // pred_check_branch
        %117 = sbr.rel (%p115) target = $region40
      $region39: #{tpu_custom_call.1} parent=5 // pred_region
        %s118 = ssub.s32 %s9, 2
      $region40: #{tpu_custom_call.1} parent=5 // pred_fallthru
        _
    $region6: #{tpu_custom_call.1} parent=1 // loop_footer
      %s13 = sadd.s32 1, %s9
    $region7: #{tpu_custom_call.1} parent=1 // loop_footer_branch
      %8 = sbr.rel target = $region3
    $region8: #{tpu_custom_call.1} parent=1 // loop_exit
      _
    %119 = vsyncpa [#allocation3], 1
    %s120 = scalar_lea.sflag [#allocation3], 1
    %121 = vsyncpa %s120, 1
    %122 = vsyncpa [#allocation4], 1
    %s123 = scalar_lea.sflag [#allocation4], 1
    %124 = vsyncpa %s123, 1

// kernel: tpu_custom_call.1
$region0: #{tpu_custom_call.1}
  #allocation0 [shape = 'u32[]', space=smem, size = 0x4, offset = 0x4, fixed_abs, tag = 'smem constant byte address 0x4 - core index']
  #allocation1 [shape = 'u32[144,128]{1,0:T(1,128)}', space=vmem, size = 0x12000, scoped, tag = 'internal scratch']
  %s0 = inlined_call_operand.vmem [shape: f32[64,32], index: 0, kind: input, shape index: {}]
  %s1 = inlined_call_operand.vmem [shape: f32[4,4], index: 1, kind: input, shape index: {}]
  %s2 = inlined_call_operand.vmem [shape: bf16[32,32], index: 2, kind: input, shape index: {}]
  %s3 = inlined_call_operand.vmem [shape: f32[1,32], index: 3, kind: input, shape index: {}]
  %s4 = inlined_call_operand.vmem [shape: bf16[32,32], index: 4, kind: input, shape index: {}]
  %s5 = inlined_call_operand.vmem [shape: f32[1,32], index: 5, kind: input, shape index: {}]
  %s6 = inlined_call_operand.vmem [shape: bf16[32,32], index: 6, kind: input, shape index: {}]
  %s7 = inlined_call_operand.vmem [shape: f32[1,32], index: 7, kind: input, shape index: {}]
  %s8 = inlined_call_operand.vmem [shape: bf16[32,32], index: 8, kind: input, shape index: {}]
  %s9 = inlined_call_operand.vmem [shape: f32[1,32], index: 9, kind: input, shape index: {}]
  %s10 = inlined_call_operand.vmem [shape: bf16[32,32], index: 10, kind: input, shape index: {}]
  %s11 = inlined_call_operand.vmem [shape: f32[1,32], index: 11, kind: input, shape index: {}]
  %s12 = inlined_call_operand.vmem [shape: f32[1,32], index: 12, kind: input, shape index: {}]
  %s13 = inlined_call_operand.vmem [shape: f32[1,32], index: 13, kind: input, shape index: {}]
  %s14 = inlined_call_operand.vmem [shape: bf16[32,64], index: 14, kind: input, shape index: {}]
  %s15 = inlined_call_operand.vmem [shape: f32[1,64], index: 15, kind: input, shape index: {}]
  %s16 = inlined_call_operand.vmem [shape: bf16[64,32], index: 16, kind: input, shape index: {}]
  %s17 = inlined_call_operand.vmem [shape: f32[1,32], index: 17, kind: input, shape index: {}]
  %s18 = inlined_call_operand.vmem [shape: f32[1,32], index: 18, kind: input, shape index: {}]
  %s19 = inlined_call_operand.vmem [shape: f32[1,32], index: 19, kind: input, shape index: {}]
  %s20 = inlined_call_operand.vmem [shape: f32[1,32], index: 20, kind: input, shape index: {}]
  %s21 = inlined_call_operand.vmem [shape: f32[1,32], index: 21, kind: input, shape index: {}]
  %s22 = inlined_call_operand.vmem [shape: f32[64,32], index: 22, kind: output, shape index: {}]
  %s23 = sld [smem:[#allocation0]]
  $region121: #{tpu_custom_call.1} parent=0
    _
  %s25 = ssub.s32 1, %s23
  %s26 = scalar_select 0, %s25, %s23
  loop: start=0, step=1, limit=4
  $region2: #{tpu_custom_call.1} parent=0 // loop_pre_header
    _
  $region3: #{tpu_custom_call.1} parent=0 // loop_header
    %s28 = sphi 0, %s32
    %p29 = scmp.ge.s32.totalorder %s28, 4
    %s38 = sphi 0, %s40
    %s41 = sphi 0, %s38
    %s42 = sphi 0, %s41
    %s58 = sphi 0, %s42
    %s62 = sphi 0, %s62
    %s64 = sphi 0, %s62
    %s65 = sphi 0, %s64
    %s79 = sphi 0, %s65
    %s83 = sphi 0, %s83
    %s85 = sphi 0, %s83
    %s86 = sphi 0, %s85
    %s100 = sphi 0, %s86
    %s104 = sphi 0, %s104
    %s106 = sphi 0, %s104
    %s107 = sphi 0, %s106
    %s121 = sphi 0, %s107
    %s125 = sphi 0, %s125
    %s127 = sphi 0, %s125
    %s128 = sphi 0, %s127
    %s142 = sphi 0, %s128
    %s146 = sphi 0, %s146
    %s148 = sphi 0, %s146
    %s149 = sphi 0, %s148
    %s163 = sphi 0, %s149
    %s167 = sphi 0, %s167
    %s169 = sphi 0, %s167
    %s170 = sphi 0, %s169
    %s184 = sphi 0, %s170
    %s188 = sphi 0, %s188
    %s190 = sphi 0, %s188
    %s191 = sphi 0, %s190
    %s205 = sphi 0, %s191
    %s209 = sphi 0, %s209
    %s211 = sphi 0, %s209
    %s212 = sphi 0, %s211
    %s226 = sphi 0, %s212
    %s230 = sphi 0, %s230
    %s232 = sphi 0, %s230
    %s233 = sphi 0, %s232
    %s247 = sphi 0, %s233
    %s251 = sphi 0, %s251
    %s253 = sphi 0, %s251
    %s254 = sphi 0, %s253
    %s268 = sphi 0, %s254
    %s272 = sphi 0, %s272
    %s274 = sphi 0, %s272
    %s275 = sphi 0, %s274
    %s289 = sphi 0, %s275
    %s293 = sphi 0, %s293
    %s295 = sphi 0, %s293
    %s296 = sphi 0, %s295
    %s310 = sphi 0, %s296
    %s314 = sphi 0, %s314
    %s316 = sphi 0, %s314
    %s317 = sphi 0, %s316
    %s331 = sphi 0, %s317
    %s335 = sphi 0, %s335
    %s337 = sphi 0, %s335
    %s338 = sphi 0, %s337
    %s352 = sphi 0, %s338
    %s356 = sphi 0, %s356
    %s358 = sphi 0, %s356
    %s359 = sphi 0, %s358
    %s373 = sphi 0, %s359
    %s377 = sphi 0, %s377
    %s379 = sphi 0, %s377
    %s380 = sphi 0, %s379
    %s394 = sphi 0, %s380
    %s398 = sphi 0, %s398
    %s400 = sphi 0, %s398
    %s401 = sphi 0, %s400
    %s415 = sphi 0, %s401
    %s419 = sphi 0, %s419
    %s421 = sphi 0, %s419
    %s422 = sphi 0, %s421
    %s436 = sphi 0, %s422
    %s440 = sphi 0, %s440
    %s442 = sphi 0, %s440
    %s443 = sphi 0, %s442
    %s457 = sphi 0, %s443
    %s461 = sphi 0, %s461
    %s463 = sphi 0, %s461
    %s464 = sphi 0, %s463
    %s478 = sphi 0, %s464
    %s482 = sphi 0, %s482
    %s484 = sphi 0, %s482
    %s485 = sphi 0, %s484
    %s499 = sphi 0, %s485
    %s505 = sphi 0, %s507
    %s508 = sphi 0, %s505
    %s509 = sphi 0, %s508
    %s525 = sphi 0, %s509
  $region4: #{tpu_custom_call.1} parent=0 // loop_header_branch
    %31 = sbr.rel (%p29) target = $region8
  $region5: #{tpu_custom_call.1} parent=0 // loop_body
    %s33 = ssub.s32 %s28, 1
    %s34 = ssub.s32 %s28, 2
    %s35 = sadd.s32 %s28, 1
    %s36 = ssub.s32 %s28, %s35
    %p37 = scmp.eq.s32.totalorder %s36, 0
    %s39 = sadd.s32 %s38, 1
    %s40 = scalar_select %p37, %s38, %s39
    %p43 = pneg %p37
    %p44 = scmp.eq.s32.totalorder %s28, 1
    %p45 = por %p43, %p44
    %p46 = scmp.ne.s32.totalorder %s38, %s41
    %p47 = scmp.eq.s32.totalorder %s28, 0
    %p48 = por %p46, %p47
    %p49 = scmp.ne.s32.totalorder %s38, %s41
    %p50 = scmp.eq.s32.totalorder %s33, 1
    %p51 = por %p49, %p50
    %p52 = scmp.ne.s32.totalorder %s41, %s42
    %p53 = scmp.eq.s32.totalorder %s33, 0
    %p54 = por %p52, %p53
    %p55 = scmp.ne.s32.totalorder %s41, %s42
    %p56 = scmp.eq.s32.totalorder %s34, 1
    %p57 = por %p55, %p56
    %p59 = scmp.ne.s32.totalorder %s42, %s58
    %p60 = scmp.eq.s32.totalorder %s34, 0
    %p61 = por %p59, %p60
    %s63 = sadd.s32 %s62, 1
    %p66 = scmp.eq.s32.totalorder %s28, 1
    %p67 = scmp.ne.s32.totalorder %s62, %s64
    %p68 = scmp.eq.s32.totalorder %s28, 0
    %p69 = por %p67, %p68
    %p70 = scmp.ne.s32.totalorder %s62, %s64
    %p71 = scmp.eq.s32.totalorder %s33, 1
    %p72 = por %p70, %p71
    %p73 = scmp.ne.s32.totalorder %s64, %s65
    %p74 = scmp.eq.s32.totalorder %s33, 0
    %p75 = por %p73, %p74
    %p76 = scmp.ne.s32.totalorder %s64, %s65
    %p77 = scmp.eq.s32.totalorder %s34, 1
    %p78 = por %p76, %p77
    %p80 = scmp.ne.s32.totalorder %s65, %s79
    %p81 = scmp.eq.s32.totalorder %s34, 0
    %p82 = por %p80, %p81
    %s84 = sadd.s32 %s83, 1
    %p87 = scmp.eq.s32.totalorder %s28, 1
    %p88 = scmp.ne.s32.totalorder %s83, %s85
    %p89 = scmp.eq.s32.totalorder %s28, 0
    %p90 = por %p88, %p89
    %p91 = scmp.ne.s32.totalorder %s83, %s85
    %p92 = scmp.eq.s32.totalorder %s33, 1
    %p93 = por %p91, %p92
    %p94 = scmp.ne.s32.totalorder %s85, %s86
    %p95 = scmp.eq.s32.totalorder %s33, 0
    %p96 = por %p94, %p95
    %p97 = scmp.ne.s32.totalorder %s85, %s86
    %p98 = scmp.eq.s32.totalorder %s34, 1
    %p99 = por %p97, %p98
    %p101 = scmp.ne.s32.totalorder %s86, %s100
    %p102 = scmp.eq.s32.totalorder %s34, 0
    %p103 = por %p101, %p102
    %s105 = sadd.s32 %s104, 1
    %p108 = scmp.eq.s32.totalorder %s28, 1
    %p109 = scmp.ne.s32.totalorder %s104, %s106
    %p110 = scmp.eq.s32.totalorder %s28, 0
    %p111 = por %p109, %p110
    %p112 = scmp.ne.s32.totalorder %s104, %s106
    %p113 = scmp.eq.s32.totalorder %s33, 1
    %p114 = por %p112, %p113
    %p115 = scmp.ne.s32.totalorder %s106, %s107
    %p116 = scmp.eq.s32.totalorder %s33, 0
    %p117 = por %p115, %p116
    %p118 = scmp.ne.s32.totalorder %s106, %s107
    %p119 = scmp.eq.s32.totalorder %s34, 1
    %p120 = por %p118, %p119
    %p122 = scmp.ne.s32.totalorder %s107, %s121
    %p123 = scmp.eq.s32.totalorder %s34, 0
    %p124 = por %p122, %p123
    %s126 = sadd.s32 %s125, 1
    %p129 = scmp.eq.s32.totalorder %s28, 1
    %p130 = scmp.ne.s32.totalorder %s125, %s127
    %p131 = scmp.eq.s32.totalorder %s28, 0
    %p132 = por %p130, %p131
    %p133 = scmp.ne.s32.totalorder %s125, %s127
    %p134 = scmp.eq.s32.totalorder %s33, 1
    %p135 = por %p133, %p134
    %p136 = scmp.ne.s32.totalorder %s127, %s128
    %p137 = scmp.eq.s32.totalorder %s33, 0
    %p138 = por %p136, %p137
    %p139 = scmp.ne.s32.totalorder %s127, %s128
    %p140 = scmp.eq.s32.totalorder %s34, 1
    %p141 = por %p139, %p140
    %p143 = scmp.ne.s32.totalorder %s128, %s142
    %p144 = scmp.eq.s32.totalorder %s34, 0
    %p145 = por %p143, %p144
    %s147 = sadd.s32 %s146, 1
    %p150 = scmp.eq.s32.totalorder %s28, 1
    %p151 = scmp.ne.s32.totalorder %s146, %s148
    %p152 = scmp.eq.s32.totalorder %s28, 0
    %p153 = por %p151, %p152
    %p154 = scmp.ne.s32.totalorder %s146, %s148
    %p155 = scmp.eq.s32.totalorder %s33, 1
    %p156 = por %p154, %p155
    %p157 = scmp.ne.s32.totalorder %s148, %s149
    %p158 = scmp.eq.s32.totalorder %s33, 0
    %p159 = por %p157, %p158
    %p160 = scmp.ne.s32.totalorder %s148, %s149
    %p161 = scmp.eq.s32.totalorder %s34, 1
    %p162 = por %p160, %p161
    %p164 = scmp.ne.s32.totalorder %s149, %s163
    %p165 = scmp.eq.s32.totalorder %s34, 0
    %p166 = por %p164, %p165
    %s168 = sadd.s32 %s167, 1
    %p171 = scmp.eq.s32.totalorder %s28, 1
    %p172 = scmp.ne.s32.totalorder %s167, %s169
    %p173 = scmp.eq.s32.totalorder %s28, 0
    %p174 = por %p172, %p173
    %p175 = scmp.ne.s32.totalorder %s167, %s169
    %p176 = scmp.eq.s32.totalorder %s33, 1
    %p177 = por %p175, %p176
    %p178 = scmp.ne.s32.totalorder %s169, %s170
    %p179 = scmp.eq.s32.totalorder %s33, 0
    %p180 = por %p178, %p179
    %p181 = scmp.ne.s32.totalorder %s169, %s170
    %p182 = scmp.eq.s32.totalorder %s34, 1
    %p183 = por %p181, %p182
    %p185 = scmp.ne.s32.totalorder %s170, %s184
    %p186 = scmp.eq.s32.totalorder %s34, 0
    %p187 = por %p185, %p186
    %s189 = sadd.s32 %s188, 1
    %p192 = scmp.eq.s32.totalorder %s28, 1
    %p193 = scmp.ne.s32.totalorder %s188, %s190
    %p194 = scmp.eq.s32.totalorder %s28, 0
    %p195 = por %p193, %p194
    %p196 = scmp.ne.s32.totalorder %s188, %s190
    %p197 = scmp.eq.s32.totalorder %s33, 1
    %p198 = por %p196, %p197
    %p199 = scmp.ne.s32.totalorder %s190, %s191
    %p200 = scmp.eq.s32.totalorder %s33, 0
    %p201 = por %p199, %p200
    %p202 = scmp.ne.s32.totalorder %s190, %s191
    %p203 = scmp.eq.s32.totalorder %s34, 1
    %p204 = por %p202, %p203
    %p206 = scmp.ne.s32.totalorder %s191, %s205
    %p207 = scmp.eq.s32.totalorder %s34, 0
    %p208 = por %p206, %p207
    %s210 = sadd.s32 %s209, 1
    %p213 = scmp.eq.s32.totalorder %s28, 1
    %p214 = scmp.ne.s32.totalorder %s209, %s211
    %p215 = scmp.eq.s32.totalorder %s28, 0
    %p216 = por %p214, %p215
    %p217 = scmp.ne.s32.totalorder %s209, %s211
    %p218 = scmp.eq.s32.totalorder %s33, 1
    %p219 = por %p217, %p218
    %p220 = scmp.ne.s32.totalorder %s211, %s212
    %p221 = scmp.eq.s32.totalorder %s33, 0
    %p222 = por %p220, %p221
    %p223 = scmp.ne.s32.totalorder %s211, %s212
    %p224 = scmp.eq.s32.totalorder %s34, 1
    %p225 = por %p223, %p224
    %p227 = scmp.ne.s32.totalorder %s212, %s226
    %p228 = scmp.eq.s32.totalorder %s34, 0
    %p229 = por %p227, %p228
    %s231 = sadd.s32 %s230, 1
    %p234 = scmp.eq.s32.totalorder %s28, 1
    %p235 = scmp.ne.s32.totalorder %s230, %s232
    %p236 = scmp.eq.s32.totalorder %s28, 0
    %p237 = por %p235, %p236
    %p238 = scmp.ne.s32.totalorder %s230, %s232
    %p239 = scmp.eq.s32.totalorder %s33, 1
    %p240 = por %p238, %p239
    %p241 = scmp.ne.s32.totalorder %s232, %s233
    %p242 = scmp.eq.s32.totalorder %s33, 0
    %p243 = por %p241, %p242
    %p244 = scmp.ne.s32.totalorder %s232, %s233
    %p245 = scmp.eq.s32.totalorder %s34, 1
    %p246 = por %p244, %p245
    %p248 = scmp.ne.s32.totalorder %s233, %s247
    %p249 = scmp.eq.s32.totalorder %s34, 0
    %p250 = por %p248, %p249
    %s252 = sadd.s32 %s251, 1
    %p255 = scmp.eq.s32.totalorder %s28, 1
    %p256 = scmp.ne.s32.totalorder %s251, %s253
    %p257 = scmp.eq.s32.totalorder %s28, 0
    %p258 = por %p256, %p257
    %p259 = scmp.ne.s32.totalorder %s251, %s253
    %p260 = scmp.eq.s32.totalorder %s33, 1
    %p261 = por %p259, %p260
    %p262 = scmp.ne.s32.totalorder %s253, %s254
    %p263 = scmp.eq.s32.totalorder %s33, 0
    %p264 = por %p262, %p263
    %p265 = scmp.ne.s32.totalorder %s253, %s254
    %p266 = scmp.eq.s32.totalorder %s34, 1
    %p267 = por %p265, %p266
    %p269 = scmp.ne.s32.totalorder %s254, %s268
    %p270 = scmp.eq.s32.totalorder %s34, 0
    %p271 = por %p269, %p270
    %s273 = sadd.s32 %s272, 1
    %p276 = scmp.eq.s32.totalorder %s28, 1
    %p277 = scmp.ne.s32.totalorder %s272, %s274
    %p278 = scmp.eq.s32.totalorder %s28, 0
    %p279 = por %p277, %p278
    %p280 = scmp.ne.s32.totalorder %s272, %s274
    %p281 = scmp.eq.s32.totalorder %s33, 1
    %p282 = por %p280, %p281
    %p283 = scmp.ne.s32.totalorder %s274, %s275
    %p284 = scmp.eq.s32.totalorder %s33, 0
    %p285 = por %p283, %p284
    %p286 = scmp.ne.s32.totalorder %s274, %s275
    %p287 = scmp.eq.s32.totalorder %s34, 1
    %p288 = por %p286, %p287
    %p290 = scmp.ne.s32.totalorder %s275, %s289
    %p291 = scmp.eq.s32.totalorder %s34, 0
    %p292 = por %p290, %p291
    %s294 = sadd.s32 %s293, 1
    %p297 = scmp.eq.s32.totalorder %s28, 1
    %p298 = scmp.ne.s32.totalorder %s293, %s295
    %p299 = scmp.eq.s32.totalorder %s28, 0
    %p300 = por %p298, %p299
    %p301 = scmp.ne.s32.totalorder %s293, %s295
    %p302 = scmp.eq.s32.totalorder %s33, 1
    %p303 = por %p301, %p302
    %p304 = scmp.ne.s32.totalorder %s295, %s296
    %p305 = scmp.eq.s32.totalorder %s33, 0
    %p306 = por %p304, %p305
    %p307 = scmp.ne.s32.totalorder %s295, %s296
    %p308 = scmp.eq.s32.totalorder %s34, 1
    %p309 = por %p307, %p308
    %p311 = scmp.ne.s32.totalorder %s296, %s310
    %p312 = scmp.eq.s32.totalorder %s34, 0
    %p313 = por %p311, %p312
    %s315 = sadd.s32 %s314, 1
    %p318 = scmp.eq.s32.totalorder %s28, 1
    %p319 = scmp.ne.s32.totalorder %s314, %s316
    %p320 = scmp.eq.s32.totalorder %s28, 0
    %p321 = por %p319, %p320
    %p322 = scmp.ne.s32.totalorder %s314, %s316
    %p323 = scmp.eq.s32.totalorder %s33, 1
    %p324 = por %p322, %p323
    %p325 = scmp.ne.s32.totalorder %s316, %s317
    %p326 = scmp.eq.s32.totalorder %s33, 0
    %p327 = por %p325, %p326
    %p328 = scmp.ne.s32.totalorder %s316, %s317
    %p329 = scmp.eq.s32.totalorder %s34, 1
    %p330 = por %p328, %p329
    %p332 = scmp.ne.s32.totalorder %s317, %s331
    %p333 = scmp.eq.s32.totalorder %s34, 0
    %p334 = por %p332, %p333
    %s336 = sadd.s32 %s335, 1
    %p339 = scmp.eq.s32.totalorder %s28, 1
    %p340 = scmp.ne.s32.totalorder %s335, %s337
    %p341 = scmp.eq.s32.totalorder %s28, 0
    %p342 = por %p340, %p341
    %p343 = scmp.ne.s32.totalorder %s335, %s337
    %p344 = scmp.eq.s32.totalorder %s33, 1
    %p345 = por %p343, %p344
    %p346 = scmp.ne.s32.totalorder %s337, %s338
    %p347 = scmp.eq.s32.totalorder %s33, 0
    %p348 = por %p346, %p347
    %p349 = scmp.ne.s32.totalorder %s337, %s338
    %p350 = scmp.eq.s32.totalorder %s34, 1
    %p351 = por %p349, %p350
    %p353 = scmp.ne.s32.totalorder %s338, %s352
    %p354 = scmp.eq.s32.totalorder %s34, 0
    %p355 = por %p353, %p354
    %s357 = sadd.s32 %s356, 1
    %p360 = scmp.eq.s32.totalorder %s28, 1
    %p361 = scmp.ne.s32.totalorder %s356, %s358
    %p362 = scmp.eq.s32.totalorder %s28, 0
    %p363 = por %p361, %p362
    %p364 = scmp.ne.s32.totalorder %s356, %s358
    %p365 = scmp.eq.s32.totalorder %s33, 1
    %p366 = por %p364, %p365
    %p367 = scmp.ne.s32.totalorder %s358, %s359
    %p368 = scmp.eq.s32.totalorder %s33, 0
    %p369 = por %p367, %p368
    %p370 = scmp.ne.s32.totalorder %s358, %s359
    %p371 = scmp.eq.s32.totalorder %s34, 1
    %p372 = por %p370, %p371
    %p374 = scmp.ne.s32.totalorder %s359, %s373
    %p375 = scmp.eq.s32.totalorder %s34, 0
    %p376 = por %p374, %p375
    %s378 = sadd.s32 %s377, 1
    %p381 = scmp.eq.s32.totalorder %s28, 1
    %p382 = scmp.ne.s32.totalorder %s377, %s379
    %p383 = scmp.eq.s32.totalorder %s28, 0
    %p384 = por %p382, %p383
    %p385 = scmp.ne.s32.totalorder %s377, %s379
    %p386 = scmp.eq.s32.totalorder %s33, 1
    %p387 = por %p385, %p386
    %p388 = scmp.ne.s32.totalorder %s379, %s380
    %p389 = scmp.eq.s32.totalorder %s33, 0
    %p390 = por %p388, %p389
    %p391 = scmp.ne.s32.totalorder %s379, %s380
    %p392 = scmp.eq.s32.totalorder %s34, 1
    %p393 = por %p391, %p392
    %p395 = scmp.ne.s32.totalorder %s380, %s394
    %p396 = scmp.eq.s32.totalorder %s34, 0
    %p397 = por %p395, %p396
    %s399 = sadd.s32 %s398, 1
    %p402 = scmp.eq.s32.totalorder %s28, 1
    %p403 = scmp.ne.s32.totalorder %s398, %s400
    %p404 = scmp.eq.s32.totalorder %s28, 0
    %p405 = por %p403, %p404
    %p406 = scmp.ne.s32.totalorder %s398, %s400
    %p407 = scmp.eq.s32.totalorder %s33, 1
    %p408 = por %p406, %p407
    %p409 = scmp.ne.s32.totalorder %s400, %s401
    %p410 = scmp.eq.s32.totalorder %s33, 0
    %p411 = por %p409, %p410
    %p412 = scmp.ne.s32.totalorder %s400, %s401
    %p413 = scmp.eq.s32.totalorder %s34, 1
    %p414 = por %p412, %p413
    %p416 = scmp.ne.s32.totalorder %s401, %s415
    %p417 = scmp.eq.s32.totalorder %s34, 0
    %p418 = por %p416, %p417
    %s420 = sadd.s32 %s419, 1
    %p423 = scmp.eq.s32.totalorder %s28, 1
    %p424 = scmp.ne.s32.totalorder %s419, %s421
    %p425 = scmp.eq.s32.totalorder %s28, 0
    %p426 = por %p424, %p425
    %p427 = scmp.ne.s32.totalorder %s419, %s421
    %p428 = scmp.eq.s32.totalorder %s33, 1
    %p429 = por %p427, %p428
    %p430 = scmp.ne.s32.totalorder %s421, %s422
    %p431 = scmp.eq.s32.totalorder %s33, 0
    %p432 = por %p430, %p431
    %p433 = scmp.ne.s32.totalorder %s421, %s422
    %p434 = scmp.eq.s32.totalorder %s34, 1
    %p435 = por %p433, %p434
    %p437 = scmp.ne.s32.totalorder %s422, %s436
    %p438 = scmp.eq.s32.totalorder %s34, 0
    %p439 = por %p437, %p438
    %s441 = sadd.s32 %s440, 1
    %p444 = scmp.eq.s32.totalorder %s28, 1
    %p445 = scmp.ne.s32.totalorder %s440, %s442
    %p446 = scmp.eq.s32.totalorder %s28, 0
    %p447 = por %p445, %p446
    %p448 = scmp.ne.s32.totalorder %s440, %s442
    %p449 = scmp.eq.s32.totalorder %s33, 1
    %p450 = por %p448, %p449
    %p451 = scmp.ne.s32.totalorder %s442, %s443
    %p452 = scmp.eq.s32.totalorder %s33, 0
    %p453 = por %p451, %p452
    %p454 = scmp.ne.s32.totalorder %s442, %s443
    %p455 = scmp.eq.s32.totalorder %s34, 1
    %p456 = por %p454, %p455
    %p458 = scmp.ne.s32.totalorder %s443, %s457
    %p459 = scmp.eq.s32.totalorder %s34, 0
    %p460 = por %p458, %p459
    %s462 = sadd.s32 %s461, 1
    %p465 = scmp.eq.s32.totalorder %s28, 1
    %p466 = scmp.ne.s32.totalorder %s461, %s463
    %p467 = scmp.eq.s32.totalorder %s28, 0
    %p468 = por %p466, %p467
    %p469 = scmp.ne.s32.totalorder %s461, %s463
    %p470 = scmp.eq.s32.totalorder %s33, 1
    %p471 = por %p469, %p470
    %p472 = scmp.ne.s32.totalorder %s463, %s464
    %p473 = scmp.eq.s32.totalorder %s33, 0
    %p474 = por %p472, %p473
    %p475 = scmp.ne.s32.totalorder %s463, %s464
    %p476 = scmp.eq.s32.totalorder %s34, 1
    %p477 = por %p475, %p476
    %p479 = scmp.ne.s32.totalorder %s464, %s478
    %p480 = scmp.eq.s32.totalorder %s34, 0
    %p481 = por %p479, %p480
    %s483 = sadd.s32 %s482, 1
    %p486 = scmp.eq.s32.totalorder %s28, 1
    %p487 = scmp.ne.s32.totalorder %s482, %s484
    %p488 = scmp.eq.s32.totalorder %s28, 0
    %p489 = por %p487, %p488
    %p490 = scmp.ne.s32.totalorder %s482, %s484
    %p491 = scmp.eq.s32.totalorder %s33, 1
    %p492 = por %p490, %p491
    %p493 = scmp.ne.s32.totalorder %s484, %s485
    %p494 = scmp.eq.s32.totalorder %s33, 0
    %p495 = por %p493, %p494
    %p496 = scmp.ne.s32.totalorder %s484, %s485
    %p497 = scmp.eq.s32.totalorder %s34, 1
    %p498 = por %p496, %p497
    %p500 = scmp.ne.s32.totalorder %s485, %s499
    %p501 = scmp.eq.s32.totalorder %s34, 0
    %p502 = por %p500, %p501
    %s503 = ssub.s32 %s28, %s35
    %p504 = scmp.eq.s32.totalorder %s503, 0
    %s506 = sadd.s32 %s505, 1
    %s507 = scalar_select %p504, %s505, %s506
    %p510 = pneg %p504
    %p511 = scmp.eq.s32.totalorder %s28, 1
    %p512 = por %p510, %p511
    %p513 = scmp.ne.s32.totalorder %s505, %s508
    %p514 = scmp.eq.s32.totalorder %s28, 0
    %p515 = por %p513, %p514
    %p516 = scmp.ne.s32.totalorder %s505, %s508
    %p517 = scmp.eq.s32.totalorder %s33, 1
    %p518 = por %p516, %p517
    %p519 = scmp.ne.s32.totalorder %s508, %s509
    %p520 = scmp.eq.s32.totalorder %s33, 0
    %p521 = por %p519, %p520
    %p522 = scmp.ne.s32.totalorder %s508, %s509
    %p523 = scmp.eq.s32.totalorder %s34, 1
    %p524 = por %p522, %p523
    %p526 = scmp.ne.s32.totalorder %s509, %s525
    %p527 = scmp.eq.s32.totalorder %s34, 0
    %p528 = por %p526, %p527
    %p529 = scmp.le.s32.totalorder 1, %s28
    %p530 = scmp.lt.s32.totalorder %s28, 3
    %p531 = pnand %p529, %p530
    %p532 = pneg %p531
    // Predicated region
    $region9: #{tpu_custom_call.1} parent=5 // pred_check
      _
    $region10: #{tpu_custom_call.1} parent=5 // pred_check_branch
      %534 = sbr.rel (%p531) target = $region12
    $region11: #{tpu_custom_call.1} parent=5 // pred_region
      %s535 = ssub.s32 %s28, 1
      // Predicated region
      $region13: #{tpu_custom_call.1} parent=11 // pred_check
        %p536 = pneg %p75
      $region14: #{tpu_custom_call.1} parent=11 // pred_check_branch
        %538 = sbr.rel (%p536) target = $region16
      $region15: #{tpu_custom_call.1} parent=11 // pred_region
        _
      $region16: #{tpu_custom_call.1} parent=11 // pred_fallthru
        _
      // Predicated region
      $region17: #{tpu_custom_call.1} parent=11 // pred_check
        %p539 = pneg %p96
      $region18: #{tpu_custom_call.1} parent=11 // pred_check_branch
        %541 = sbr.rel (%p539) target = $region20
      $region19: #{tpu_custom_call.1} parent=11 // pred_region
        _
      $region20: #{tpu_custom_call.1} parent=11 // pred_fallthru
        _
      // Predicated region
      $region21: #{tpu_custom_call.1} parent=11 // pred_check
        %p542 = pneg %p117
      $region22: #{tpu_custom_call.1} parent=11 // pred_check_branch
        %544 = sbr.rel (%p542) target = $region24
      $region23: #{tpu_custom_call.1} parent=11 // pred_region
        _
      $region24: #{tpu_custom_call.1} parent=11 // pred_fallthru
        _
      // Predicated region
      $region25: #{tpu_custom_call.1} parent=11 // pred_check
        %p545 = pneg %p138
      $region26: #{tpu_custom_call.1} parent=11 // pred_check_branch
        %547 = sbr.rel (%p545) target = $region28
      $region27: #{tpu_custom_call.1} parent=11 // pred_region
        _
      $region28: #{tpu_custom_call.1} parent=11 // pred_fallthru
        _
      // Predicated region
      $region29: #{tpu_custom_call.1} parent=11 // pred_check
        %p548 = pneg %p159
      $region30: #{tpu_custom_call.1} parent=11 // pred_check_branch
        %550 = sbr.rel (%p548) target = $region32
      $region31: #{tpu_custom_call.1} parent=11 // pred_region
        _
      $region32: #{tpu_custom_call.1} parent=11 // pred_fallthru
        _
      // Predicated region
      $region33: #{tpu_custom_call.1} parent=11 // pred_check
        %p551 = pneg %p180
      $region34: #{tpu_custom_call.1} parent=11 // pred_check_branch
        %553 = sbr.rel (%p551) target = $region36
      $region35: #{tpu_custom_call.1} parent=11 // pred_region
        _
      $region36: #{tpu_custom_call.1} parent=11 // pred_fallthru
        _
      // Predicated region
      $region37: #{tpu_custom_call.1} parent=11 // pred_check
        %p554 = pneg %p201
      $region38: #{tpu_custom_call.1} parent=11 // pred_check_branch
        %556 = sbr.rel (%p554) target = $region40
      $region39: #{tpu_custom_call.1} parent=11 // pred_region
        _
      $region40: #{tpu_custom_call.1} parent=11 // pred_fallthru
        _
      // Predicated region
      $region41: #{tpu_custom_call.1} parent=11 // pred_check
        %p557 = pneg %p222
      $region42: #{tpu_custom_call.1} parent=11 // pred_check_branch
        %559 = sbr.rel (%p557) target = $region44
      $region43: #{tpu_custom_call.1} parent=11 // pred_region
        _
      $region44: #{tpu_custom_call.1} parent=11 // pred_fallthru
        _
      // Predicated region
      $region45: #{tpu_custom_call.1} parent=11 // pred_check
        %p560 = pneg %p243
      $region46: #{tpu_custom_call.1} parent=11 // pred_check_branch
        %562 = sbr.rel (%p560) target = $region48
      $region47: #{tpu_custom_call.1} parent=11 // pred_region
        _
      $region48: #{tpu_custom_call.1} parent=11 // pred_fallthru
        _
      // Predicated region
      $region49: #{tpu_custom_call.1} parent=11 // pred_check
        %p563 = pneg %p264
      $region50: #{tpu_custom_call.1} parent=11 // pred_check_branch
        %565 = sbr.rel (%p563) target = $region52
      $region51: #{tpu_custom_call.1} parent=11 // pred_region
        _
      $region52: #{tpu_custom_call.1} parent=11 // pred_fallthru
        _
      // Predicated region
      $region53: #{tpu_custom_call.1} parent=11 // pred_check
        %p566 = pneg %p285
      $region54: #{tpu_custom_call.1} parent=11 // pred_check_branch
        %568 = sbr.rel (%p566) target = $region56
      $region55: #{tpu_custom_call.1} parent=11 // pred_region
        _
      $region56: #{tpu_custom_call.1} parent=11 // pred_fallthru
        _
      // Predicated region
      $region57: #{tpu_custom_call.1} parent=11 // pred_check
        %p569 = pneg %p306
      $region58: #{tpu_custom_call.1} parent=11 // pred_check_branch
        %571 = sbr.rel (%p569) target = $region60
      $region59: #{tpu_custom_call.1} parent=11 // pred_region
        _
      $region60: #{tpu_custom_call.1} parent=11 // pred_fallthru
        _
      // Predicated region
      $region61: #{tpu_custom_call.1} parent=11 // pred_check
        %p572 = pneg %p327
      $region62: #{tpu_custom_call.1} parent=11 // pred_check_branch
        %574 = sbr.rel (%p572) target = $region64
      $region63: #{tpu_custom_call.1} parent=11 // pred_region
        _
      $region64: #{tpu_custom_call.1} parent=11 // pred_fallthru
        _
      // Predicated region
      $region65: #{tpu_custom_call.1} parent=11 // pred_check
        %p575 = pneg %p348
      $region66: #{tpu_custom_call.1} parent=11 // pred_check_branch
        %577 = sbr.rel (%p575) target = $region68
      $region67: #{tpu_custom_call.1} parent=11 // pred_region
        _
      $region68: #{tpu_custom_call.1} parent=11 // pred_fallthru
        _
      // Predicated region
      $region69: #{tpu_custom_call.1} parent=11 // pred_check
        %p578 = pneg %p369
      $region70: #{tpu_custom_call.1} parent=11 // pred_check_branch
        %580 = sbr.rel (%p578) target = $region72
      $region71: #{tpu_custom_call.1} parent=11 // pred_region
        _
      $region72: #{tpu_custom_call.1} parent=11 // pred_fallthru
        _
      // Predicated region
      $region73: #{tpu_custom_call.1} parent=11 // pred_check
        %p581 = pneg %p390
      $region74: #{tpu_custom_call.1} parent=11 // pred_check_branch
        %583 = sbr.rel (%p581) target = $region76
      $region75: #{tpu_custom_call.1} parent=11 // pred_region
        _
      $region76: #{tpu_custom_call.1} parent=11 // pred_fallthru
        _
      // Predicated region
      $region77: #{tpu_custom_call.1} parent=11 // pred_check
        %p584 = pneg %p411
      $region78: #{tpu_custom_call.1} parent=11 // pred_check_branch
        %586 = sbr.rel (%p584) target = $region80
      $region79: #{tpu_custom_call.1} parent=11 // pred_region
        _
      $region80: #{tpu_custom_call.1} parent=11 // pred_fallthru
        _
      // Predicated region
      $region81: #{tpu_custom_call.1} parent=11 // pred_check
        %p587 = pneg %p432
      $region82: #{tpu_custom_call.1} parent=11 // pred_check_branch
        %589 = sbr.rel (%p587) target = $region84
      $region83: #{tpu_custom_call.1} parent=11 // pred_region
        _
      $region84: #{tpu_custom_call.1} parent=11 // pred_fallthru
        _
      // Predicated region
      $region85: #{tpu_custom_call.1} parent=11 // pred_check
        %p590 = pneg %p453
      $region86: #{tpu_custom_call.1} parent=11 // pred_check_branch
        %592 = sbr.rel (%p590) target = $region88
      $region87: #{tpu_custom_call.1} parent=11 // pred_region
        _
      $region88: #{tpu_custom_call.1} parent=11 // pred_fallthru
        _
      // Predicated region
      $region89: #{tpu_custom_call.1} parent=11 // pred_check
        %p593 = pneg %p474
      $region90: #{tpu_custom_call.1} parent=11 // pred_check_branch
        %595 = sbr.rel (%p593) target = $region92
      $region91: #{tpu_custom_call.1} parent=11 // pred_region
        _
      $region92: #{tpu_custom_call.1} parent=11 // pred_fallthru
        _
      // Predicated region
      $region93: #{tpu_custom_call.1} parent=11 // pred_check
        %p596 = pneg %p495
      $region94: #{tpu_custom_call.1} parent=11 // pred_check_branch
        %598 = sbr.rel (%p596) target = $region96
      $region95: #{tpu_custom_call.1} parent=11 // pred_region
        _
      $region96: #{tpu_custom_call.1} parent=11 // pred_fallthru
        _
    $region12: #{tpu_custom_call.1} parent=5 // pred_fallthru
      _
    %p599 = scmp.lt.s32.totalorder %s28, 2
    // Predicated region
    $region97: #{tpu_custom_call.1} parent=5 // pred_check
      %p600 = pneg %p599
    $region98: #{tpu_custom_call.1} parent=5 // pred_check_branch
      %602 = sbr.rel (%p600) target = $region100
    $region99: #{tpu_custom_call.1} parent=5 // pred_region
      // Predicated region
      $region101: #{tpu_custom_call.1} parent=99 // pred_check
        %p603 = pneg %p48
      $region102: #{tpu_custom_call.1} parent=99 // pred_check_branch
        %605 = sbr.rel (%p603) target = $region104
      $region103: #{tpu_custom_call.1} parent=99 // pred_region
        %s606 = smul.u32 4, %s28
        %p607 = scmp.lt.s32.totalorder %s606, 7
        %s608 = scalar_select %p607, %s606, 7
        %s609 = smul.addr %s608, 8
        %s610 = scalar_lea.vmem %s0, %s609
        %s611 = smul.u32 4, %s28
      $region104: #{tpu_custom_call.1} parent=99 // pred_fallthru
        _
    $region100: #{tpu_custom_call.1} parent=5 // pred_fallthru
      _
    %p612 = scmp.le.s32.totalorder 1, %s28
    %p613 = scmp.lt.s32.totalorder %s28, 3
    %p614 = pnand %p612, %p613
    %p615 = pneg %p614
    // Predicated region
    $region105: #{tpu_custom_call.1} parent=5 // pred_check
      _
    $region106: #{tpu_custom_call.1} parent=5 // pred_check_branch
      %617 = sbr.rel (%p614) target = $region108
    $region107: #{tpu_custom_call.1} parent=5 // pred_region
      %s618 = ssub.s32 %s28, 1
      %s619 = smul.u32 4, %s33
      %p620 = scmp.lt.s32.totalorder %s619, 7
      %s621 = scalar_select %p620, %s619, 7
      %s622 = smul.addr %s621, 8
      %s623 = scalar_lea.vmem %s0, %s622
      %p624 = pneg %p54
      %p625 = pneg %p51
      %p626 = pneg %p75
      %p627 = pneg %p72
      %p628 = pneg %p96
      %p629 = pneg %p93
      %p630 = pneg %p117
      %p631 = pneg %p114
      %p632 = pneg %p138
      %p633 = pneg %p135
      %p634 = pneg %p159
      %p635 = pneg %p156
      %p636 = pneg %p180
      %p637 = pneg %p177
      %p638 = pneg %p201
      %p639 = pneg %p198
      %p640 = pneg %p222
      %p641 = pneg %p219
      %p642 = pneg %p243
      %p643 = pneg %p240
      %p644 = pneg %p264
      %p645 = pneg %p261
      %p646 = pneg %p285
      %p647 = pneg %p282
      %p648 = pneg %p306
      %p649 = pneg %p303
      %p650 = pneg %p327
      %p651 = pneg %p324
      %p652 = pneg %p348
      %p653 = pneg %p345
      %p654 = pneg %p369
      %p655 = pneg %p366
      %p656 = pneg %p390
      %p657 = pneg %p387
      %p658 = pneg %p411
      %p659 = pneg %p408
      %p660 = pneg %p432
      %p661 = pneg %p429
      %p662 = pneg %p453
      %p663 = pneg %p450
      %p664 = pneg %p474
      %p665 = pneg %p471
      %p666 = pneg %p495
      %p667 = pneg %p492
      %p668 = pneg %p521
      %p669 = pneg %p518
      %s670 = smul.u32 4, %s33
      %p671 = scmp.lt.s32.totalorder %s670, 7
      %s672 = scalar_select %p671, %s670, 7
      %s673 = smul.addr %s672, 8
      %s674 = scalar_lea.vmem %s22, %s673
      %s675 = smul.u32 4, %s33
      %p676 = scmp.lt.s32.totalorder %s675, 7
      %s677 = scalar_select %p676, %s675, 7
      %s678 = smul.addr %s677, 8
      %s679 = scalar_lea.vmem %s0, %s678
      %s680 = smul.u32 4, %s33
      %s681 = smul.u32 4, %s33
      %p682 = scmp.lt.s32.totalorder %s681, 7
      %s683 = scalar_select %p682, %s681, 7
      %s684 = smul.addr %s683, 8
      %s685 = scalar_lea.vmem %s22, %s684
      %s686 = smul.u32 4, %s33
      %v688 = vld [vmem:[%s679] sm:$0xff]
      %v689 = vld [vmem:[%s679 + $0x8] sm:$0xff]
      %v690 = vld [vmem:[%s679 + $0x10] sm:$0xff]
      %v691 = vld [vmem:[%s679 + $0x18] sm:$0xff]
      %v692 = vpack.c.bf16 %v689, %v688
      %v693 = vpack.c.bf16 %v691, %v690
      %v694 = vld [vmem:[%s4] sm:$0xf]
      %v695 = vld [vmem:[%s4 + $0x4] sm:$0xf]
      %v696 = vld [vmem:[%s4 + $0x8] sm:$0xf]
      %v697 = vld [vmem:[%s4 + $0xc] sm:$0xf]
      %v698 = vld [vmem:[%s5] sm:$0x1]
      %v700 = vlaneseq
      %v701 = vshrl.u32 %v700, 7
      %v702 = vsub.s32 0, %v701
      %v703 = vrot.slane %v698, %v702
      %v709 = vunpack.c.l.b16 %v694
      %v710 = vunpack.c.l.b16 %v695
      %v711 = vunpack.c.l.b16 %v696
      %v712 = vunpack.c.l.b16 %v697
      %v713 = vpack.c.b16 %v710, %v709
      %v714 = vpack.c.b16 %v712, %v711
      %vm717 = vcmask 261120
      %v719 = vsel %vm717, %v692, 0
      %v722 = vsel %vm717, %v693, 0
      %724 = vmatprep.subr.bf16.mxu0 0
      %725 = vmatpush1.bf16.msra.mxu0 %v713
      %726 = vmatprep.subr.bf16.mxu0 0
      %727 = vmatpush1.bf16.msra.mxu0 %v714
      %728 = vmatprep.subr.bf16.mxu0 0
      %729 = vmatpush1.bf16.msra.mxu0 0
      %730 = vmatprep.subr.bf16.mxu0 0
      %731 = vmatpush1.bf16.msra.mxu0 0
      %732 = vmatprep.subr.bf16.mxu0 0
      %733 = vmatpush1.bf16.msra.mxu0 0
      %734 = vmatprep.subr.bf16.mxu0 0
      %735 = vmatpush1.bf16.msra.mxu0 0
      %736 = vmatprep.subr.bf16.mxu0 0
      %737 = vmatpush1.bf16.msra.mxu0 0
      %738 = vmatprep.subr.bf16.mxu0 0
      %739 = vmatpush1.bf16.msra.mxu0 0
      %740 = vmatprep.subr.bf16.mxu0 0
      %741 = vmatpush1.bf16.msra.mxu0 0
      %742 = vmatprep.subr.bf16.mxu0 0
      %743 = vmatpush1.bf16.msra.mxu0 0
      %744 = vmatprep.subr.bf16.mxu0 0
      %745 = vmatpush1.bf16.msra.mxu0 0
      %746 = vmatprep.subr.bf16.mxu0 0
      %747 = vmatpush1.bf16.msra.mxu0 0
      %748 = vmatprep.subr.bf16.mxu0 0
      %749 = vmatpush1.bf16.msra.mxu0 0
      %750 = vmatprep.subr.bf16.mxu0 0
      %751 = vmatpush1.bf16.msra.mxu0 0
      %752 = vmatprep.subr.bf16.mxu0 0
      %753 = vmatpush1.bf16.msra.mxu0 0
      %754 = vmatprep.subr.bf16.mxu0 0
      %755 = vmatpush1.bf16.msra.mxu0 0
      %756 = vmatprep.mubr.bf16.mxu0 0
      %757 = vmatmul.mubr.bf16.gmra.mrb[0].mxu0 %v719
      %v758 = vpop.f32.mrb[0].mxu0
      %v759 = vadd.f32 %v703, %v758
      %v760 = vpop.f32.mrb[0].mxu0
      %v761 = vpop.f32.mrb[0].mxu0
      %v762 = vadd.f32 %v703, %v761
      %v763 = vpop.f32.mrb[0].mxu0
      %764 = vmatprep.mubr.bf16.mxu0 0
      %765 = vmatmul.mubr.bf16.gmra.mrb[0].mxu0 %v722
      %v766 = vpop.f32.mrb[0].mxu0
      %v767 = vadd.f32 %v703, %v766
      %v768 = vpop.f32.mrb[0].mxu0
      %v769 = vpop.f32.mrb[0].mxu0
      %v770 = vadd.f32 %v703, %v769
      %v771 = vpop.f32.mrb[0].mxu0
      %772 = vdwg.mxu0
      %v773 = vld [vmem:[%s6] sm:$0xf]
      %v774 = vld [vmem:[%s6 + $0x4] sm:$0xf]
      %v775 = vld [vmem:[%s6 + $0x8] sm:$0xf]
      %v776 = vld [vmem:[%s6 + $0xc] sm:$0xf]
      %v777 = vld [vmem:[%s7] sm:$0x1]
      %v779 = vlaneseq
      %v780 = vshrl.u32 %v779, 7
      %v781 = vsub.s32 0, %v780
      %v782 = vrot.slane %v777, %v781
      %v788 = vunpack.c.l.b16 %v773
      %v789 = vunpack.c.l.b16 %v774
      %v790 = vunpack.c.l.b16 %v775
      %v791 = vunpack.c.l.b16 %v776
      %v792 = vpack.c.b16 %v789, %v788
      %v793 = vpack.c.b16 %v791, %v790
      %796 = vmatprep.subr.bf16.mxu0 0
      %797 = vmatpush1.bf16.msra.mxu0 %v792
      %798 = vmatprep.subr.bf16.mxu0 0
      %799 = vmatpush1.bf16.msra.mxu0 %v793
      %800 = vmatprep.subr.bf16.mxu0 0
      %801 = vmatpush1.bf16.msra.mxu0 0
      %802 = vmatprep.subr.bf16.mxu0 0
      %803 = vmatpush1.bf16.msra.mxu0 0
      %804 = vmatprep.subr.bf16.mxu0 0
      %805 = vmatpush1.bf16.msra.mxu0 0
      %806 = vmatprep.subr.bf16.mxu0 0
      %807 = vmatpush1.bf16.msra.mxu0 0
      %808 = vmatprep.subr.bf16.mxu0 0
      %809 = vmatpush1.bf16.msra.mxu0 0
      %810 = vmatprep.subr.bf16.mxu0 0
      %811 = vmatpush1.bf16.msra.mxu0 0
      %812 = vmatprep.subr.bf16.mxu0 0
      %813 = vmatpush1.bf16.msra.mxu0 0
      %814 = vmatprep.subr.bf16.mxu0 0
      %815 = vmatpush1.bf16.msra.mxu0 0
      %816 = vmatprep.subr.bf16.mxu0 0
      %817 = vmatpush1.bf16.msra.mxu0 0
      %818 = vmatprep.subr.bf16.mxu0 0
      %819 = vmatpush1.bf16.msra.mxu0 0
      %820 = vmatprep.subr.bf16.mxu0 0
      %821 = vmatpush1.bf16.msra.mxu0 0
      %822 = vmatprep.subr.bf16.mxu0 0
      %823 = vmatpush1.bf16.msra.mxu0 0
      %824 = vmatprep.subr.bf16.mxu0 0
      %825 = vmatpush1.bf16.msra.mxu0 0
      %826 = vmatprep.subr.bf16.mxu0 0
      %827 = vmatpush1.bf16.msra.mxu0 0
      %828 = vmatprep.mubr.bf16.mxu0 0
      %829 = vmatmul.mubr.bf16.gmra.mrb[0].mxu0 %v719
      %v830 = vpop.f32.mrb[0].mxu0
      %v831 = vadd.f32 %v782, %v830
      %v832 = vpop.f32.mrb[0].mxu0
      %v833 = vpop.f32.mrb[0].mxu0
      %v834 = vadd.f32 %v782, %v833
      %v835 = vpop.f32.mrb[0].mxu0
      %836 = vmatprep.mubr.bf16.mxu0 0
      %837 = vmatmul.mubr.bf16.gmra.mrb[0].mxu0 %v722
      %v838 = vpop.f32.mrb[0].mxu0
      %v839 = vadd.f32 %v782, %v838
      %v840 = vpop.f32.mrb[0].mxu0
      %v841 = vpop.f32.mrb[0].mxu0
      %v842 = vadd.f32 %v782, %v841
      %v843 = vpop.f32.mrb[0].mxu0
      %844 = vdwg.mxu0
      %v845 = vld [vmem:[%s8] sm:$0xf]
      %v846 = vld [vmem:[%s8 + $0x4] sm:$0xf]
      %v847 = vld [vmem:[%s8 + $0x8] sm:$0xf]
      %v848 = vld [vmem:[%s8 + $0xc] sm:$0xf]
      %v849 = vld [vmem:[%s9] sm:$0x1]
      %v851 = vlaneseq
      %v852 = vshrl.u32 %v851, 7
      %v853 = vsub.s32 0, %v852
      %v854 = vrot.slane %v849, %v853
      %v860 = vunpack.c.l.b16 %v845
      %v861 = vunpack.c.l.b16 %v846
      %v862 = vunpack.c.l.b16 %v847
      %v863 = vunpack.c.l.b16 %v848
      %v864 = vpack.c.b16 %v861, %v860
      %v865 = vpack.c.b16 %v863, %v862
      %868 = vmatprep.subr.bf16.mxu0 0
      %869 = vmatpush1.bf16.msra.mxu0 %v864
      %870 = vmatprep.subr.bf16.mxu0 0
      %871 = vmatpush1.bf16.msra.mxu0 %v865
      %872 = vmatprep.subr.bf16.mxu0 0
      %873 = vmatpush1.bf16.msra.mxu0 0
      %874 = vmatprep.subr.bf16.mxu0 0
      %875 = vmatpush1.bf16.msra.mxu0 0
      %876 = vmatprep.subr.bf16.mxu0 0
      %877 = vmatpush1.bf16.msra.mxu0 0
      %878 = vmatprep.subr.bf16.mxu0 0
      %879 = vmatpush1.bf16.msra.mxu0 0
      %880 = vmatprep.subr.bf16.mxu0 0
      %881 = vmatpush1.bf16.msra.mxu0 0
      %882 = vmatprep.subr.bf16.mxu0 0
      %883 = vmatpush1.bf16.msra.mxu0 0
      %884 = vmatprep.subr.bf16.mxu0 0
      %885 = vmatpush1.bf16.msra.mxu0 0
      %886 = vmatprep.subr.bf16.mxu0 0
      %887 = vmatpush1.bf16.msra.mxu0 0
      %888 = vmatprep.subr.bf16.mxu0 0
      %889 = vmatpush1.bf16.msra.mxu0 0
      %890 = vmatprep.subr.bf16.mxu0 0
      %891 = vmatpush1.bf16.msra.mxu0 0
      %892 = vmatprep.subr.bf16.mxu0 0
      %893 = vmatpush1.bf16.msra.mxu0 0
      %894 = vmatprep.subr.bf16.mxu0 0
      %895 = vmatpush1.bf16.msra.mxu0 0
      %896 = vmatprep.subr.bf16.mxu0 0
      %897 = vmatpush1.bf16.msra.mxu0 0
      %898 = vmatprep.subr.bf16.mxu0 0
      %899 = vmatpush1.bf16.msra.mxu0 0
      %900 = vmatprep.mubr.bf16.mxu0 0
      %901 = vmatmul.mubr.bf16.gmra.mrb[0].mxu0 %v719
      %v902 = vpop.f32.mrb[0].mxu0
      %v903 = vadd.f32 %v854, %v902
      %v904 = vpop.f32.mrb[0].mxu0
      %v905 = vpop.f32.mrb[0].mxu0
      %v906 = vadd.f32 %v854, %v905
      %v907 = vpop.f32.mrb[0].mxu0
      %908 = vmatprep.mubr.bf16.mxu0 0
      %909 = vmatmul.mubr.bf16.gmra.mrb[0].mxu0 %v722
      %v910 = vpop.f32.mrb[0].mxu0
      %v911 = vadd.f32 %v854, %v910
      %v912 = vpop.f32.mrb[0].mxu0
      %v913 = vpop.f32.mrb[0].mxu0
      %v914 = vadd.f32 %v854, %v913
      %v915 = vpop.f32.mrb[0].mxu0
      %916 = vdwg.mxu0
      %v917 = vpack.c.bf16 %v762, %v759
      %v918 = vpack.c.bf16 %v770, %v767
      %v919 = vpack.c.bf16 %v834, %v831
      %v920 = vpack.c.bf16 %v842, %v839
      %v921 = vpack.c.bf16 %v906, %v903
      %v922 = vpack.c.bf16 %v914, %v911
      %v925 = vunpack.c.l.b16 %v917
      %v926 = vunpack.c.h.b16 %v917
      %v927 = vunpack.c.l.b16 %v918
      %v928 = vunpack.c.h.b16 %v918
      %v929 = vpack.c.b16 %v925, %v925
      %v930 = vpack.c.b16 %v926, %v926
      %v931 = vpack.c.b16 %v927, %v927
      %v932 = vpack.c.b16 %v928, %v928
      %v935 = vunpack.c.l.b16 %v919
      %v936 = vunpack.c.h.b16 %v919
      %v937 = vunpack.c.l.b16 %v920
      %v938 = vunpack.c.h.b16 %v920
      %v939 = vpack.c.b16 %v935, %v935
      %v940 = vpack.c.b16 %v936, %v936
      %v941 = vpack.c.b16 %v937, %v937
      %v942 = vpack.c.b16 %v938, %v938
      %v945 = vunpack.c.l.b16 %v921
      %v946 = vunpack.c.h.b16 %v921
      %v947 = vunpack.c.l.b16 %v922
      %v948 = vunpack.c.h.b16 %v922
      %v949 = vpack.c.b16 %v945, %v945
      %v950 = vpack.c.b16 %v946, %v946
      %v951 = vpack.c.b16 %v947, %v947
      %v952 = vpack.c.b16 %v948, %v948
      %vm953 = vcmask 64512
      %v955 = vsel %vm953, %v929, 0
      %v958 = vsel %vm953, %v939, 0
      %960 = vmatprep.subr.bf16.mxu0 0
      %961 = vmatpush1.bf16.xpose.msra.mxu0 %v958
      %962 = vmatprep.subr.bf16.mxu0 0
      %963 = vmatpush1.bf16.xpose.msra.mxu0 0
      %964 = vmatprep.subr.bf16.mxu0 0
      %965 = vmatpush1.bf16.xpose.msra.mxu0 0
      %966 = vmatprep.subr.bf16.mxu0 0
      %967 = vmatpush1.bf16.xpose.msra.mxu0 0
      %968 = vmatprep.subr.bf16.mxu0 0
      %969 = vmatpush1.bf16.xpose.msra.mxu0 0
      %970 = vmatprep.subr.bf16.mxu0 0
      %971 = vmatpush1.bf16.xpose.msra.mxu0 0
      %972 = vmatprep.subr.bf16.mxu0 0
      %973 = vmatpush1.bf16.xpose.msra.mxu0 0
      %974 = vmatprep.subr.bf16.mxu0 0
      %975 = vmatpush1.bf16.xpose.msra.mxu0 0
      %976 = vmatprep.subr.bf16.mxu0 0
      %977 = vmatpush1.bf16.xpose.msra.mxu0 0
      %978 = vmatprep.subr.bf16.mxu0 0
      %979 = vmatpush1.bf16.xpose.msra.mxu0 0
      %980 = vmatprep.subr.bf16.mxu0 0
      %981 = vmatpush1.bf16.xpose.msra.mxu0 0
      %982 = vmatprep.subr.bf16.mxu0 0
      %983 = vmatpush1.bf16.xpose.msra.mxu0 0
      %984 = vmatprep.subr.bf16.mxu0 0
      %985 = vmatpush1.bf16.xpose.msra.mxu0 0
      %986 = vmatprep.subr.bf16.mxu0 0
      %987 = vmatpush1.bf16.xpose.msra.mxu0 0
      %988 = vmatprep.subr.bf16.mxu0 0
      %989 = vmatpush1.bf16.xpose.msra.mxu0 0
      %990 = vmatprep.subr.bf16.mxu0 0
      %991 = vmatpush1.bf16.xpose.msra.mxu0 0
      %992 = vmatprep.mubr.bf16.mxu0 0
      %993 = vmatmul.mubr.bf16.gmra.mrb[0].mxu0 %v955
      %v994 = vpop.f32.mrb[0].mxu0
      %v995 = vadd.f32 0.0, %v994
      %v996 = vpop.f32.mrb[0].mxu0
      %v997 = vpop.f32.mrb[0].mxu0
      %v998 = vpop.f32.mrb[0].mxu0
      %999 = vdwg.mxu0
      %v1001 = vsel %vm953, %v930, 0
      %v1004 = vsel %vm953, %v940, 0
      %1006 = vmatprep.subr.bf16.mxu0 0
      %1007 = vmatpush1.bf16.xpose.msra.mxu0 %v1004
      %1008 = vmatprep.subr.bf16.mxu0 0
      %1009 = vmatpush1.bf16.xpose.msra.mxu0 0
      %1010 = vmatprep.subr.bf16.mxu0 0
      %1011 = vmatpush1.bf16.xpose.msra.mxu0 0
      %1012 = vmatprep.subr.bf16.mxu0 0
      %1013 = vmatpush1.bf16.xpose.msra.mxu0 0
      %1014 = vmatprep.subr.bf16.mxu0 0
      %1015 = vmatpush1.bf16.xpose.msra.mxu0 0
      %1016 = vmatprep.subr.bf16.mxu0 0
      %1017 = vmatpush1.bf16.xpose.msra.mxu0 0
      %1018 = vmatprep.subr.bf16.mxu0 0
      %1019 = vmatpush1.bf16.xpose.msra.mxu0 0
      %1020 = vmatprep.subr.bf16.mxu0 0
      %1021 = vmatpush1.bf16.xpose.msra.mxu0 0
      %1022 = vmatprep.subr.bf16.mxu0 0
      %1023 = vmatpush1.bf16.xpose.msra.mxu0 0
      %1024 = vmatprep.subr.bf16.mxu0 0
      %1025 = vmatpush1.bf16.xpose.msra.mxu0 0
      %1026 = vmatprep.subr.bf16.mxu0 0
      %1027 = vmatpush1.bf16.xpose.msra.mxu0 0
      %1028 = vmatprep.subr.bf16.mxu0 0
      %1029 = vmatpush1.bf16.xpose.msra.mxu0 0
      %1030 = vmatprep.subr.bf16.mxu0 0
      %1031 = vmatpush1.bf16.xpose.msra.mxu0 0
      %1032 = vmatprep.subr.bf16.mxu0 0
      %1033 = vmatpush1.bf16.xpose.msra.mxu0 0
      %1034 = vmatprep.subr.bf16.mxu0 0
      %1035 = vmatpush1.bf16.xpose.msra.mxu0 0
      %1036 = vmatprep.subr.bf16.mxu0 0
      %1037 = vmatpush1.bf16.xpose.msra.mxu0 0
      %1038 = vmatprep.mubr.bf16.mxu0 0
      %1039 = vmatmul.mubr.bf16.gmra.mrb[0].mxu0 %v1001
      %v1040 = vpop.f32.mrb[0].mxu0
      %v1041 = vadd.f32 0.0, %v1040
      %v1042 = vpop.f32.mrb[0].mxu0
      %v1043 = vpop.f32.mrb[0].mxu0
      %v1044 = vpop.f32.mrb[0].mxu0
      %1045 = vdwg.mxu0
      %v1047 = vsel %vm953, %v931, 0
      %v1050 = vsel %vm953, %v941, 0
      %1052 = vmatprep.subr.bf16.mxu0 0
      %1053 = vmatpush1.bf16.xpose.msra.mxu0 %v1050
      %1054 = vmatprep.subr.bf16.mxu0 0
      %1055 = vmatpush1.bf16.xpose.msra.mxu0 0
      %1056 = vmatprep.subr.bf16.mxu0 0
      %1057 = vmatpush1.bf16.xpose.msra.mxu0 0
      %1058 = vmatprep.subr.bf16.mxu0 0
      %1059 = vmatpush1.bf16.xpose.msra.mxu0 0
      %1060 = vmatprep.subr.bf16.mxu0 0
      %1061 = vmatpush1.bf16.xpose.msra.mxu0 0
      %1062 = vmatprep.subr.bf16.mxu0 0
      %1063 = vmatpush1.bf16.xpose.msra.mxu0 0
      %1064 = vmatprep.subr.bf16.mxu0 0
      %1065 = vmatpush1.bf16.xpose.msra.mxu0 0
      %1066 = vmatprep.subr.bf16.mxu0 0
      %1067 = vmatpush1.bf16.xpose.msra.mxu0 0
      %1068 = vmatprep.subr.bf16.mxu0 0
      %1069 = vmatpush1.bf16.xpose.msra.mxu0 0
      %1070 = vmatprep.subr.bf16.mxu0 0
      %1071 = vmatpush1.bf16.xpose.msra.mxu0 0
      %1072 = vmatprep.subr.bf16.mxu0 0
      %1073 = vmatpush1.bf16.xpose.msra.mxu0 0
      %1074 = vmatprep.subr.bf16.mxu0 0
      %1075 = vmatpush1.bf16.xpose.msra.mxu0 0
      %1076 = vmatprep.subr.bf16.mxu0 0
      %1077 = vmatpush1.bf16.xpose.msra.mxu0 0
      %1078 = vmatprep.subr.bf16.mxu0 0
      %1079 = vmatpush1.bf16.xpose.msra.mxu0 0
      %1080 = vmatprep.subr.bf16.mxu0 0
      %1081 = vmatpush1.bf16.xpose.msra.mxu0 0
      %1082 = vmatprep.subr.bf16.mxu0 0
      %1083 = vmatpush1.bf16.xpose.msra.mxu0 0
      %1084 = vmatprep.mubr.bf16.mxu0 0
      %1085 = vmatmul.mubr.bf16.gmra.mrb[0].mxu0 %v1047
      %v1086 = vpop.f32.mrb[0].mxu0
      %v1087 = vadd.f32 0.0, %v1086
      %v1088 = vpop.f32.mrb[0].mxu0
      %v1089 = vpop.f32.mrb[0].mxu0
      %v1090 = vpop.f32.mrb[0].mxu0
      %1091 = vdwg.mxu0
      %v1093 = vsel %vm953, %v932, 0
      %v1096 = vsel %vm953, %v942, 0
      %1098 = vmatprep.subr.bf16.mxu0 0
      %1099 = vmatpush1.bf16.xpose.msra.mxu0 %v1096
      %1100 = vmatprep.subr.bf16.mxu0 0
      %1101 = vmatpush1.bf16.xpose.msra.mxu0 0
      %1102 = vmatprep.subr.bf16.mxu0 0
      %1103 = vmatpush1.bf16.xpose.msra.mxu0 0
      %1104 = vmatprep.subr.bf16.mxu0 0
      %1105 = vmatpush1.bf16.xpose.msra.mxu0 0
      %1106 = vmatprep.subr.bf16.mxu0 0
      %1107 = vmatpush1.bf16.xpose.msra.mxu0 0
      %1108 = vmatprep.subr.bf16.mxu0 0
      %1109 = vmatpush1.bf16.xpose.msra.mxu0 0
      %1110 = vmatprep.subr.bf16.mxu0 0
      %1111 = vmatpush1.bf16.xpose.msra.mxu0 0
      %1112 = vmatprep.subr.bf16.mxu0 0
      %1113 = vmatpush1.bf16.xpose.msra.mxu0 0
      %1114 = vmatprep.subr.bf16.mxu0 0
      %1115 = vmatpush1.bf16.xpose.msra.mxu0 0
      %1116 = vmatprep.subr.bf16.mxu0 0
      %1117 = vmatpush1.bf16.xpose.msra.mxu0 0
      %1118 = vmatprep.subr.bf16.mxu0 0
      %1119 = vmatpush1.bf16.xpose.msra.mxu0 0
      %1120 = vmatprep.subr.bf16.mxu0 0
      %1121 = vmatpush1.bf16.xpose.msra.mxu0 0
      %1122 = vmatprep.subr.bf16.mxu0 0
      %1123 = vmatpush1.bf16.xpose.msra.mxu0 0
      %1124 = vmatprep.subr.bf16.mxu0 0
      %1125 = vmatpush1.bf16.xpose.msra.mxu0 0
      %1126 = vmatprep.subr.bf16.mxu0 0
      %1127 = vmatpush1.bf16.xpose.msra.mxu0 0
      %1128 = vmatprep.subr.bf16.mxu0 0
      %1129 = vmatpush1.bf16.xpose.msra.mxu0 0
      %1130 = vmatprep.mubr.bf16.mxu0 0
      %1131 = vmatmul.mubr.bf16.gmra.mrb[0].mxu0 %v1093
      %v1132 = vpop.f32.mrb[0].mxu0
      %v1133 = vadd.f32 0.0, %v1132
      %v1134 = vpop.f32.mrb[0].mxu0
      %v1135 = vpop.f32.mrb[0].mxu0
      %v1136 = vpop.f32.mrb[0].mxu0
      %1137 = vdwg.mxu0
      %v1138 = vmul.f32 %v995, 0.35355338
      %v1139 = vmul.f32 %v1041, 0.35355338
      %v1140 = vmul.f32 %v1087, 0.35355338
      %v1141 = vmul.f32 %v1133, 0.35355338
      %v1142 = vsel %vm953, %v1138, -inf
      %1143 = vmax.xlane.f32.xlu0 %v1142
      %v1144 = vpop.xlane.xlu0 %1143
      %v1145 = vsel %vm953, %v1139, -inf
      %1146 = vmax.xlane.f32.xlu0 %v1145
      %v1147 = vpop.xlane.xlu0 %1146
      %v1148 = vsel %vm953, %v1140, -inf
      %1149 = vmax.xlane.f32.xlu0 %v1148
      %v1150 = vpop.xlane.xlu0 %1149
      %v1151 = vsel %vm953, %v1141, -inf
      %1152 = vmax.xlane.f32.xlu0 %v1151
      %v1153 = vpop.xlane.xlu0 %1152
      %v1154 = vsub.f32 %v1138, %v1144
      %v1155 = vsub.f32 %v1139, %v1147
      %v1156 = vsub.f32 %v1140, %v1150
      %v1157 = vsub.f32 %v1141, %v1153
      %v1158 = vmul.f32 %v1154, 1.442695
      %v1159 = vpow.pop %v1158
      %v1160 = vmul.f32 %v1155, 1.442695
      %v1161 = vpow.pop %v1160
      %v1162 = vmul.f32 %v1156, 1.442695
      %v1163 = vpow.pop %v1162
      %v1164 = vmul.f32 %v1157, 1.442695
      %v1165 = vpow.pop %v1164
      %v1166 = vsel %vm953, %v1159, 0.0
      %1167 = vadd.xlane.f32.xlu0 %v1166
      %v1168 = vpop.xlane.xlu0 %1167
      %v1169 = vsel %vm953, %v1161, 0.0
      %1170 = vadd.xlane.f32.xlu0 %v1169
      %v1171 = vpop.xlane.xlu0 %1170
      %v1172 = vsel %vm953, %v1163, 0.0
      %1173 = vadd.xlane.f32.xlu0 %v1172
      %v1174 = vpop.xlane.xlu0 %1173
      %v1175 = vsel %vm953, %v1165, 0.0
      %1176 = vadd.xlane.f32.xlu0 %v1175
      %v1177 = vpop.xlane.xlu0 %1176
      %v1178 = vrcp.pop %v1168
      %v1179 = vrcp.pop %v1171
      %v1180 = vrcp.pop %v1174
      %v1181 = vrcp.pop %v1177
      %v1182 = vmul.f32 %v1159, %v1178
      %v1183 = vmul.f32 %v1161, %v1179
      %v1184 = vmul.f32 %v1163, %v1180
      %v1185 = vmul.f32 %v1165, %v1181
      %v1186 = vpack.c.bf16 %v1182, %v1182
      %v1187 = vpack.c.bf16 %v1183, %v1183
      %v1188 = vpack.c.bf16 %v1184, %v1184
      %v1189 = vpack.c.bf16 %v1185, %v1185
      %v1191 = vsel %vm953, %v1186, 0
      %vm1193 = vcmask 1043456
      %v1195 = vsel %vm1193, %v949, 0
      %1197 = vmatprep.subr.bf16.mxu0 0
      %1198 = vmatpush1.bf16.msra.mxu0 %v1195
      %1199 = vmatprep.subr.bf16.mxu0 0
      %1200 = vmatpush1.bf16.msra.mxu0 0
      %1201 = vmatprep.subr.bf16.mxu0 0
      %1202 = vmatpush1.bf16.msra.mxu0 0
      %1203 = vmatprep.subr.bf16.mxu0 0
      %1204 = vmatpush1.bf16.msra.mxu0 0
      %1205 = vmatprep.subr.bf16.mxu0 0
      %1206 = vmatpush1.bf16.msra.mxu0 0
      %1207 = vmatprep.subr.bf16.mxu0 0
      %1208 = vmatpush1.bf16.msra.mxu0 0
      %1209 = vmatprep.subr.bf16.mxu0 0
      %1210 = vmatpush1.bf16.msra.mxu0 0
      %1211 = vmatprep.subr.bf16.mxu0 0
      %1212 = vmatpush1.bf16.msra.mxu0 0
      %1213 = vmatprep.subr.bf16.mxu0 0
      %1214 = vmatpush1.bf16.msra.mxu0 0
      %1215 = vmatprep.subr.bf16.mxu0 0
      %1216 = vmatpush1.bf16.msra.mxu0 0
      %1217 = vmatprep.subr.bf16.mxu0 0
      %1218 = vmatpush1.bf16.msra.mxu0 0
      %1219 = vmatprep.subr.bf16.mxu0 0
      %1220 = vmatpush1.bf16.msra.mxu0 0
      %1221 = vmatprep.subr.bf16.mxu0 0
      %1222 = vmatpush1.bf16.msra.mxu0 0
      %1223 = vmatprep.subr.bf16.mxu0 0
      %1224 = vmatpush1.bf16.msra.mxu0 0
      %1225 = vmatprep.subr.bf16.mxu0 0
      %1226 = vmatpush1.bf16.msra.mxu0 0
      %1227 = vmatprep.subr.bf16.mxu0 0
      %1228 = vmatpush1.bf16.msra.mxu0 0
      %1229 = vmatprep.mubr.bf16.mxu0 0
      %1230 = vmatmul.mubr.bf16.gmra.mrb[0].mxu0 %v1191
      %v1231 = vpop.f32.mrb[0].mxu0
      %v1232 = vadd.f32 0.0, %v1231
      %v1233 = vpop.f32.mrb[0].mxu0
      %v1234 = vpop.f32.mrb[0].mxu0
      %v1235 = vpop.f32.mrb[0].mxu0
      %1236 = vdwg.mxu0
      %v1238 = vsel %vm953, %v1187, 0
      %v1241 = vsel %vm1193, %v950, 0
      %1243 = vmatprep.subr.bf16.mxu0 0
      %1244 = vmatpush1.bf16.msra.mxu0 %v1241
      %1245 = vmatprep.subr.bf16.mxu0 0
      %1246 = vmatpush1.bf16.msra.mxu0 0
      %1247 = vmatprep.subr.bf16.mxu0 0
      %1248 = vmatpush1.bf16.msra.mxu0 0
      %1249 = vmatprep.subr.bf16.mxu0 0
      %1250 = vmatpush1.bf16.msra.mxu0 0
      %1251 = vmatprep.subr.bf16.mxu0 0
      %1252 = vmatpush1.bf16.msra.mxu0 0
      %1253 = vmatprep.subr.bf16.mxu0 0
      %1254 = vmatpush1.bf16.msra.mxu0 0
      %1255 = vmatprep.subr.bf16.mxu0 0
      %1256 = vmatpush1.bf16.msra.mxu0 0
      %1257 = vmatprep.subr.bf16.mxu0 0
      %1258 = vmatpush1.bf16.msra.mxu0 0
      %1259 = vmatprep.subr.bf16.mxu0 0
      %1260 = vmatpush1.bf16.msra.mxu0 0
      %1261 = vmatprep.subr.bf16.mxu0 0
      %1262 = vmatpush1.bf16.msra.mxu0 0
      %1263 = vmatprep.subr.bf16.mxu0 0
      %1264 = vmatpush1.bf16.msra.mxu0 0
      %1265 = vmatprep.subr.bf16.mxu0 0
      %1266 = vmatpush1.bf16.msra.mxu0 0
      %1267 = vmatprep.subr.bf16.mxu0 0
      %1268 = vmatpush1.bf16.msra.mxu0 0
      %1269 = vmatprep.subr.bf16.mxu0 0
      %1270 = vmatpush1.bf16.msra.mxu0 0
      %1271 = vmatprep.subr.bf16.mxu0 0
      %1272 = vmatpush1.bf16.msra.mxu0 0
      %1273 = vmatprep.subr.bf16.mxu0 0
      %1274 = vmatpush1.bf16.msra.mxu0 0
      %1275 = vmatprep.mubr.bf16.mxu0 0
      %1276 = vmatmul.mubr.bf16.gmra.mrb[0].mxu0 %v1238
      %v1277 = vpop.f32.mrb[0].mxu0
      %v1278 = vadd.f32 0.0, %v1277
      %v1279 = vpop.f32.mrb[0].mxu0
      %v1280 = vpop.f32.mrb[0].mxu0
      %v1281 = vpop.f32.mrb[0].mxu0
      %1282 = vdwg.mxu0
      %v1284 = vsel %vm953, %v1188, 0
      %v1287 = vsel %vm1193, %v951, 0
      %1289 = vmatprep.subr.bf16.mxu0 0
      %1290 = vmatpush1.bf16.msra.mxu0 %v1287
      %1291 = vmatprep.subr.bf16.mxu0 0
      %1292 = vmatpush1.bf16.msra.mxu0 0
      %1293 = vmatprep.subr.bf16.mxu0 0
      %1294 = vmatpush1.bf16.msra.mxu0 0
      %1295 = vmatprep.subr.bf16.mxu0 0
      %1296 = vmatpush1.bf16.msra.mxu0 0
      %1297 = vmatprep.subr.bf16.mxu0 0
      %1298 = vmatpush1.bf16.msra.mxu0 0
      %1299 = vmatprep.subr.bf16.mxu0 0
      %1300 = vmatpush1.bf16.msra.mxu0 0
      %1301 = vmatprep.subr.bf16.mxu0 0
      %1302 = vmatpush1.bf16.msra.mxu0 0
      %1303 = vmatprep.subr.bf16.mxu0 0
      %1304 = vmatpush1.bf16.msra.mxu0 0
      %1305 = vmatprep.subr.bf16.mxu0 0
      %1306 = vmatpush1.bf16.msra.mxu0 0
      %1307 = vmatprep.subr.bf16.mxu0 0
      %1308 = vmatpush1.bf16.msra.mxu0 0
      %1309 = vmatprep.subr.bf16.mxu0 0
      %1310 = vmatpush1.bf16.msra.mxu0 0
      %1311 = vmatprep.subr.bf16.mxu0 0
      %1312 = vmatpush1.bf16.msra.mxu0 0
      %1313 = vmatprep.subr.bf16.mxu0 0
      %1314 = vmatpush1.bf16.msra.mxu0 0
      %1315 = vmatprep.subr.bf16.mxu0 0
      %1316 = vmatpush1.bf16.msra.mxu0 0
      %1317 = vmatprep.subr.bf16.mxu0 0
      %1318 = vmatpush1.bf16.msra.mxu0 0
      %1319 = vmatprep.subr.bf16.mxu0 0
      %1320 = vmatpush1.bf16.msra.mxu0 0
      %1321 = vmatprep.mubr.bf16.mxu0 0
      %1322 = vmatmul.mubr.bf16.gmra.mrb[0].mxu0 %v1284
      %v1323 = vpop.f32.mrb[0].mxu0
      %v1324 = vadd.f32 0.0, %v1323
      %v1325 = vpop.f32.mrb[0].mxu0
      %v1326 = vpop.f32.mrb[0].mxu0
      %v1327 = vpop.f32.mrb[0].mxu0
      %1328 = vdwg.mxu0
      %v1330 = vsel %vm953, %v1189, 0
      %v1333 = vsel %vm1193, %v952, 0
      %1335 = vmatprep.subr.bf16.mxu0 0
      %1336 = vmatpush1.bf16.msra.mxu0 %v1333
      %1337 = vmatprep.subr.bf16.mxu0 0
      %1338 = vmatpush1.bf16.msra.mxu0 0
      %1339 = vmatprep.subr.bf16.mxu0 0
      %1340 = vmatpush1.bf16.msra.mxu0 0
      %1341 = vmatprep.subr.bf16.mxu0 0
      %1342 = vmatpush1.bf16.msra.mxu0 0
      %1343 = vmatprep.subr.bf16.mxu0 0
      %1344 = vmatpush1.bf16.msra.mxu0 0
      %1345 = vmatprep.subr.bf16.mxu0 0
      %1346 = vmatpush1.bf16.msra.mxu0 0
      %1347 = vmatprep.subr.bf16.mxu0 0
      %1348 = vmatpush1.bf16.msra.mxu0 0
      %1349 = vmatprep.subr.bf16.mxu0 0
      %1350 = vmatpush1.bf16.msra.mxu0 0
      %1351 = vmatprep.subr.bf16.mxu0 0
      %1352 = vmatpush1.bf16.msra.mxu0 0
      %1353 = vmatprep.subr.bf16.mxu0 0
      %1354 = vmatpush1.bf16.msra.mxu0 0
      %1355 = vmatprep.subr.bf16.mxu0 0
      %1356 = vmatpush1.bf16.msra.mxu0 0
      %1357 = vmatprep.subr.bf16.mxu0 0
      %1358 = vmatpush1.bf16.msra.mxu0 0
      %1359 = vmatprep.subr.bf16.mxu0 0
      %1360 = vmatpush1.bf16.msra.mxu0 0
      %1361 = vmatprep.subr.bf16.mxu0 0
      %1362 = vmatpush1.bf16.msra.mxu0 0
      %1363 = vmatprep.subr.bf16.mxu0 0
      %1364 = vmatpush1.bf16.msra.mxu0 0
      %1365 = vmatprep.subr.bf16.mxu0 0
      %1366 = vmatpush1.bf16.msra.mxu0 0
      %1367 = vmatprep.mubr.bf16.mxu0 0
      %1368 = vmatmul.mubr.bf16.gmra.mrb[0].mxu0 %v1330
      %v1369 = vpop.f32.mrb[0].mxu0
      %v1370 = vadd.f32 0.0, %v1369
      %v1371 = vpop.f32.mrb[0].mxu0
      %v1372 = vpop.f32.mrb[0].mxu0
      %v1373 = vpop.f32.mrb[0].mxu0
      %1374 = vdwg.mxu0
      %1375 = vrot.lane.b32.xlu0 %v929, 120
      %v1376 = vpop.permute.xlu0 %1375
      %1377 = vrot.lane.b32.xlu0 %v939, 120
      %v1378 = vpop.permute.xlu0 %1377
      %v1380 = vsel %vm953, %v1376, 0
      %v1383 = vsel %vm953, %v1378, 0
      %1385 = vmatprep.subr.bf16.mxu0 0
      %1386 = vmatpush1.bf16.xpose.msra.mxu0 %v1383
      %1387 = vmatprep.subr.bf16.mxu0 0
      %1388 = vmatpush1.bf16.xpose.msra.mxu0 0
      %1389 = vmatprep.subr.bf16.mxu0 0
      %1390 = vmatpush1.bf16.xpose.msra.mxu0 0
      %1391 = vmatprep.subr.bf16.mxu0 0
      %1392 = vmatpush1.bf16.xpose.msra.mxu0 0
      %1393 = vmatprep.subr.bf16.mxu0 0
      %1394 = vmatpush1.bf16.xpose.msra.mxu0 0
      %1395 = vmatprep.subr.bf16.mxu0 0
      %1396 = vmatpush1.bf16.xpose.msra.mxu0 0
      %1397 = vmatprep.subr.bf16.mxu0 0
      %1398 = vmatpush1.bf16.xpose.msra.mxu0 0
      %1399 = vmatprep.subr.bf16.mxu0 0
      %1400 = vmatpush1.bf16.xpose.msra.mxu0 0
      %1401 = vmatprep.subr.bf16.mxu0 0
      %1402 = vmatpush1.bf16.xpose.msra.mxu0 0
      %1403 = vmatprep.subr.bf16.mxu0 0
      %1404 = vmatpush1.bf16.xpose.msra.mxu0 0
      %1405 = vmatprep.subr.bf16.mxu0 0
      %1406 = vmatpush1.bf16.xpose.msra.mxu0 0
      %1407 = vmatprep.subr.bf16.mxu0 0
      %1408 = vmatpush1.bf16.xpose.msra.mxu0 0
      %1409 = vmatprep.subr.bf16.mxu0 0
      %1410 = vmatpush1.bf16.xpose.msra.mxu0 0
      %1411 = vmatprep.subr.bf16.mxu0 0
      %1412 = vmatpush1.bf16.xpose.msra.mxu0 0
      %1413 = vmatprep.subr.bf16.mxu0 0
      %1414 = vmatpush1.bf16.xpose.msra.mxu0 0
      %1415 = vmatprep.subr.bf16.mxu0 0
      %1416 = vmatpush1.bf16.xpose.msra.mxu0 0
      %1417 = vmatprep.mubr.bf16.mxu0 0
      %1418 = vmatmul.mubr.bf16.gmra.mrb[0].mxu0 %v1380
      %v1419 = vpop.f32.mrb[0].mxu0
      %v1420 = vadd.f32 0.0, %v1419
      %v1421 = vpop.f32.mrb[0].mxu0
      %v1422 = vpop.f32.mrb[0].mxu0
      %v1423 = vpop.f32.mrb[0].mxu0
      %1424 = vdwg.mxu0
      %1425 = vrot.lane.b32.xlu0 %v930, 120
      %v1426 = vpop.permute.xlu0 %1425
      %1427 = vrot.lane.b32.xlu0 %v940, 120
      %v1428 = vpop.permute.xlu0 %1427
      %v1430 = vsel %vm953, %v1426, 0
      %v1433 = vsel %vm953, %v1428, 0
      %1435 = vmatprep.subr.bf16.mxu0 0
      %1436 = vmatpush1.bf16.xpose.msra.mxu0 %v1433
      %1437 = vmatprep.subr.bf16.mxu0 0
      %1438 = vmatpush1.bf16.xpose.msra.mxu0 0
      %1439 = vmatprep.subr.bf16.mxu0 0
      %1440 = vmatpush1.bf16.xpose.msra.mxu0 0
      %1441 = vmatprep.subr.bf16.mxu0 0
      %1442 = vmatpush1.bf16.xpose.msra.mxu0 0
      %1443 = vmatprep.subr.bf16.mxu0 0
      %1444 = vmatpush1.bf16.xpose.msra.mxu0 0
      %1445 = vmatprep.subr.bf16.mxu0 0
      %1446 = vmatpush1.bf16.xpose.msra.mxu0 0
      %1447 = vmatprep.subr.bf16.mxu0 0
      %1448 = vmatpush1.bf16.xpose.msra.mxu0 0
      %1449 = vmatprep.subr.bf16.mxu0 0
      %1450 = vmatpush1.bf16.xpose.msra.mxu0 0
      %1451 = vmatprep.subr.bf16.mxu0 0
      %1452 = vmatpush1.bf16.xpose.msra.mxu0 0
      %1453 = vmatprep.subr.bf16.mxu0 0
      %1454 = vmatpush1.bf16.xpose.msra.mxu0 0
      %1455 = vmatprep.subr.bf16.mxu0 0
      %1456 = vmatpush1.bf16.xpose.msra.mxu0 0
      %1457 = vmatprep.subr.bf16.mxu0 0
      %1458 = vmatpush1.bf16.xpose.msra.mxu0 0
      %1459 = vmatprep.subr.bf16.mxu0 0
      %1460 = vmatpush1.bf16.xpose.msra.mxu0 0
      %1461 = vmatprep.subr.bf16.mxu0 0
      %1462 = vmatpush1.bf16.xpose.msra.mxu0 0
      %1463 = vmatprep.subr.bf16.mxu0 0
      %1464 = vmatpush1.bf16.xpose.msra.mxu0 0
      %1465 = vmatprep.subr.bf16.mxu0 0
      %1466 = vmatpush1.bf16.xpose.msra.mxu0 0
      %1467 = vmatprep.mubr.bf16.mxu0 0
      %1468 = vmatmul.mubr.bf16.gmra.mrb[0].mxu0 %v1430
      %v1469 = vpop.f32.mrb[0].mxu0
      %v1470 = vadd.f32 0.0, %v1469
      %v1471 = vpop.f32.mrb[0].mxu0
      %v1472 = vpop.f32.mrb[0].mxu0
      %v1473 = vpop.f32.mrb[0].mxu0
      %1474 = vdwg.mxu0
      %1475 = vrot.lane.b32.xlu0 %v931, 120
      %v1476 = vpop.permute.xlu0 %1475
      %1477 = vrot.lane.b32.xlu0 %v941, 120
      %v1478 = vpop.permute.xlu0 %1477
      %v1480 = vsel %vm953, %v1476, 0
      %v1483 = vsel %vm953, %v1478, 0
      %1485 = vmatprep.subr.bf16.mxu0 0
      %1486 = vmatpush1.bf16.xpose.msra.mxu0 %v1483
      %1487 = vmatprep.subr.bf16.mxu0 0
      %1488 = vmatpush1.bf16.xpose.msra.mxu0 0
      %1489 = vmatprep.subr.bf16.mxu0 0
      %1490 = vmatpush1.bf16.xpose.msra.mxu0 0
      %1491 = vmatprep.subr.bf16.mxu0 0
      %1492 = vmatpush1.bf16.xpose.msra.mxu0 0
      %1493 = vmatprep.subr.bf16.mxu0 0
      %1494 = vmatpush1.bf16.xpose.msra.mxu0 0
      %1495 = vmatprep.subr.bf16.mxu0 0
      %1496 = vmatpush1.bf16.xpose.msra.mxu0 0
      %1497 = vmatprep.subr.bf16.mxu0 0
      %1498 = vmatpush1.bf16.xpose.msra.mxu0 0
      %1499 = vmatprep.subr.bf16.mxu0 0
      %1500 = vmatpush1.bf16.xpose.msra.mxu0 0
      %1501 = vmatprep.subr.bf16.mxu0 0
      %1502 = vmatpush1.bf16.xpose.msra.mxu0 0
      %1503 = vmatprep.subr.bf16.mxu0 0
      %1504 = vmatpush1.bf16.xpose.msra.mxu0 0
      %1505 = vmatprep.subr.bf16.mxu0 0
      %1506 = vmatpush1.bf16.xpose.msra.mxu0 0
      %1507 = vmatprep.subr.bf16.mxu0 0
      %1508 = vmatpush1.bf16.xpose.msra.mxu0 0
      %1509 = vmatprep.subr.bf16.mxu0 0
      %1510 = vmatpush1.bf16.xpose.msra.mxu0 0
      %1511 = vmatprep.subr.bf16.mxu0 0
      %1512 = vmatpush1.bf16.xpose.msra.mxu0 0
      %1513 = vmatprep.subr.bf16.mxu0 0
      %1514 = vmatpush1.bf16.xpose.msra.mxu0 0
      %1515 = vmatprep.subr.bf16.mxu0 0
      %1516 = vmatpush1.bf16.xpose.msra.mxu0 0
      %1517 = vmatprep.mubr.bf16.mxu0 0
      %1518 = vmatmul.mubr.bf16.gmra.mrb[0].mxu0 %v1480
      %v1519 = vpop.f32.mrb[0].mxu0
      %v1520 = vadd.f32 0.0, %v1519
      %v1521 = vpop.f32.mrb[0].mxu0
      %v1522 = vpop.f32.mrb[0].mxu0
      %v1523 = vpop.f32.mrb[0].mxu0
      %1524 = vdwg.mxu0
      %1525 = vrot.lane.b32.xlu0 %v932, 120
      %v1526 = vpop.permute.xlu0 %1525
      %1527 = vrot.lane.b32.xlu0 %v942, 120
      %v1528 = vpop.permute.xlu0 %1527
      %v1530 = vsel %vm953, %v1526, 0
      %v1533 = vsel %vm953, %v1528, 0
      %1535 = vmatprep.subr.bf16.mxu0 0
      %1536 = vmatpush1.bf16.xpose.msra.mxu0 %v1533
      %1537 = vmatprep.subr.bf16.mxu0 0
      %1538 = vmatpush1.bf16.xpose.msra.mxu0 0
      %1539 = vmatprep.subr.bf16.mxu0 0
      %1540 = vmatpush1.bf16.xpose.msra.mxu0 0
      %1541 = vmatprep.subr.bf16.mxu0 0
      %1542 = vmatpush1.bf16.xpose.msra.mxu0 0
      %1543 = vmatprep.subr.bf16.mxu0 0
      %1544 = vmatpush1.bf16.xpose.msra.mxu0 0
      %1545 = vmatprep.subr.bf16.mxu0 0
      %1546 = vmatpush1.bf16.xpose.msra.mxu0 0
      %1547 = vmatprep.subr.bf16.mxu0 0
      %1548 = vmatpush1.bf16.xpose.msra.mxu0 0
      %1549 = vmatprep.subr.bf16.mxu0 0
      %1550 = vmatpush1.bf16.xpose.msra.mxu0 0
      %1551 = vmatprep.subr.bf16.mxu0 0
      %1552 = vmatpush1.bf16.xpose.msra.mxu0 0
      %1553 = vmatprep.subr.bf16.mxu0 0
      %1554 = vmatpush1.bf16.xpose.msra.mxu0 0
      %1555 = vmatprep.subr.bf16.mxu0 0
      %1556 = vmatpush1.bf16.xpose.msra.mxu0 0
      %1557 = vmatprep.subr.bf16.mxu0 0
      %1558 = vmatpush1.bf16.xpose.msra.mxu0 0
      %1559 = vmatprep.subr.bf16.mxu0 0
      %1560 = vmatpush1.bf16.xpose.msra.mxu0 0
      %1561 = vmatprep.subr.bf16.mxu0 0
      %1562 = vmatpush1.bf16.xpose.msra.mxu0 0
      %1563 = vmatprep.subr.bf16.mxu0 0
      %1564 = vmatpush1.bf16.xpose.msra.mxu0 0
      %1565 = vmatprep.subr.bf16.mxu0 0
      %1566 = vmatpush1.bf16.xpose.msra.mxu0 0
      %1567 = vmatprep.mubr.bf16.mxu0 0
      %1568 = vmatmul.mubr.bf16.gmra.mrb[0].mxu0 %v1530
      %v1569 = vpop.f32.mrb[0].mxu0
      %v1570 = vadd.f32 0.0, %v1569
      %v1571 = vpop.f32.mrb[0].mxu0
      %v1572 = vpop.f32.mrb[0].mxu0
      %v1573 = vpop.f32.mrb[0].mxu0
      %1574 = vdwg.mxu0
      %v1575 = vmul.f32 %v1420, 0.35355338
      %v1576 = vmul.f32 %v1470, 0.35355338
      %v1577 = vmul.f32 %v1520, 0.35355338
      %v1578 = vmul.f32 %v1570, 0.35355338
      %v1579 = vsel %vm953, %v1575, -inf
      %1580 = vmax.xlane.f32.xlu0 %v1579
      %v1581 = vpop.xlane.xlu0 %1580
      %v1582 = vsel %vm953, %v1576, -inf
      %1583 = vmax.xlane.f32.xlu0 %v1582
      %v1584 = vpop.xlane.xlu0 %1583
      %v1585 = vsel %vm953, %v1577, -inf
      %1586 = vmax.xlane.f32.xlu0 %v1585
      %v1587 = vpop.xlane.xlu0 %1586
      %v1588 = vsel %vm953, %v1578, -inf
      %1589 = vmax.xlane.f32.xlu0 %v1588
      %v1590 = vpop.xlane.xlu0 %1589
      %v1591 = vsub.f32 %v1575, %v1581
      %v1592 = vsub.f32 %v1576, %v1584
      %v1593 = vsub.f32 %v1577, %v1587
      %v1594 = vsub.f32 %v1578, %v1590
      %v1595 = vmul.f32 %v1591, 1.442695
      %v1596 = vpow.pop %v1595
      %v1597 = vmul.f32 %v1592, 1.442695
      %v1598 = vpow.pop %v1597
      %v1599 = vmul.f32 %v1593, 1.442695
      %v1600 = vpow.pop %v1599
      %v1601 = vmul.f32 %v1594, 1.442695
      %v1602 = vpow.pop %v1601
      %v1603 = vsel %vm953, %v1596, 0.0
      %1604 = vadd.xlane.f32.xlu0 %v1603
      %v1605 = vpop.xlane.xlu0 %1604
      %v1606 = vsel %vm953, %v1598, 0.0
      %1607 = vadd.xlane.f32.xlu0 %v1606
      %v1608 = vpop.xlane.xlu0 %1607
      %v1609 = vsel %vm953, %v1600, 0.0
      %1610 = vadd.xlane.f32.xlu0 %v1609
      %v1611 = vpop.xlane.xlu0 %1610
      %v1612 = vsel %vm953, %v1602, 0.0
      %1613 = vadd.xlane.f32.xlu0 %v1612
      %v1614 = vpop.xlane.xlu0 %1613
      %v1615 = vrcp.pop %v1605
      %v1616 = vrcp.pop %v1608
      %v1617 = vrcp.pop %v1611
      %v1618 = vrcp.pop %v1614
      %v1619 = vmul.f32 %v1596, %v1615
      %v1620 = vmul.f32 %v1598, %v1616
      %v1621 = vmul.f32 %v1600, %v1617
      %v1622 = vmul.f32 %v1602, %v1618
      %v1623 = vpack.c.bf16 %v1619, %v1619
      %v1624 = vpack.c.bf16 %v1620, %v1620
      %v1625 = vpack.c.bf16 %v1621, %v1621
      %v1626 = vpack.c.bf16 %v1622, %v1622
      %1627 = vrot.lane.b32.xlu0 %v949, 120
      %v1628 = vpop.permute.xlu0 %1627
      %v1630 = vsel %vm953, %v1623, 0
      %v1633 = vsel %vm1193, %v1628, 0
      %1635 = vmatprep.subr.bf16.mxu0 0
      %1636 = vmatpush1.bf16.msra.mxu0 %v1633
      %1637 = vmatprep.subr.bf16.mxu0 0
      %1638 = vmatpush1.bf16.msra.mxu0 0
      %1639 = vmatprep.subr.bf16.mxu0 0
      %1640 = vmatpush1.bf16.msra.mxu0 0
      %1641 = vmatprep.subr.bf16.mxu0 0
      %1642 = vmatpush1.bf16.msra.mxu0 0
      %1643 = vmatprep.subr.bf16.mxu0 0
      %1644 = vmatpush1.bf16.msra.mxu0 0
      %1645 = vmatprep.subr.bf16.mxu0 0
      %1646 = vmatpush1.bf16.msra.mxu0 0
      %1647 = vmatprep.subr.bf16.mxu0 0
      %1648 = vmatpush1.bf16.msra.mxu0 0
      %1649 = vmatprep.subr.bf16.mxu0 0
      %1650 = vmatpush1.bf16.msra.mxu0 0
      %1651 = vmatprep.subr.bf16.mxu0 0
      %1652 = vmatpush1.bf16.msra.mxu0 0
      %1653 = vmatprep.subr.bf16.mxu0 0
      %1654 = vmatpush1.bf16.msra.mxu0 0
      %1655 = vmatprep.subr.bf16.mxu0 0
      %1656 = vmatpush1.bf16.msra.mxu0 0
      %1657 = vmatprep.subr.bf16.mxu0 0
      %1658 = vmatpush1.bf16.msra.mxu0 0
      %1659 = vmatprep.subr.bf16.mxu0 0
      %1660 = vmatpush1.bf16.msra.mxu0 0
      %1661 = vmatprep.subr.bf16.mxu0 0
      %1662 = vmatpush1.bf16.msra.mxu0 0
      %1663 = vmatprep.subr.bf16.mxu0 0
      %1664 = vmatpush1.bf16.msra.mxu0 0
      %1665 = vmatprep.subr.bf16.mxu0 0
      %1666 = vmatpush1.bf16.msra.mxu0 0
      %1667 = vmatprep.mubr.bf16.mxu0 0
      %1668 = vmatmul.mubr.bf16.gmra.mrb[0].mxu0 %v1630
      %v1669 = vpop.f32.mrb[0].mxu0
      %v1670 = vadd.f32 0.0, %v1669
      %v1671 = vpop.f32.mrb[0].mxu0
      %v1672 = vpop.f32.mrb[0].mxu0
      %v1673 = vpop.f32.mrb[0].mxu0
      %1674 = vdwg.mxu0
      %1675 = vrot.lane.b32.xlu0 %v950, 120
      %v1676 = vpop.permute.xlu0 %1675
      %v1678 = vsel %vm953, %v1624, 0
      %v1681 = vsel %vm1193, %v1676, 0
      %1683 = vmatprep.subr.bf16.mxu0 0
      %1684 = vmatpush1.bf16.msra.mxu0 %v1681
      %1685 = vmatprep.subr.bf16.mxu0 0
      %1686 = vmatpush1.bf16.msra.mxu0 0
      %1687 = vmatprep.subr.bf16.mxu0 0
      %1688 = vmatpush1.bf16.msra.mxu0 0
      %1689 = vmatprep.subr.bf16.mxu0 0
      %1690 = vmatpush1.bf16.msra.mxu0 0
      %1691 = vmatprep.subr.bf16.mxu0 0
      %1692 = vmatpush1.bf16.msra.mxu0 0
      %1693 = vmatprep.subr.bf16.mxu0 0
      %1694 = vmatpush1.bf16.msra.mxu0 0
      %1695 = vmatprep.subr.bf16.mxu0 0
      %1696 = vmatpush1.bf16.msra.mxu0 0
      %1697 = vmatprep.subr.bf16.mxu0 0
      %1698 = vmatpush1.bf16.msra.mxu0 0
      %1699 = vmatprep.subr.bf16.mxu0 0
      %1700 = vmatpush1.bf16.msra.mxu0 0
      %1701 = vmatprep.subr.bf16.mxu0 0
      %1702 = vmatpush1.bf16.msra.mxu0 0
      %1703 = vmatprep.subr.bf16.mxu0 0
      %1704 = vmatpush1.bf16.msra.mxu0 0
      %1705 = vmatprep.subr.bf16.mxu0 0
      %1706 = vmatpush1.bf16.msra.mxu0 0
      %1707 = vmatprep.subr.bf16.mxu0 0
      %1708 = vmatpush1.bf16.msra.mxu0 0
      %1709 = vmatprep.subr.bf16.mxu0 0
      %1710 = vmatpush1.bf16.msra.mxu0 0
      %1711 = vmatprep.subr.bf16.mxu0 0
      %1712 = vmatpush1.bf16.msra.mxu0 0
      %1713 = vmatprep.subr.bf16.mxu0 0
      %1714 = vmatpush1.bf16.msra.mxu0 0
      %1715 = vmatprep.mubr.bf16.mxu0 0
      %1716 = vmatmul.mubr.bf16.gmra.mrb[0].mxu0 %v1678
      %v1717 = vpop.f32.mrb[0].mxu0
      %v1718 = vadd.f32 0.0, %v1717
      %v1719 = vpop.f32.mrb[0].mxu0
      %v1720 = vpop.f32.mrb[0].mxu0
      %v1721 = vpop.f32.mrb[0].mxu0
      %1722 = vdwg.mxu0
      %1723 = vrot.lane.b32.xlu0 %v951, 120
      %v1724 = vpop.permute.xlu0 %1723
      %v1726 = vsel %vm953, %v1625, 0
      %v1729 = vsel %vm1193, %v1724, 0
      %1731 = vmatprep.subr.bf16.mxu0 0
      %1732 = vmatpush1.bf16.msra.mxu0 %v1729
      %1733 = vmatprep.subr.bf16.mxu0 0
      %1734 = vmatpush1.bf16.msra.mxu0 0
      %1735 = vmatprep.subr.bf16.mxu0 0
      %1736 = vmatpush1.bf16.msra.mxu0 0
      %1737 = vmatprep.subr.bf16.mxu0 0
      %1738 = vmatpush1.bf16.msra.mxu0 0
      %1739 = vmatprep.subr.bf16.mxu0 0
      %1740 = vmatpush1.bf16.msra.mxu0 0
      %1741 = vmatprep.subr.bf16.mxu0 0
      %1742 = vmatpush1.bf16.msra.mxu0 0
      %1743 = vmatprep.subr.bf16.mxu0 0
      %1744 = vmatpush1.bf16.msra.mxu0 0
      %1745 = vmatprep.subr.bf16.mxu0 0
      %1746 = vmatpush1.bf16.msra.mxu0 0
      %1747 = vmatprep.subr.bf16.mxu0 0
      %1748 = vmatpush1.bf16.msra.mxu0 0
      %1749 = vmatprep.subr.bf16.mxu0 0
      %1750 = vmatpush1.bf16.msra.mxu0 0
      %1751 = vmatprep.subr.bf16.mxu0 0
      %1752 = vmatpush1.bf16.msra.mxu0 0
      %1753 = vmatprep.subr.bf16.mxu0 0
      %1754 = vmatpush1.bf16.msra.mxu0 0
      %1755 = vmatprep.subr.bf16.mxu0 0
      %1756 = vmatpush1.bf16.msra.mxu0 0
      %1757 = vmatprep.subr.bf16.mxu0 0
      %1758 = vmatpush1.bf16.msra.mxu0 0
      %1759 = vmatprep.subr.bf16.mxu0 0
      %1760 = vmatpush1.bf16.msra.mxu0 0
      %1761 = vmatprep.subr.bf16.mxu0 0
      %1762 = vmatpush1.bf16.msra.mxu0 0
      %1763 = vmatprep.mubr.bf16.mxu0 0
      %1764 = vmatmul.mubr.bf16.gmra.mrb[0].mxu0 %v1726
      %v1765 = vpop.f32.mrb[0].mxu0
      %v1766 = vadd.f32 0.0, %v1765
      %v1767 = vpop.f32.mrb[0].mxu0
      %v1768 = vpop.f32.mrb[0].mxu0
      %v1769 = vpop.f32.mrb[0].mxu0
      %1770 = vdwg.mxu0
      %1771 = vrot.lane.b32.xlu0 %v952, 120
      %v1772 = vpop.permute.xlu0 %1771
      %v1774 = vsel %vm953, %v1626, 0
      %v1777 = vsel %vm1193, %v1772, 0
      %1779 = vmatprep.subr.bf16.mxu0 0
      %1780 = vmatpush1.bf16.msra.mxu0 %v1777
      %1781 = vmatprep.subr.bf16.mxu0 0
      %1782 = vmatpush1.bf16.msra.mxu0 0
      %1783 = vmatprep.subr.bf16.mxu0 0
      %1784 = vmatpush1.bf16.msra.mxu0 0
      %1785 = vmatprep.subr.bf16.mxu0 0
      %1786 = vmatpush1.bf16.msra.mxu0 0
      %1787 = vmatprep.subr.bf16.mxu0 0
      %1788 = vmatpush1.bf16.msra.mxu0 0
      %1789 = vmatprep.subr.bf16.mxu0 0
      %1790 = vmatpush1.bf16.msra.mxu0 0
      %1791 = vmatprep.subr.bf16.mxu0 0
      %1792 = vmatpush1.bf16.msra.mxu0 0
      %1793 = vmatprep.subr.bf16.mxu0 0
      %1794 = vmatpush1.bf16.msra.mxu0 0
      %1795 = vmatprep.subr.bf16.mxu0 0
      %1796 = vmatpush1.bf16.msra.mxu0 0
      %1797 = vmatprep.subr.bf16.mxu0 0
      %1798 = vmatpush1.bf16.msra.mxu0 0
      %1799 = vmatprep.subr.bf16.mxu0 0
      %1800 = vmatpush1.bf16.msra.mxu0 0
      %1801 = vmatprep.subr.bf16.mxu0 0
      %1802 = vmatpush1.bf16.msra.mxu0 0
      %1803 = vmatprep.subr.bf16.mxu0 0
      %1804 = vmatpush1.bf16.msra.mxu0 0
      %1805 = vmatprep.subr.bf16.mxu0 0
      %1806 = vmatpush1.bf16.msra.mxu0 0
      %1807 = vmatprep.subr.bf16.mxu0 0
      %1808 = vmatpush1.bf16.msra.mxu0 0
      %1809 = vmatprep.subr.bf16.mxu0 0
      %1810 = vmatpush1.bf16.msra.mxu0 0
      %1811 = vmatprep.mubr.bf16.mxu0 0
      %1812 = vmatmul.mubr.bf16.gmra.mrb[0].mxu0 %v1774
      %v1813 = vpop.f32.mrb[0].mxu0
      %v1814 = vadd.f32 0.0, %v1813
      %v1815 = vpop.f32.mrb[0].mxu0
      %v1816 = vpop.f32.mrb[0].mxu0
      %v1817 = vpop.f32.mrb[0].mxu0
      %1818 = vdwg.mxu0
      %1819 = vrot.lane.b32.xlu0 %v929, 112
      %v1820 = vpop.permute.xlu0 %1819
      %1821 = vrot.lane.b32.xlu0 %v939, 112
      %v1822 = vpop.permute.xlu0 %1821
      %v1824 = vsel %vm953, %v1820, 0
      %v1827 = vsel %vm953, %v1822, 0
      %1829 = vmatprep.subr.bf16.mxu0 0
      %1830 = vmatpush1.bf16.xpose.msra.mxu0 %v1827
      %1831 = vmatprep.subr.bf16.mxu0 0
      %1832 = vmatpush1.bf16.xpose.msra.mxu0 0
      %1833 = vmatprep.subr.bf16.mxu0 0
      %1834 = vmatpush1.bf16.xpose.msra.mxu0 0
      %1835 = vmatprep.subr.bf16.mxu0 0
      %1836 = vmatpush1.bf16.xpose.msra.mxu0 0
      %1837 = vmatprep.subr.bf16.mxu0 0
      %1838 = vmatpush1.bf16.xpose.msra.mxu0 0
      %1839 = vmatprep.subr.bf16.mxu0 0
      %1840 = vmatpush1.bf16.xpose.msra.mxu0 0
      %1841 = vmatprep.subr.bf16.mxu0 0
      %1842 = vmatpush1.bf16.xpose.msra.mxu0 0
      %1843 = vmatprep.subr.bf16.mxu0 0
      %1844 = vmatpush1.bf16.xpose.msra.mxu0 0
      %1845 = vmatprep.subr.bf16.mxu0 0
      %1846 = vmatpush1.bf16.xpose.msra.mxu0 0
      %1847 = vmatprep.subr.bf16.mxu0 0
      %1848 = vmatpush1.bf16.xpose.msra.mxu0 0
      %1849 = vmatprep.subr.bf16.mxu0 0
      %1850 = vmatpush1.bf16.xpose.msra.mxu0 0
      %1851 = vmatprep.subr.bf16.mxu0 0
      %1852 = vmatpush1.bf16.xpose.msra.mxu0 0
      %1853 = vmatprep.subr.bf16.mxu0 0
      %1854 = vmatpush1.bf16.xpose.msra.mxu0 0
      %1855 = vmatprep.subr.bf16.mxu0 0
      %1856 = vmatpush1.bf16.xpose.msra.mxu0 0
      %1857 = vmatprep.subr.bf16.mxu0 0
      %1858 = vmatpush1.bf16.xpose.msra.mxu0 0
      %1859 = vmatprep.subr.bf16.mxu0 0
      %1860 = vmatpush1.bf16.xpose.msra.mxu0 0
      %1861 = vmatprep.mubr.bf16.mxu0 0
      %1862 = vmatmul.mubr.bf16.gmra.mrb[0].mxu0 %v1824
      %v1863 = vpop.f32.mrb[0].mxu0
      %v1864 = vadd.f32 0.0, %v1863
      %v1865 = vpop.f32.mrb[0].mxu0
      %v1866 = vpop.f32.mrb[0].mxu0
      %v1867 = vpop.f32.mrb[0].mxu0
      %1868 = vdwg.mxu0
      %1869 = vrot.lane.b32.xlu0 %v930, 112
      %v1870 = vpop.permute.xlu0 %1869
      %1871 = vrot.lane.b32.xlu0 %v940, 112
      %v1872 = vpop.permute.xlu0 %1871
      %v1874 = vsel %vm953, %v1870, 0
      %v1877 = vsel %vm953, %v1872, 0
      %1879 = vmatprep.subr.bf16.mxu0 0
      %1880 = vmatpush1.bf16.xpose.msra.mxu0 %v1877
      %1881 = vmatprep.subr.bf16.mxu0 0
      %1882 = vmatpush1.bf16.xpose.msra.mxu0 0
      %1883 = vmatprep.subr.bf16.mxu0 0
      %1884 = vmatpush1.bf16.xpose.msra.mxu0 0
      %1885 = vmatprep.subr.bf16.mxu0 0
      %1886 = vmatpush1.bf16.xpose.msra.mxu0 0
      %1887 = vmatprep.subr.bf16.mxu0 0
      %1888 = vmatpush1.bf16.xpose.msra.mxu0 0
      %1889 = vmatprep.subr.bf16.mxu0 0
      %1890 = vmatpush1.bf16.xpose.msra.mxu0 0
      %1891 = vmatprep.subr.bf16.mxu0 0
      %1892 = vmatpush1.bf16.xpose.msra.mxu0 0
      %1893 = vmatprep.subr.bf16.mxu0 0
      %1894 = vmatpush1.bf16.xpose.msra.mxu0 0
      %1895 = vmatprep.subr.bf16.mxu0 0
      %1896 = vmatpush1.bf16.xpose.msra.mxu0 0
      %1897 = vmatprep.subr.bf16.mxu0 0
      %1898 = vmatpush1.bf16.xpose.msra.mxu0 0
      %1899 = vmatprep.subr.bf16.mxu0 0
      %1900 = vmatpush1.bf16.xpose.msra.mxu0 0
      %1901 = vmatprep.subr.bf16.mxu0 0
      %1902 = vmatpush1.bf16.xpose.msra.mxu0 0
      %1903 = vmatprep.subr.bf16.mxu0 0
      %1904 = vmatpush1.bf16.xpose.msra.mxu0 0
      %1905 = vmatprep.subr.bf16.mxu0 0
      %1906 = vmatpush1.bf16.xpose.msra.mxu0 0
      %1907 = vmatprep.subr.bf16.mxu0 0
      %1908 = vmatpush1.bf16.xpose.msra.mxu0 0
      %1909 = vmatprep.subr.bf16.mxu0 0
      %1910 = vmatpush1.bf16.xpose.msra.mxu0 0
      %1911 = vmatprep.mubr.bf16.mxu0 0
      %1912 = vmatmul.mubr.bf16.gmra.mrb[0].mxu0 %v1874
      %v1913 = vpop.f32.mrb[0].mxu0
      %v1914 = vadd.f32 0.0, %v1913
      %v1915 = vpop.f32.mrb[0].mxu0
      %v1916 = vpop.f32.mrb[0].mxu0
      %v1917 = vpop.f32.mrb[0].mxu0
      %1918 = vdwg.mxu0
      %1919 = vrot.lane.b32.xlu0 %v931, 112
      %v1920 = vpop.permute.xlu0 %1919
      %1921 = vrot.lane.b32.xlu0 %v941, 112
      %v1922 = vpop.permute.xlu0 %1921
      %v1924 = vsel %vm953, %v1920, 0
      %v1927 = vsel %vm953, %v1922, 0
      %1929 = vmatprep.subr.bf16.mxu0 0
      %1930 = vmatpush1.bf16.xpose.msra.mxu0 %v1927
      %1931 = vmatprep.subr.bf16.mxu0 0
      %1932 = vmatpush1.bf16.xpose.msra.mxu0 0
      %1933 = vmatprep.subr.bf16.mxu0 0
      %1934 = vmatpush1.bf16.xpose.msra.mxu0 0
      %1935 = vmatprep.subr.bf16.mxu0 0
      %1936 = vmatpush1.bf16.xpose.msra.mxu0 0
      %1937 = vmatprep.subr.bf16.mxu0 0
      %1938 = vmatpush1.bf16.xpose.msra.mxu0 0
      %1939 = vmatprep.subr.bf16.mxu0 0
      %1940 = vmatpush1.bf16.xpose.msra.mxu0 0
      %1941 = vmatprep.subr.bf16.mxu0 0
      %1942 = vmatpush1.bf16.xpose.msra.mxu0 0
      %1943 = vmatprep.subr.bf16.mxu0 0
      %1944 = vmatpush1.bf16.xpose.msra.mxu0 0
      %1945 = vmatprep.subr.bf16.mxu0 0
      %1946 = vmatpush1.bf16.xpose.msra.mxu0 0
      %1947 = vmatprep.subr.bf16.mxu0 0
      %1948 = vmatpush1.bf16.xpose.msra.mxu0 0
      %1949 = vmatprep.subr.bf16.mxu0 0
      %1950 = vmatpush1.bf16.xpose.msra.mxu0 0
      %1951 = vmatprep.subr.bf16.mxu0 0
      %1952 = vmatpush1.bf16.xpose.msra.mxu0 0
      %1953 = vmatprep.subr.bf16.mxu0 0
      %1954 = vmatpush1.bf16.xpose.msra.mxu0 0
      %1955 = vmatprep.subr.bf16.mxu0 0
      %1956 = vmatpush1.bf16.xpose.msra.mxu0 0
      %1957 = vmatprep.subr.bf16.mxu0 0
      %1958 = vmatpush1.bf16.xpose.msra.mxu0 0
      %1959 = vmatprep.subr.bf16.mxu0 0
      %1960 = vmatpush1.bf16.xpose.msra.mxu0 0
      %1961 = vmatprep.mubr.bf16.mxu0 0
      %1962 = vmatmul.mubr.bf16.gmra.mrb[0].mxu0 %v1924
      %v1963 = vpop.f32.mrb[0].mxu0
      %v1964 = vadd.f32 0.0, %v1963
      %v1965 = vpop.f32.mrb[0].mxu0
      %v1966 = vpop.f32.mrb[0].mxu0
      %v1967 = vpop.f32.mrb[0].mxu0
      %1968 = vdwg.mxu0
      %1969 = vrot.lane.b32.xlu0 %v932, 112
      %v1970 = vpop.permute.xlu0 %1969
      %1971 = vrot.lane.b32.xlu0 %v942, 112
      %v1972 = vpop.permute.xlu0 %1971
      %v1974 = vsel %vm953, %v1970, 0
      %v1977 = vsel %vm953, %v1972, 0
      %1979 = vmatprep.subr.bf16.mxu0 0
      %1980 = vmatpush1.bf16.xpose.msra.mxu0 %v1977
      %1981 = vmatprep.subr.bf16.mxu0 0
      %1982 = vmatpush1.bf16.xpose.msra.mxu0 0
      %1983 = vmatprep.subr.bf16.mxu0 0
      %1984 = vmatpush1.bf16.xpose.msra.mxu0 0
      %1985 = vmatprep.subr.bf16.mxu0 0
      %1986 = vmatpush1.bf16.xpose.msra.mxu0 0
      %1987 = vmatprep.subr.bf16.mxu0 0
      %1988 = vmatpush1.bf16.xpose.msra.mxu0 0
      %1989 = vmatprep.subr.bf16.mxu0 0
      %1990 = vmatpush1.bf16.xpose.msra.mxu0 0
      %1991 = vmatprep.subr.bf16.mxu0 0
      %1992 = vmatpush1.bf16.xpose.msra.mxu0 0
      %1993 = vmatprep.subr.bf16.mxu0 0
      %1994 = vmatpush1.bf16.xpose.msra.mxu0 0
      %1995 = vmatprep.subr.bf16.mxu0 0
      %1996 = vmatpush1.bf16.xpose.msra.mxu0 0
      %1997 = vmatprep.subr.bf16.mxu0 0
      %1998 = vmatpush1.bf16.xpose.msra.mxu0 0
      %1999 = vmatprep.subr.bf16.mxu0 0
      %2000 = vmatpush1.bf16.xpose.msra.mxu0 0
      %2001 = vmatprep.subr.bf16.mxu0 0
      %2002 = vmatpush1.bf16.xpose.msra.mxu0 0
      %2003 = vmatprep.subr.bf16.mxu0 0
      %2004 = vmatpush1.bf16.xpose.msra.mxu0 0
      %2005 = vmatprep.subr.bf16.mxu0 0
      %2006 = vmatpush1.bf16.xpose.msra.mxu0 0
      %2007 = vmatprep.subr.bf16.mxu0 0
      %2008 = vmatpush1.bf16.xpose.msra.mxu0 0
      %2009 = vmatprep.subr.bf16.mxu0 0
      %2010 = vmatpush1.bf16.xpose.msra.mxu0 0
      %2011 = vmatprep.mubr.bf16.mxu0 0
      %2012 = vmatmul.mubr.bf16.gmra.mrb[0].mxu0 %v1974
      %v2013 = vpop.f32.mrb[0].mxu0
      %v2014 = vadd.f32 0.0, %v2013
      %v2015 = vpop.f32.mrb[0].mxu0
      %v2016 = vpop.f32.mrb[0].mxu0
      %v2017 = vpop.f32.mrb[0].mxu0
      %2018 = vdwg.mxu0
      %v2019 = vmul.f32 %v1864, 0.35355338
      %v2020 = vmul.f32 %v1914, 0.35355338
      %v2021 = vmul.f32 %v1964, 0.35355338
      %v2022 = vmul.f32 %v2014, 0.35355338
      %v2023 = vsel %vm953, %v2019, -inf
      %2024 = vmax.xlane.f32.xlu0 %v2023
      %v2025 = vpop.xlane.xlu0 %2024
      %v2026 = vsel %vm953, %v2020, -inf
      %2027 = vmax.xlane.f32.xlu0 %v2026
      %v2028 = vpop.xlane.xlu0 %2027
      %v2029 = vsel %vm953, %v2021, -inf
      %2030 = vmax.xlane.f32.xlu0 %v2029
      %v2031 = vpop.xlane.xlu0 %2030
      %v2032 = vsel %vm953, %v2022, -inf
      %2033 = vmax.xlane.f32.xlu0 %v2032
      %v2034 = vpop.xlane.xlu0 %2033
      %v2035 = vsub.f32 %v2019, %v2025
      %v2036 = vsub.f32 %v2020, %v2028
      %v2037 = vsub.f32 %v2021, %v2031
      %v2038 = vsub.f32 %v2022, %v2034
      %v2039 = vmul.f32 %v2035, 1.442695
      %v2040 = vpow.pop %v2039
      %v2041 = vmul.f32 %v2036, 1.442695
      %v2042 = vpow.pop %v2041
      %v2043 = vmul.f32 %v2037, 1.442695
      %v2044 = vpow.pop %v2043
      %v2045 = vmul.f32 %v2038, 1.442695
      %v2046 = vpow.pop %v2045
      %v2047 = vsel %vm953, %v2040, 0.0
      %2048 = vadd.xlane.f32.xlu0 %v2047
      %v2049 = vpop.xlane.xlu0 %2048
      %v2050 = vsel %vm953, %v2042, 0.0
      %2051 = vadd.xlane.f32.xlu0 %v2050
      %v2052 = vpop.xlane.xlu0 %2051
      %v2053 = vsel %vm953, %v2044, 0.0
      %2054 = vadd.xlane.f32.xlu0 %v2053
      %v2055 = vpop.xlane.xlu0 %2054
      %v2056 = vsel %vm953, %v2046, 0.0
      %2057 = vadd.xlane.f32.xlu0 %v2056
      %v2058 = vpop.xlane.xlu0 %2057
      %v2059 = vrcp.pop %v2049
      %v2060 = vrcp.pop %v2052
      %v2061 = vrcp.pop %v2055
      %v2062 = vrcp.pop %v2058
      %v2063 = vmul.f32 %v2040, %v2059
      %v2064 = vmul.f32 %v2042, %v2060
      %v2065 = vmul.f32 %v2044, %v2061
      %v2066 = vmul.f32 %v2046, %v2062
      %v2067 = vpack.c.bf16 %v2063, %v2063
      %v2068 = vpack.c.bf16 %v2064, %v2064
      %v2069 = vpack.c.bf16 %v2065, %v2065
      %v2070 = vpack.c.bf16 %v2066, %v2066
      %2071 = vrot.lane.b32.xlu0 %v949, 112
      %v2072 = vpop.permute.xlu0 %2071
      %v2074 = vsel %vm953, %v2067, 0
      %v2077 = vsel %vm1193, %v2072, 0
      %2079 = vmatprep.subr.bf16.mxu0 0
      %2080 = vmatpush1.bf16.msra.mxu0 %v2077
      %2081 = vmatprep.subr.bf16.mxu0 0
      %2082 = vmatpush1.bf16.msra.mxu0 0
      %2083 = vmatprep.subr.bf16.mxu0 0
      %2084 = vmatpush1.bf16.msra.mxu0 0
      %2085 = vmatprep.subr.bf16.mxu0 0
      %2086 = vmatpush1.bf16.msra.mxu0 0
      %2087 = vmatprep.subr.bf16.mxu0 0
      %2088 = vmatpush1.bf16.msra.mxu0 0
      %2089 = vmatprep.subr.bf16.mxu0 0
      %2090 = vmatpush1.bf16.msra.mxu0 0
      %2091 = vmatprep.subr.bf16.mxu0 0
      %2092 = vmatpush1.bf16.msra.mxu0 0
      %2093 = vmatprep.subr.bf16.mxu0 0
      %2094 = vmatpush1.bf16.msra.mxu0 0
      %2095 = vmatprep.subr.bf16.mxu0 0
      %2096 = vmatpush1.bf16.msra.mxu0 0
      %2097 = vmatprep.subr.bf16.mxu0 0
      %2098 = vmatpush1.bf16.msra.mxu0 0
      %2099 = vmatprep.subr.bf16.mxu0 0
      %2100 = vmatpush1.bf16.msra.mxu0 0
      %2101 = vmatprep.subr.bf16.mxu0 0
      %2102 = vmatpush1.bf16.msra.mxu0 0
      %2103 = vmatprep.subr.bf16.mxu0 0
      %2104 = vmatpush1.bf16.msra.mxu0 0
      %2105 = vmatprep.subr.bf16.mxu0 0
      %2106 = vmatpush1.bf16.msra.mxu0 0
      %2107 = vmatprep.subr.bf16.mxu0 0
      %2108 = vmatpush1.bf16.msra.mxu0 0
      %2109 = vmatprep.subr.bf16.mxu0 0
      %2110 = vmatpush1.bf16.msra.mxu0 0
      %2111 = vmatprep.mubr.bf16.mxu0 0
      %2112 = vmatmul.mubr.bf16.gmra.mrb[0].mxu0 %v2074
      %v2113 = vpop.f32.mrb[0].mxu0
      %v2114 = vadd.f32 0.0, %v2113
      %v2115 = vpop.f32.mrb[0].mxu0
      %v2116 = vpop.f32.mrb[0].mxu0
      %v2117 = vpop.f32.mrb[0].mxu0
      %2118 = vdwg.mxu0
      %2119 = vrot.lane.b32.xlu0 %v950, 112
      %v2120 = vpop.permute.xlu0 %2119
      %v2122 = vsel %vm953, %v2068, 0
      %v2125 = vsel %vm1193, %v2120, 0
      %2127 = vmatprep.subr.bf16.mxu0 0
      %2128 = vmatpush1.bf16.msra.mxu0 %v2125
      %2129 = vmatprep.subr.bf16.mxu0 0
      %2130 = vmatpush1.bf16.msra.mxu0 0
      %2131 = vmatprep.subr.bf16.mxu0 0
      %2132 = vmatpush1.bf16.msra.mxu0 0
      %2133 = vmatprep.subr.bf16.mxu0 0
      %2134 = vmatpush1.bf16.msra.mxu0 0
      %2135 = vmatprep.subr.bf16.mxu0 0
      %2136 = vmatpush1.bf16.msra.mxu0 0
      %2137 = vmatprep.subr.bf16.mxu0 0
      %2138 = vmatpush1.bf16.msra.mxu0 0
      %2139 = vmatprep.subr.bf16.mxu0 0
      %2140 = vmatpush1.bf16.msra.mxu0 0
      %2141 = vmatprep.subr.bf16.mxu0 0
      %2142 = vmatpush1.bf16.msra.mxu0 0
      %2143 = vmatprep.subr.bf16.mxu0 0
      %2144 = vmatpush1.bf16.msra.mxu0 0
      %2145 = vmatprep.subr.bf16.mxu0 0
      %2146 = vmatpush1.bf16.msra.mxu0 0
      %2147 = vmatprep.subr.bf16.mxu0 0
      %2148 = vmatpush1.bf16.msra.mxu0 0
      %2149 = vmatprep.subr.bf16.mxu0 0
      %2150 = vmatpush1.bf16.msra.mxu0 0
      %2151 = vmatprep.subr.bf16.mxu0 0
      %2152 = vmatpush1.bf16.msra.mxu0 0
      %2153 = vmatprep.subr.bf16.mxu0 0
      %2154 = vmatpush1.bf16.msra.mxu0 0
      %2155 = vmatprep.subr.bf16.mxu0 0
      %2156 = vmatpush1.bf16.msra.mxu0 0
      %2157 = vmatprep.subr.bf16.mxu0 0
      %2158 = vmatpush1.bf16.msra.mxu0 0
      %2159 = vmatprep.mubr.bf16.mxu0 0
      %2160 = vmatmul.mubr.bf16.gmra.mrb[0].mxu0 %v2122
      %v2161 = vpop.f32.mrb[0].mxu0
      %v2162 = vadd.f32 0.0, %v2161
      %v2163 = vpop.f32.mrb[0].mxu0
      %v2164 = vpop.f32.mrb[0].mxu0
      %v2165 = vpop.f32.mrb[0].mxu0
      %2166 = vdwg.mxu0
      %2167 = vrot.lane.b32.xlu0 %v951, 112
      %v2168 = vpop.permute.xlu0 %2167
      %v2170 = vsel %vm953, %v2069, 0
      %v2173 = vsel %vm1193, %v2168, 0
      %2175 = vmatprep.subr.bf16.mxu0 0
      %2176 = vmatpush1.bf16.msra.mxu0 %v2173
      %2177 = vmatprep.subr.bf16.mxu0 0
      %2178 = vmatpush1.bf16.msra.mxu0 0
      %2179 = vmatprep.subr.bf16.mxu0 0
      %2180 = vmatpush1.bf16.msra.mxu0 0
      %2181 = vmatprep.subr.bf16.mxu0 0
      %2182 = vmatpush1.bf16.msra.mxu0 0
      %2183 = vmatprep.subr.bf16.mxu0 0
      %2184 = vmatpush1.bf16.msra.mxu0 0
      %2185 = vmatprep.subr.bf16.mxu0 0
      %2186 = vmatpush1.bf16.msra.mxu0 0
      %2187 = vmatprep.subr.bf16.mxu0 0
      %2188 = vmatpush1.bf16.msra.mxu0 0
      %2189 = vmatprep.subr.bf16.mxu0 0
      %2190 = vmatpush1.bf16.msra.mxu0 0
      %2191 = vmatprep.subr.bf16.mxu0 0
      %2192 = vmatpush1.bf16.msra.mxu0 0
      %2193 = vmatprep.subr.bf16.mxu0 0
      %2194 = vmatpush1.bf16.msra.mxu0 0
      %2195 = vmatprep.subr.bf16.mxu0 0
      %2196 = vmatpush1.bf16.msra.mxu0 0
      %2197 = vmatprep.subr.bf16.mxu0 0
      %2198 = vmatpush1.bf16.msra.mxu0 0
      %2199 = vmatprep.subr.bf16.mxu0 0
      %2200 = vmatpush1.bf16.msra.mxu0 0
      %2201 = vmatprep.subr.bf16.mxu0 0
      %2202 = vmatpush1.bf16.msra.mxu0 0
      %2203 = vmatprep.subr.bf16.mxu0 0
      %2204 = vmatpush1.bf16.msra.mxu0 0
      %2205 = vmatprep.subr.bf16.mxu0 0
      %2206 = vmatpush1.bf16.msra.mxu0 0
      %2207 = vmatprep.mubr.bf16.mxu0 0
      %2208 = vmatmul.mubr.bf16.gmra.mrb[0].mxu0 %v2170
      %v2209 = vpop.f32.mrb[0].mxu0
      %v2210 = vadd.f32 0.0, %v2209
      %v2211 = vpop.f32.mrb[0].mxu0
      %v2212 = vpop.f32.mrb[0].mxu0
      %v2213 = vpop.f32.mrb[0].mxu0
      %2214 = vdwg.mxu0
      %2215 = vrot.lane.b32.xlu0 %v952, 112
      %v2216 = vpop.permute.xlu0 %2215
      %v2218 = vsel %vm953, %v2070, 0
      %v2221 = vsel %vm1193, %v2216, 0
      %2223 = vmatprep.subr.bf16.mxu0 0
      %2224 = vmatpush1.bf16.msra.mxu0 %v2221
      %2225 = vmatprep.subr.bf16.mxu0 0
      %2226 = vmatpush1.bf16.msra.mxu0 0
      %2227 = vmatprep.subr.bf16.mxu0 0
      %2228 = vmatpush1.bf16.msra.mxu0 0
      %2229 = vmatprep.subr.bf16.mxu0 0
      %2230 = vmatpush1.bf16.msra.mxu0 0
      %2231 = vmatprep.subr.bf16.mxu0 0
      %2232 = vmatpush1.bf16.msra.mxu0 0
      %2233 = vmatprep.subr.bf16.mxu0 0
      %2234 = vmatpush1.bf16.msra.mxu0 0
      %2235 = vmatprep.subr.bf16.mxu0 0
      %2236 = vmatpush1.bf16.msra.mxu0 0
      %2237 = vmatprep.subr.bf16.mxu0 0
      %2238 = vmatpush1.bf16.msra.mxu0 0
      %2239 = vmatprep.subr.bf16.mxu0 0
      %2240 = vmatpush1.bf16.msra.mxu0 0
      %2241 = vmatprep.subr.bf16.mxu0 0
      %2242 = vmatpush1.bf16.msra.mxu0 0
      %2243 = vmatprep.subr.bf16.mxu0 0
      %2244 = vmatpush1.bf16.msra.mxu0 0
      %2245 = vmatprep.subr.bf16.mxu0 0
      %2246 = vmatpush1.bf16.msra.mxu0 0
      %2247 = vmatprep.subr.bf16.mxu0 0
      %2248 = vmatpush1.bf16.msra.mxu0 0
      %2249 = vmatprep.subr.bf16.mxu0 0
      %2250 = vmatpush1.bf16.msra.mxu0 0
      %2251 = vmatprep.subr.bf16.mxu0 0
      %2252 = vmatpush1.bf16.msra.mxu0 0
      %2253 = vmatprep.subr.bf16.mxu0 0
      %2254 = vmatpush1.bf16.msra.mxu0 0
      %2255 = vmatprep.mubr.bf16.mxu0 0
      %2256 = vmatmul.mubr.bf16.gmra.mrb[0].mxu0 %v2218
      %v2257 = vpop.f32.mrb[0].mxu0
      %v2258 = vadd.f32 0.0, %v2257
      %v2259 = vpop.f32.mrb[0].mxu0
      %v2260 = vpop.f32.mrb[0].mxu0
      %v2261 = vpop.f32.mrb[0].mxu0
      %2262 = vdwg.mxu0
      %2263 = vrot.lane.b32.xlu0 %v929, 104
      %v2264 = vpop.permute.xlu0 %2263
      %2265 = vrot.lane.b32.xlu0 %v939, 104
      %v2266 = vpop.permute.xlu0 %2265
      %v2268 = vsel %vm953, %v2264, 0
      %v2271 = vsel %vm953, %v2266, 0
      %2273 = vmatprep.subr.bf16.mxu0 0
      %2274 = vmatpush1.bf16.xpose.msra.mxu0 %v2271
      %2275 = vmatprep.subr.bf16.mxu0 0
      %2276 = vmatpush1.bf16.xpose.msra.mxu0 0
      %2277 = vmatprep.subr.bf16.mxu0 0
      %2278 = vmatpush1.bf16.xpose.msra.mxu0 0
      %2279 = vmatprep.subr.bf16.mxu0 0
      %2280 = vmatpush1.bf16.xpose.msra.mxu0 0
      %2281 = vmatprep.subr.bf16.mxu0 0
      %2282 = vmatpush1.bf16.xpose.msra.mxu0 0
      %2283 = vmatprep.subr.bf16.mxu0 0
      %2284 = vmatpush1.bf16.xpose.msra.mxu0 0
      %2285 = vmatprep.subr.bf16.mxu0 0
      %2286 = vmatpush1.bf16.xpose.msra.mxu0 0
      %2287 = vmatprep.subr.bf16.mxu0 0
      %2288 = vmatpush1.bf16.xpose.msra.mxu0 0
      %2289 = vmatprep.subr.bf16.mxu0 0
      %2290 = vmatpush1.bf16.xpose.msra.mxu0 0
      %2291 = vmatprep.subr.bf16.mxu0 0
      %2292 = vmatpush1.bf16.xpose.msra.mxu0 0
      %2293 = vmatprep.subr.bf16.mxu0 0
      %2294 = vmatpush1.bf16.xpose.msra.mxu0 0
      %2295 = vmatprep.subr.bf16.mxu0 0
      %2296 = vmatpush1.bf16.xpose.msra.mxu0 0
      %2297 = vmatprep.subr.bf16.mxu0 0
      %2298 = vmatpush1.bf16.xpose.msra.mxu0 0
      %2299 = vmatprep.subr.bf16.mxu0 0
      %2300 = vmatpush1.bf16.xpose.msra.mxu0 0
      %2301 = vmatprep.subr.bf16.mxu0 0
      %2302 = vmatpush1.bf16.xpose.msra.mxu0 0
      %2303 = vmatprep.subr.bf16.mxu0 0
      %2304 = vmatpush1.bf16.xpose.msra.mxu0 0
      %2305 = vmatprep.mubr.bf16.mxu0 0
      %2306 = vmatmul.mubr.bf16.gmra.mrb[0].mxu0 %v2268
      %v2307 = vpop.f32.mrb[0].mxu0
      %v2308 = vadd.f32 0.0, %v2307
      %v2309 = vpop.f32.mrb[0].mxu0
      %v2310 = vpop.f32.mrb[0].mxu0
      %v2311 = vpop.f32.mrb[0].mxu0
      %2312 = vdwg.mxu0
      %2313 = vrot.lane.b32.xlu0 %v930, 104
      %v2314 = vpop.permute.xlu0 %2313
      %2315 = vrot.lane.b32.xlu0 %v940, 104
      %v2316 = vpop.permute.xlu0 %2315
      %v2318 = vsel %vm953, %v2314, 0
      %v2321 = vsel %vm953, %v2316, 0
      %2323 = vmatprep.subr.bf16.mxu0 0
      %2324 = vmatpush1.bf16.xpose.msra.mxu0 %v2321
      %2325 = vmatprep.subr.bf16.mxu0 0
      %2326 = vmatpush1.bf16.xpose.msra.mxu0 0
      %2327 = vmatprep.subr.bf16.mxu0 0
      %2328 = vmatpush1.bf16.xpose.msra.mxu0 0
      %2329 = vmatprep.subr.bf16.mxu0 0
      %2330 = vmatpush1.bf16.xpose.msra.mxu0 0
      %2331 = vmatprep.subr.bf16.mxu0 0
      %2332 = vmatpush1.bf16.xpose.msra.mxu0 0
      %2333 = vmatprep.subr.bf16.mxu0 0
      %2334 = vmatpush1.bf16.xpose.msra.mxu0 0
      %2335 = vmatprep.subr.bf16.mxu0 0
      %2336 = vmatpush1.bf16.xpose.msra.mxu0 0
      %2337 = vmatprep.subr.bf16.mxu0 0
      %2338 = vmatpush1.bf16.xpose.msra.mxu0 0
      %2339 = vmatprep.subr.bf16.mxu0 0
      %2340 = vmatpush1.bf16.xpose.msra.mxu0 0
      %2341 = vmatprep.subr.bf16.mxu0 0
      %2342 = vmatpush1.bf16.xpose.msra.mxu0 0
      %2343 = vmatprep.subr.bf16.mxu0 0
      %2344 = vmatpush1.bf16.xpose.msra.mxu0 0
      %2345 = vmatprep.subr.bf16.mxu0 0
      %2346 = vmatpush1.bf16.xpose.msra.mxu0 0
      %2347 = vmatprep.subr.bf16.mxu0 0
      %2348 = vmatpush1.bf16.xpose.msra.mxu0 0
      %2349 = vmatprep.subr.bf16.mxu0 0
      %2350 = vmatpush1.bf16.xpose.msra.mxu0 0
      %2351 = vmatprep.subr.bf16.mxu0 0
      %2352 = vmatpush1.bf16.xpose.msra.mxu0 0
      %2353 = vmatprep.subr.bf16.mxu0 0
      %2354 = vmatpush1.bf16.xpose.msra.mxu0 0
      %2355 = vmatprep.mubr.bf16.mxu0 0
      %2356 = vmatmul.mubr.bf16.gmra.mrb[0].mxu0 %v2318
      %v2357 = vpop.f32.mrb[0].mxu0
      %v2358 = vadd.f32 0.0, %v2357
      %v2359 = vpop.f32.mrb[0].mxu0
      %v2360 = vpop.f32.mrb[0].mxu0
      %v2361 = vpop.f32.mrb[0].mxu0
      %2362 = vdwg.mxu0
      %2363 = vrot.lane.b32.xlu0 %v931, 104
      %v2364 = vpop.permute.xlu0 %2363
      %2365 = vrot.lane.b32.xlu0 %v941, 104
      %v2366 = vpop.permute.xlu0 %2365
      %v2368 = vsel %vm953, %v2364, 0
      %v2371 = vsel %vm953, %v2366, 0
      %2373 = vmatprep.subr.bf16.mxu0 0
      %2374 = vmatpush1.bf16.xpose.msra.mxu0 %v2371
      %2375 = vmatprep.subr.bf16.mxu0 0
      %2376 = vmatpush1.bf16.xpose.msra.mxu0 0
      %2377 = vmatprep.subr.bf16.mxu0 0
      %2378 = vmatpush1.bf16.xpose.msra.mxu0 0
      %2379 = vmatprep.subr.bf16.mxu0 0
      %2380 = vmatpush1.bf16.xpose.msra.mxu0 0
      %2381 = vmatprep.subr.bf16.mxu0 0
      %2382 = vmatpush1.bf16.xpose.msra.mxu0 0
      %2383 = vmatprep.subr.bf16.mxu0 0
      %2384 = vmatpush1.bf16.xpose.msra.mxu0 0
      %2385 = vmatprep.subr.bf16.mxu0 0
      %2386 = vmatpush1.bf16.xpose.msra.mxu0 0
      %2387 = vmatprep.subr.bf16.mxu0 0
      %2388 = vmatpush1.bf16.xpose.msra.mxu0 0
      %2389 = vmatprep.subr.bf16.mxu0 0
      %2390 = vmatpush1.bf16.xpose.msra.mxu0 0
      %2391 = vmatprep.subr.bf16.mxu0 0
      %2392 = vmatpush1.bf16.xpose.msra.mxu0 0
      %2393 = vmatprep.subr.bf16.mxu0 0
      %2394 = vmatpush1.bf16.xpose.msra.mxu0 0
      %2395 = vmatprep.subr.bf16.mxu0 0
      %2396 = vmatpush1.bf16.xpose.msra.mxu0 0
      %2397 = vmatprep.subr.bf16.mxu0 0
      %2398 = vmatpush1.bf16.xpose.msra.mxu0 0
      %2399 = vmatprep.subr.bf16.mxu0 0
      %2400 = vmatpush1.bf16.xpose.msra.mxu0 0
      %2401 = vmatprep.subr.bf16.mxu0 0
      %2402 = vmatpush1.bf16.xpose.msra.mxu0 0
      %2403 = vmatprep.subr.bf16.mxu0 0
      %2404 = vmatpush1.bf16.xpose.msra.mxu0 0
      %2405 = vmatprep.mubr.bf16.mxu0 0
      %2406 = vmatmul.mubr.bf16.gmra.mrb[0].mxu0 %v2368
      %v2407 = vpop.f32.mrb[0].mxu0
      %v2408 = vadd.f32 0.0, %v2407
      %v2409 = vpop.f32.mrb[0].mxu0
      %v2410 = vpop.f32.mrb[0].mxu0
      %v2411 = vpop.f32.mrb[0].mxu0
      %2412 = vdwg.mxu0
      %2413 = vrot.lane.b32.xlu0 %v932, 104
      %v2414 = vpop.permute.xlu0 %2413
      %2415 = vrot.lane.b32.xlu0 %v942, 104
      %v2416 = vpop.permute.xlu0 %2415
      %v2418 = vsel %vm953, %v2414, 0
      %v2421 = vsel %vm953, %v2416, 0
      %2423 = vmatprep.subr.bf16.mxu0 0
      %2424 = vmatpush1.bf16.xpose.msra.mxu0 %v2421
      %2425 = vmatprep.subr.bf16.mxu0 0
      %2426 = vmatpush1.bf16.xpose.msra.mxu0 0
      %2427 = vmatprep.subr.bf16.mxu0 0
      %2428 = vmatpush1.bf16.xpose.msra.mxu0 0
      %2429 = vmatprep.subr.bf16.mxu0 0
      %2430 = vmatpush1.bf16.xpose.msra.mxu0 0
      %2431 = vmatprep.subr.bf16.mxu0 0
      %2432 = vmatpush1.bf16.xpose.msra.mxu0 0
      %2433 = vmatprep.subr.bf16.mxu0 0
      %2434 = vmatpush1.bf16.xpose.msra.mxu0 0
      %2435 = vmatprep.subr.bf16.mxu0 0
      %2436 = vmatpush1.bf16.xpose.msra.mxu0 0
      %2437 = vmatprep.subr.bf16.mxu0 0
      %2438 = vmatpush1.bf16.xpose.msra.mxu0 0
      %2439 = vmatprep.subr.bf16.mxu0 0
      %2440 = vmatpush1.bf16.xpose.msra.mxu0 0
      %2441 = vmatprep.subr.bf16.mxu0 0
      %2442 = vmatpush1.bf16.xpose.msra.mxu0 0
      %2443 = vmatprep.subr.bf16.mxu0 0
      %2444 = vmatpush1.bf16.xpose.msra.mxu0 0
      %2445 = vmatprep.subr.bf16.mxu0 0
      %2446 = vmatpush1.bf16.xpose.msra.mxu0 0
      %2447 = vmatprep.subr.bf16.mxu0 0
      %2448 = vmatpush1.bf16.xpose.msra.mxu0 0
      %2449 = vmatprep.subr.bf16.mxu0 0
      %2450 = vmatpush1.bf16.xpose.msra.mxu0 0
      %2451 = vmatprep.subr.bf16.mxu0 0
      %2452 = vmatpush1.bf16.xpose.msra.mxu0 0
      %2453 = vmatprep.subr.bf16.mxu0 0
      %2454 = vmatpush1.bf16.xpose.msra.mxu0 0
      %2455 = vmatprep.mubr.bf16.mxu0 0
      %2456 = vmatmul.mubr.bf16.gmra.mrb[0].mxu0 %v2418
      %v2457 = vpop.f32.mrb[0].mxu0
      %v2458 = vadd.f32 0.0, %v2457
      %v2459 = vpop.f32.mrb[0].mxu0
      %v2460 = vpop.f32.mrb[0].mxu0
      %v2461 = vpop.f32.mrb[0].mxu0
      %2462 = vdwg.mxu0
      %v2463 = vmul.f32 %v2308, 0.35355338
      %v2464 = vmul.f32 %v2358, 0.35355338
      %v2465 = vmul.f32 %v2408, 0.35355338
      %v2466 = vmul.f32 %v2458, 0.35355338
      %v2467 = vsel %vm953, %v2463, -inf
      %2468 = vmax.xlane.f32.xlu0 %v2467
      %v2469 = vpop.xlane.xlu0 %2468
      %v2470 = vsel %vm953, %v2464, -inf
      %2471 = vmax.xlane.f32.xlu0 %v2470
      %v2472 = vpop.xlane.xlu0 %2471
      %v2473 = vsel %vm953, %v2465, -inf
      %2474 = vmax.xlane.f32.xlu0 %v2473
      %v2475 = vpop.xlane.xlu0 %2474
      %v2476 = vsel %vm953, %v2466, -inf
      %2477 = vmax.xlane.f32.xlu0 %v2476
      %v2478 = vpop.xlane.xlu0 %2477
      %v2479 = vsub.f32 %v2463, %v2469
      %v2480 = vsub.f32 %v2464, %v2472
      %v2481 = vsub.f32 %v2465, %v2475
      %v2482 = vsub.f32 %v2466, %v2478
      %v2483 = vmul.f32 %v2479, 1.442695
      %v2484 = vpow.pop %v2483
      %v2485 = vmul.f32 %v2480, 1.442695
      %v2486 = vpow.pop %v2485
      %v2487 = vmul.f32 %v2481, 1.442695
      %v2488 = vpow.pop %v2487
      %v2489 = vmul.f32 %v2482, 1.442695
      %v2490 = vpow.pop %v2489
      %v2491 = vsel %vm953, %v2484, 0.0
      %2492 = vadd.xlane.f32.xlu0 %v2491
      %v2493 = vpop.xlane.xlu0 %2492
      %v2494 = vsel %vm953, %v2486, 0.0
      %2495 = vadd.xlane.f32.xlu0 %v2494
      %v2496 = vpop.xlane.xlu0 %2495
      %v2497 = vsel %vm953, %v2488, 0.0
      %2498 = vadd.xlane.f32.xlu0 %v2497
      %v2499 = vpop.xlane.xlu0 %2498
      %v2500 = vsel %vm953, %v2490, 0.0
      %2501 = vadd.xlane.f32.xlu0 %v2500
      %v2502 = vpop.xlane.xlu0 %2501
      %v2503 = vrcp.pop %v2493
      %v2504 = vrcp.pop %v2496
      %v2505 = vrcp.pop %v2499
      %v2506 = vrcp.pop %v2502
      %v2507 = vmul.f32 %v2484, %v2503
      %v2508 = vmul.f32 %v2486, %v2504
      %v2509 = vmul.f32 %v2488, %v2505
      %v2510 = vmul.f32 %v2490, %v2506
      %v2511 = vpack.c.bf16 %v2507, %v2507
      %v2512 = vpack.c.bf16 %v2508, %v2508
      %v2513 = vpack.c.bf16 %v2509, %v2509
      %v2514 = vpack.c.bf16 %v2510, %v2510
      %2515 = vrot.lane.b32.xlu0 %v949, 104
      %v2516 = vpop.permute.xlu0 %2515
      %v2518 = vsel %vm953, %v2511, 0
      %v2521 = vsel %vm1193, %v2516, 0
      %2523 = vmatprep.subr.bf16.mxu0 0
      %2524 = vmatpush1.bf16.msra.mxu0 %v2521
      %2525 = vmatprep.subr.bf16.mxu0 0
      %2526 = vmatpush1.bf16.msra.mxu0 0
      %2527 = vmatprep.subr.bf16.mxu0 0
      %2528 = vmatpush1.bf16.msra.mxu0 0
      %2529 = vmatprep.subr.bf16.mxu0 0
      %2530 = vmatpush1.bf16.msra.mxu0 0
      %2531 = vmatprep.subr.bf16.mxu0 0
      %2532 = vmatpush1.bf16.msra.mxu0 0
      %2533 = vmatprep.subr.bf16.mxu0 0
      %2534 = vmatpush1.bf16.msra.mxu0 0
      %2535 = vmatprep.subr.bf16.mxu0 0
      %2536 = vmatpush1.bf16.msra.mxu0 0
      %2537 = vmatprep.subr.bf16.mxu0 0
      %2538 = vmatpush1.bf16.msra.mxu0 0
      %2539 = vmatprep.subr.bf16.mxu0 0
      %2540 = vmatpush1.bf16.msra.mxu0 0
      %2541 = vmatprep.subr.bf16.mxu0 0
      %2542 = vmatpush1.bf16.msra.mxu0 0
      %2543 = vmatprep.subr.bf16.mxu0 0
      %2544 = vmatpush1.bf16.msra.mxu0 0
      %2545 = vmatprep.subr.bf16.mxu0 0
      %2546 = vmatpush1.bf16.msra.mxu0 0
      %2547 = vmatprep.subr.bf16.mxu0 0
      %2548 = vmatpush1.bf16.msra.mxu0 0
      %2549 = vmatprep.subr.bf16.mxu0 0
      %2550 = vmatpush1.bf16.msra.mxu0 0
      %2551 = vmatprep.subr.bf16.mxu0 0
      %2552 = vmatpush1.bf16.msra.mxu0 0
      %2553 = vmatprep.subr.bf16.mxu0 0
      %2554 = vmatpush1.bf16.msra.mxu0 0
      %2555 = vmatprep.mubr.bf16.mxu0 0
      %2556 = vmatmul.mubr.bf16.gmra.mrb[0].mxu0 %v2518
      %v2557 = vpop.f32.mrb[0].mxu0
      %v2558 = vadd.f32 0.0, %v2557
      %v2559 = vpop.f32.mrb[0].mxu0
      %v2560 = vpop.f32.mrb[0].mxu0
      %v2561 = vpop.f32.mrb[0].mxu0
      %2562 = vdwg.mxu0
      %2563 = vrot.lane.b32.xlu0 %v950, 104
      %v2564 = vpop.permute.xlu0 %2563
      %v2566 = vsel %vm953, %v2512, 0
      %v2569 = vsel %vm1193, %v2564, 0
      %2571 = vmatprep.subr.bf16.mxu0 0
      %2572 = vmatpush1.bf16.msra.mxu0 %v2569
      %2573 = vmatprep.subr.bf16.mxu0 0
      %2574 = vmatpush1.bf16.msra.mxu0 0
      %2575 = vmatprep.subr.bf16.mxu0 0
      %2576 = vmatpush1.bf16.msra.mxu0 0
      %2577 = vmatprep.subr.bf16.mxu0 0
      %2578 = vmatpush1.bf16.msra.mxu0 0
      %2579 = vmatprep.subr.bf16.mxu0 0
      %2580 = vmatpush1.bf16.msra.mxu0 0
      %2581 = vmatprep.subr.bf16.mxu0 0
      %2582 = vmatpush1.bf16.msra.mxu0 0
      %2583 = vmatprep.subr.bf16.mxu0 0
      %2584 = vmatpush1.bf16.msra.mxu0 0
      %2585 = vmatprep.subr.bf16.mxu0 0
      %2586 = vmatpush1.bf16.msra.mxu0 0
      %2587 = vmatprep.subr.bf16.mxu0 0
      %2588 = vmatpush1.bf16.msra.mxu0 0
      %2589 = vmatprep.subr.bf16.mxu0 0
      %2590 = vmatpush1.bf16.msra.mxu0 0
      %2591 = vmatprep.subr.bf16.mxu0 0
      %2592 = vmatpush1.bf16.msra.mxu0 0
      %2593 = vmatprep.subr.bf16.mxu0 0
      %2594 = vmatpush1.bf16.msra.mxu0 0
      %2595 = vmatprep.subr.bf16.mxu0 0
      %2596 = vmatpush1.bf16.msra.mxu0 0
      %2597 = vmatprep.subr.bf16.mxu0 0
      %2598 = vmatpush1.bf16.msra.mxu0 0
      %2599 = vmatprep.subr.bf16.mxu0 0
      %2600 = vmatpush1.bf16.msra.mxu0 0
      %2601 = vmatprep.subr.bf16.mxu0 0
      %2602 = vmatpush1.bf16.msra.mxu0 0
      %2603 = vmatprep.mubr.bf16.mxu0 0
      %2604 = vmatmul.mubr.bf16.gmra.mrb[0].mxu0 %v2566
      %v2605 = vpop.f32.mrb[0].mxu0
      %v2606 = vadd.f32 0.0, %v2605
      %v2607 = vpop.f32.mrb[0].mxu0
      %v2608 = vpop.f32.mrb[0].mxu0
      %v2609 = vpop.f32.mrb[0].mxu0
      %2610 = vdwg.mxu0
      %2611 = vrot.lane.b32.xlu0 %v951, 104
      %v2612 = vpop.permute.xlu0 %2611
      %v2614 = vsel %vm953, %v2513, 0
      %v2617 = vsel %vm1193, %v2612, 0
      %2619 = vmatprep.subr.bf16.mxu0 0
      %2620 = vmatpush1.bf16.msra.mxu0 %v2617
      %2621 = vmatprep.subr.bf16.mxu0 0
      %2622 = vmatpush1.bf16.msra.mxu0 0
      %2623 = vmatprep.subr.bf16.mxu0 0
      %2624 = vmatpush1.bf16.msra.mxu0 0
      %2625 = vmatprep.subr.bf16.mxu0 0
      %2626 = vmatpush1.bf16.msra.mxu0 0
      %2627 = vmatprep.subr.bf16.mxu0 0
      %2628 = vmatpush1.bf16.msra.mxu0 0
      %2629 = vmatprep.subr.bf16.mxu0 0
      %2630 = vmatpush1.bf16.msra.mxu0 0
      %2631 = vmatprep.subr.bf16.mxu0 0
      %2632 = vmatpush1.bf16.msra.mxu0 0
      %2633 = vmatprep.subr.bf16.mxu0 0
      %2634 = vmatpush1.bf16.msra.mxu0 0
      %2635 = vmatprep.subr.bf16.mxu0 0
      %2636 = vmatpush1.bf16.msra.mxu0 0
      %2637 = vmatprep.subr.bf16.mxu0 0
      %2638 = vmatpush1.bf16.msra.mxu0 0
      %2639 = vmatprep.subr.bf16.mxu0 0
      %2640 = vmatpush1.bf16.msra.mxu0 0
      %2641 = vmatprep.subr.bf16.mxu0 0
      %2642 = vmatpush1.bf16.msra.mxu0 0
      %2643 = vmatprep.subr.bf16.mxu0 0
      %2644 = vmatpush1.bf16.msra.mxu0 0
      %2645 = vmatprep.subr.bf16.mxu0 0
      %2646 = vmatpush1.bf16.msra.mxu0 0
      %2647 = vmatprep.subr.bf16.mxu0 0
      %2648 = vmatpush1.bf16.msra.mxu0 0
      %2649 = vmatprep.subr.bf16.mxu0 0
      %2650 = vmatpush1.bf16.msra.mxu0 0
      %2651 = vmatprep.mubr.bf16.mxu0 0
      %2652 = vmatmul.mubr.bf16.gmra.mrb[0].mxu0 %v2614
      %v2653 = vpop.f32.mrb[0].mxu0
      %v2654 = vadd.f32 0.0, %v2653
      %v2655 = vpop.f32.mrb[0].mxu0
      %v2656 = vpop.f32.mrb[0].mxu0
      %v2657 = vpop.f32.mrb[0].mxu0
      %2658 = vdwg.mxu0
      %2659 = vrot.lane.b32.xlu0 %v952, 104
      %v2660 = vpop.permute.xlu0 %2659
      %v2662 = vsel %vm953, %v2514, 0
      %v2665 = vsel %vm1193, %v2660, 0
      %2667 = vmatprep.subr.bf16.mxu0 0
      %2668 = vmatpush1.bf16.msra.mxu0 %v2665
      %2669 = vmatprep.subr.bf16.mxu0 0
      %2670 = vmatpush1.bf16.msra.mxu0 0
      %2671 = vmatprep.subr.bf16.mxu0 0
      %2672 = vmatpush1.bf16.msra.mxu0 0
      %2673 = vmatprep.subr.bf16.mxu0 0
      %2674 = vmatpush1.bf16.msra.mxu0 0
      %2675 = vmatprep.subr.bf16.mxu0 0
      %2676 = vmatpush1.bf16.msra.mxu0 0
      %2677 = vmatprep.subr.bf16.mxu0 0
      %2678 = vmatpush1.bf16.msra.mxu0 0
      %2679 = vmatprep.subr.bf16.mxu0 0
      %2680 = vmatpush1.bf16.msra.mxu0 0
      %2681 = vmatprep.subr.bf16.mxu0 0
      %2682 = vmatpush1.bf16.msra.mxu0 0
      %2683 = vmatprep.subr.bf16.mxu0 0
      %2684 = vmatpush1.bf16.msra.mxu0 0
      %2685 = vmatprep.subr.bf16.mxu0 0
      %2686 = vmatpush1.bf16.msra.mxu0 0
      %2687 = vmatprep.subr.bf16.mxu0 0
      %2688 = vmatpush1.bf16.msra.mxu0 0
      %2689 = vmatprep.subr.bf16.mxu0 0
      %2690 = vmatpush1.bf16.msra.mxu0 0
      %2691 = vmatprep.subr.bf16.mxu0 0
      %2692 = vmatpush1.bf16.msra.mxu0 0
      %2693 = vmatprep.subr.bf16.mxu0 0
      %2694 = vmatpush1.bf16.msra.mxu0 0
      %2695 = vmatprep.subr.bf16.mxu0 0
      %2696 = vmatpush1.bf16.msra.mxu0 0
      %2697 = vmatprep.subr.bf16.mxu0 0
      %2698 = vmatpush1.bf16.msra.mxu0 0
      %2699 = vmatprep.mubr.bf16.mxu0 0
      %2700 = vmatmul.mubr.bf16.gmra.mrb[0].mxu0 %v2662
      %v2701 = vpop.f32.mrb[0].mxu0
      %v2702 = vadd.f32 0.0, %v2701
      %v2703 = vpop.f32.mrb[0].mxu0
      %v2704 = vpop.f32.mrb[0].mxu0
      %v2705 = vpop.f32.mrb[0].mxu0
      %2706 = vdwg.mxu0
      %2711 = vrot.lane.b32.xlu0 %v1670, 8
      %v2712 = vpop.permute.xlu0 %2711
      %2713 = vrot.lane.b32.xlu0 %v1718, 8
      %v2714 = vpop.permute.xlu0 %2713
      %2715 = vrot.lane.b32.xlu0 %v1766, 8
      %v2716 = vpop.permute.xlu0 %2715
      %2717 = vrot.lane.b32.xlu0 %v1814, 8
      %v2718 = vpop.permute.xlu0 %2717
      %2727 = vrot.lane.b32.xlu0 %v2114, 16
      %v2728 = vpop.permute.xlu0 %2727
      %2729 = vrot.lane.b32.xlu0 %v2162, 16
      %v2730 = vpop.permute.xlu0 %2729
      %2731 = vrot.lane.b32.xlu0 %v2210, 16
      %v2732 = vpop.permute.xlu0 %2731
      %2733 = vrot.lane.b32.xlu0 %v2258, 16
      %v2734 = vpop.permute.xlu0 %2733
      %2743 = vrot.lane.b32.xlu0 %v2558, 24
      %v2744 = vpop.permute.xlu0 %2743
      %2745 = vrot.lane.b32.xlu0 %v2606, 24
      %v2746 = vpop.permute.xlu0 %2745
      %2747 = vrot.lane.b32.xlu0 %v2654, 24
      %v2748 = vpop.permute.xlu0 %2747
      %2749 = vrot.lane.b32.xlu0 %v2702, 24
      %v2750 = vpop.permute.xlu0 %2749
      %v2755 = vsel %vm953, %v1232, %v2712
      %v2756 = vsel %vm953, %v1278, %v2714
      %v2757 = vsel %vm953, %v1324, %v2716
      %v2758 = vsel %vm953, %v1370, %v2718
      %vm2759 = vcmask 130048
      %v2760 = vsel %vm2759, %v2755, %v2728
      %v2761 = vsel %vm2759, %v2756, %v2730
      %v2762 = vsel %vm2759, %v2757, %v2732
      %v2763 = vsel %vm2759, %v2758, %v2734
      %vm2764 = vcmask 195584
      %v2765 = vsel %vm2764, %v2760, %v2744
      %v2766 = vsel %vm2764, %v2761, %v2746
      %v2767 = vsel %vm2764, %v2762, %v2748
      %v2768 = vsel %vm2764, %v2763, %v2750
      %v2769 = vpack.c.bf16 %v2766, %v2765
      %v2770 = vpack.c.bf16 %v2768, %v2767
      %v2771 = vld [vmem:[%s10] sm:$0xf]
      %v2772 = vld [vmem:[%s10 + $0x4] sm:$0xf]
      %v2773 = vld [vmem:[%s10 + $0x8] sm:$0xf]
      %v2774 = vld [vmem:[%s10 + $0xc] sm:$0xf]
      %v2775 = vld [vmem:[%s11] sm:$0x1]
      %v2777 = vlaneseq
      %v2778 = vshrl.u32 %v2777, 7
      %v2779 = vsub.s32 0, %v2778
      %v2780 = vrot.slane %v2775, %v2779
      %v2786 = vunpack.c.l.b16 %v2771
      %v2787 = vunpack.c.l.b16 %v2772
      %v2788 = vunpack.c.l.b16 %v2773
      %v2789 = vunpack.c.l.b16 %v2774
      %v2790 = vpack.c.b16 %v2787, %v2786
      %v2791 = vpack.c.b16 %v2789, %v2788
      %v2795 = vsel %vm717, %v2769, 0
      %v2798 = vsel %vm717, %v2770, 0
      %2800 = vmatprep.subr.bf16.mxu0 0
      %2801 = vmatpush1.bf16.msra.mxu0 %v2790
      %2802 = vmatprep.subr.bf16.mxu0 0
      %2803 = vmatpush1.bf16.msra.mxu0 %v2791
      %2804 = vmatprep.subr.bf16.mxu0 0
      %2805 = vmatpush1.bf16.msra.mxu0 0
      %2806 = vmatprep.subr.bf16.mxu0 0
      %2807 = vmatpush1.bf16.msra.mxu0 0
      %2808 = vmatprep.subr.bf16.mxu0 0
      %2809 = vmatpush1.bf16.msra.mxu0 0
      %2810 = vmatprep.subr.bf16.mxu0 0
      %2811 = vmatpush1.bf16.msra.mxu0 0
      %2812 = vmatprep.subr.bf16.mxu0 0
      %2813 = vmatpush1.bf16.msra.mxu0 0
      %2814 = vmatprep.subr.bf16.mxu0 0
      %2815 = vmatpush1.bf16.msra.mxu0 0
      %2816 = vmatprep.subr.bf16.mxu0 0
      %2817 = vmatpush1.bf16.msra.mxu0 0
      %2818 = vmatprep.subr.bf16.mxu0 0
      %2819 = vmatpush1.bf16.msra.mxu0 0
      %2820 = vmatprep.subr.bf16.mxu0 0
      %2821 = vmatpush1.bf16.msra.mxu0 0
      %2822 = vmatprep.subr.bf16.mxu0 0
      %2823 = vmatpush1.bf16.msra.mxu0 0
      %2824 = vmatprep.subr.bf16.mxu0 0
      %2825 = vmatpush1.bf16.msra.mxu0 0
      %2826 = vmatprep.subr.bf16.mxu0 0
      %2827 = vmatpush1.bf16.msra.mxu0 0
      %2828 = vmatprep.subr.bf16.mxu0 0
      %2829 = vmatpush1.bf16.msra.mxu0 0
      %2830 = vmatprep.subr.bf16.mxu0 0
      %2831 = vmatpush1.bf16.msra.mxu0 0
      %2832 = vmatprep.mubr.bf16.mxu0 0
      %2833 = vmatmul.mubr.bf16.gmra.mrb[0].mxu0 %v2795
      %v2834 = vpop.f32.mrb[0].mxu0
      %v2835 = vadd.f32 %v2780, %v2834
      %v2836 = vpop.f32.mrb[0].mxu0
      %v2837 = vpop.f32.mrb[0].mxu0
      %v2838 = vadd.f32 %v2780, %v2837
      %v2839 = vpop.f32.mrb[0].mxu0
      %2840 = vmatprep.mubr.bf16.mxu0 0
      %2841 = vmatmul.mubr.bf16.gmra.mrb[0].mxu0 %v2798
      %v2842 = vpop.f32.mrb[0].mxu0
      %v2843 = vadd.f32 %v2780, %v2842
      %v2844 = vpop.f32.mrb[0].mxu0
      %v2845 = vpop.f32.mrb[0].mxu0
      %v2846 = vadd.f32 %v2780, %v2845
      %v2847 = vpop.f32.mrb[0].mxu0
      %2848 = vdwg.mxu0
      %v2849 = vadd.f32 %v688, %v2835
      %v2850 = vadd.f32 %v689, %v2838
      %v2851 = vadd.f32 %v690, %v2843
      %v2852 = vadd.f32 %v691, %v2846
      %v2853 = vld [vmem:[%s12] sm:$0x1]
      %v2854 = vld [vmem:[%s13] sm:$0x1]
      %v2855 = vsel %vm717, %v2849, 0.0
      %2856 = vadd.xlane.f32.xlu0 %v2855
      %v2857 = vpop.xlane.xlu0 %2856
      %v2858 = vsel %vm717, %v2850, 0.0
      %2859 = vadd.xlane.f32.xlu0 %v2858
      %v2860 = vpop.xlane.xlu0 %2859
      %v2861 = vsel %vm717, %v2851, 0.0
      %2862 = vadd.xlane.f32.xlu0 %v2861
      %v2863 = vpop.xlane.xlu0 %2862
      %v2864 = vsel %vm717, %v2852, 0.0
      %2865 = vadd.xlane.f32.xlu0 %v2864
      %v2866 = vpop.xlane.xlu0 %2865
      %v2867 = vrcp.pop 32.0
      %v2868 = vmul.f32 %v2857, %v2867
      %v2869 = vmul.f32 %v2860, %v2867
      %v2870 = vmul.f32 %v2863, %v2867
      %v2871 = vmul.f32 %v2866, %v2867
      %v2872 = vsub.f32 %v2849, %v2868
      %v2873 = vsub.f32 %v2850, %v2869
      %v2874 = vsub.f32 %v2851, %v2870
      %v2875 = vsub.f32 %v2852, %v2871
      %v2876 = vmul.f32 %v2872, %v2872
      %v2877 = vmul.f32 %v2873, %v2873
      %v2878 = vmul.f32 %v2874, %v2874
      %v2879 = vmul.f32 %v2875, %v2875
      %v2880 = vsel %vm717, %v2876, 0.0
      %2881 = vadd.xlane.f32.xlu0 %v2880
      %v2882 = vpop.xlane.xlu0 %2881
      %v2883 = vsel %vm717, %v2877, 0.0
      %2884 = vadd.xlane.f32.xlu0 %v2883
      %v2885 = vpop.xlane.xlu0 %2884
      %v2886 = vsel %vm717, %v2878, 0.0
      %2887 = vadd.xlane.f32.xlu0 %v2886
      %v2888 = vpop.xlane.xlu0 %2887
      %v2889 = vsel %vm717, %v2879, 0.0
      %2890 = vadd.xlane.f32.xlu0 %v2889
      %v2891 = vpop.xlane.xlu0 %2890
      %v2892 = vmul.f32 %v2882, %v2867
      %v2893 = vmul.f32 %v2885, %v2867
      %v2894 = vmul.f32 %v2888, %v2867
      %v2895 = vmul.f32 %v2891, %v2867
      %v2896 = vadd.f32 %v2892, 1e-05
      %v2897 = vadd.f32 %v2893, 1e-05
      %v2898 = vadd.f32 %v2894, 1e-05
      %v2899 = vadd.f32 %v2895, 1e-05
      %v2900 = vrsqrt.pop %v2896
      %v2901 = vrsqrt.pop %v2897
      %v2902 = vrsqrt.pop %v2898
      %v2903 = vrsqrt.pop %v2899
      %v2904 = vmul.f32 %v2872, %v2900
      %v2905 = vmul.f32 %v2873, %v2901
      %v2906 = vmul.f32 %v2874, %v2902
      %v2907 = vmul.f32 %v2875, %v2903
      %v2909 = vlaneseq
      %v2910 = vshrl.u32 %v2909, 7
      %v2911 = vsub.s32 0, %v2910
      %v2912 = vrot.slane %v2853, %v2911
      %v2914 = vmul.f32 %v2904, %v2912
      %v2915 = vmul.f32 %v2905, %v2912
      %v2916 = vmul.f32 %v2906, %v2912
      %v2917 = vmul.f32 %v2907, %v2912
      %v2919 = vlaneseq
      %v2920 = vshrl.u32 %v2919, 7
      %v2921 = vsub.s32 0, %v2920
      %v2922 = vrot.slane %v2854, %v2921
      %v2924 = vadd.f32 %v2914, %v2922
      %v2925 = vadd.f32 %v2915, %v2922
      %v2926 = vadd.f32 %v2916, %v2922
      %v2927 = vadd.f32 %v2917, %v2922
      %v2928 = vpack.c.bf16 %v2925, %v2924
      %v2929 = vpack.c.bf16 %v2927, %v2926
      %v2930 = vld [vmem:[%s14] sm:$0xf]
      %v2931 = vld [vmem:[%s14 + $0x4] sm:$0xf]
      %v2932 = vld [vmem:[%s14 + $0x8] sm:$0xf]
      %v2933 = vld [vmem:[%s14 + $0xc] sm:$0xf]
      %v2934 = vld [vmem:[%s15] sm:$0x1]
      %v2936 = vlaneseq
      %v2937 = vshrl.u32 %v2936, 7
      %v2938 = vsub.s32 0, %v2937
      %v2939 = vrot.slane %v2934, %v2938
      %v2945 = vunpack.c.l.b16 %v2930
      %v2946 = vunpack.c.l.b16 %v2931
      %v2947 = vunpack.c.l.b16 %v2932
      %v2948 = vunpack.c.l.b16 %v2933
      %v2949 = vpack.c.b16 %v2946, %v2945
      %v2950 = vpack.c.b16 %v2948, %v2947
      %v2954 = vsel %vm717, %v2928, 0
      %v2957 = vsel %vm717, %v2929, 0
      %2959 = vmatprep.subr.bf16.mxu0 0
      %2960 = vmatpush1.bf16.msra.mxu0 %v2949
      %2961 = vmatprep.subr.bf16.mxu0 0
      %2962 = vmatpush1.bf16.msra.mxu0 %v2950
      %2963 = vmatprep.subr.bf16.mxu0 0
      %2964 = vmatpush1.bf16.msra.mxu0 0
      %2965 = vmatprep.subr.bf16.mxu0 0
      %2966 = vmatpush1.bf16.msra.mxu0 0
      %2967 = vmatprep.subr.bf16.mxu0 0
      %2968 = vmatpush1.bf16.msra.mxu0 0
      %2969 = vmatprep.subr.bf16.mxu0 0
      %2970 = vmatpush1.bf16.msra.mxu0 0
      %2971 = vmatprep.subr.bf16.mxu0 0
      %2972 = vmatpush1.bf16.msra.mxu0 0
      %2973 = vmatprep.subr.bf16.mxu0 0
      %2974 = vmatpush1.bf16.msra.mxu0 0
      %2975 = vmatprep.subr.bf16.mxu0 0
      %2976 = vmatpush1.bf16.msra.mxu0 0
      %2977 = vmatprep.subr.bf16.mxu0 0
      %2978 = vmatpush1.bf16.msra.mxu0 0
      %2979 = vmatprep.subr.bf16.mxu0 0
      %2980 = vmatpush1.bf16.msra.mxu0 0
      %2981 = vmatprep.subr.bf16.mxu0 0
      %2982 = vmatpush1.bf16.msra.mxu0 0
      %2983 = vmatprep.subr.bf16.mxu0 0
      %2984 = vmatpush1.bf16.msra.mxu0 0
      %2985 = vmatprep.subr.bf16.mxu0 0
      %2986 = vmatpush1.bf16.msra.mxu0 0
      %2987 = vmatprep.subr.bf16.mxu0 0
      %2988 = vmatpush1.bf16.msra.mxu0 0
      %2989 = vmatprep.subr.bf16.mxu0 0
      %2990 = vmatpush1.bf16.msra.mxu0 0
      %2991 = vmatprep.mubr.bf16.mxu0 0
      %2992 = vmatmul.mubr.bf16.gmra.mrb[0].mxu0 %v2954
      %v2993 = vpop.f32.mrb[0].mxu0
      %v2994 = vadd.f32 %v2939, %v2993
      %v2995 = vpop.f32.mrb[0].mxu0
      %v2996 = vpop.f32.mrb[0].mxu0
      %v2997 = vadd.f32 %v2939, %v2996
      %v2998 = vpop.f32.mrb[0].mxu0
      %2999 = vmatprep.mubr.bf16.mxu0 0
      %3000 = vmatmul.mubr.bf16.gmra.mrb[0].mxu0 %v2957
      %v3001 = vpop.f32.mrb[0].mxu0
      %v3002 = vadd.f32 %v2939, %v3001
      %v3003 = vpop.f32.mrb[0].mxu0
      %v3004 = vpop.f32.mrb[0].mxu0
      %v3005 = vadd.f32 %v2939, %v3004
      %v3006 = vpop.f32.mrb[0].mxu0
      %3007 = vdwg.mxu0
      %v3008 = vmax.f32 %v2994, 0.0
      %v3009 = vmax.f32 %v2997, 0.0
      %v3010 = vmax.f32 %v3002, 0.0
      %v3011 = vmax.f32 %v3005, 0.0
      %v3012 = vpack.c.bf16 %v3009, %v3008
      %v3013 = vpack.c.bf16 %v3011, %v3010
      %v3014 = vld [vmem:[%s16] sm:$0xf]
      %v3015 = vld [vmem:[%s16 + $0x4] sm:$0xf]
      %v3016 = vld [vmem:[%s16 + $0x8] sm:$0xf]
      %v3017 = vld [vmem:[%s16 + $0xc] sm:$0xf]
      %v3018 = vld [vmem:[%s16 + $0x10] sm:$0xf]
      %v3019 = vld [vmem:[%s16 + $0x14] sm:$0xf]
      %v3020 = vld [vmem:[%s16 + $0x18] sm:$0xf]
      %v3021 = vld [vmem:[%s16 + $0x1c] sm:$0xf]
      %v3022 = vld [vmem:[%s17] sm:$0x1]
      %v3024 = vlaneseq
      %v3025 = vshrl.u32 %v3024, 7
      %v3026 = vsub.s32 0, %v3025
      %v3027 = vrot.slane %v3022, %v3026
      %v3037 = vunpack.c.l.b16 %v3014
      %v3038 = vunpack.c.l.b16 %v3015
      %v3039 = vunpack.c.l.b16 %v3016
      %v3040 = vunpack.c.l.b16 %v3017
      %v3041 = vunpack.c.l.b16 %v3018
      %v3042 = vunpack.c.l.b16 %v3019
      %v3043 = vunpack.c.l.b16 %v3020
      %v3044 = vunpack.c.l.b16 %v3021
      %v3045 = vpack.c.b16 %v3038, %v3037
      %v3046 = vpack.c.b16 %v3040, %v3039
      %v3047 = vpack.c.b16 %v3042, %v3041
      %v3048 = vpack.c.b16 %v3044, %v3043
      %vm3053 = vcmask 523264
      %v3055 = vsel %vm3053, %v3012, 0
      %v3058 = vsel %vm3053, %v3013, 0
      %3060 = vmatprep.subr.bf16.mxu0 0
      %3061 = vmatpush1.bf16.msra.mxu0 %v3045
      %3062 = vmatprep.subr.bf16.mxu0 0
      %3063 = vmatpush1.bf16.msra.mxu0 %v3046
      %3064 = vmatprep.subr.bf16.mxu0 0
      %3065 = vmatpush1.bf16.msra.mxu0 %v3047
      %3066 = vmatprep.subr.bf16.mxu0 0
      %3067 = vmatpush1.bf16.msra.mxu0 %v3048
      %3068 = vmatprep.subr.bf16.mxu0 0
      %3069 = vmatpush1.bf16.msra.mxu0 0
      %3070 = vmatprep.subr.bf16.mxu0 0
      %3071 = vmatpush1.bf16.msra.mxu0 0
      %3072 = vmatprep.subr.bf16.mxu0 0
      %3073 = vmatpush1.bf16.msra.mxu0 0
      %3074 = vmatprep.subr.bf16.mxu0 0
      %3075 = vmatpush1.bf16.msra.mxu0 0
      %3076 = vmatprep.subr.bf16.mxu0 0
      %3077 = vmatpush1.bf16.msra.mxu0 0
      %3078 = vmatprep.subr.bf16.mxu0 0
      %3079 = vmatpush1.bf16.msra.mxu0 0
      %3080 = vmatprep.subr.bf16.mxu0 0
      %3081 = vmatpush1.bf16.msra.mxu0 0
      %3082 = vmatprep.subr.bf16.mxu0 0
      %3083 = vmatpush1.bf16.msra.mxu0 0
      %3084 = vmatprep.subr.bf16.mxu0 0
      %3085 = vmatpush1.bf16.msra.mxu0 0
      %3086 = vmatprep.subr.bf16.mxu0 0
      %3087 = vmatpush1.bf16.msra.mxu0 0
      %3088 = vmatprep.subr.bf16.mxu0 0
      %3089 = vmatpush1.bf16.msra.mxu0 0
      %3090 = vmatprep.subr.bf16.mxu0 0
      %3091 = vmatpush1.bf16.msra.mxu0 0
      %3092 = vmatprep.mubr.bf16.mxu0 0
      %3093 = vmatmul.mubr.bf16.gmra.mrb[0].mxu0 %v3055
      %v3094 = vpop.f32.mrb[0].mxu0
      %v3095 = vadd.f32 %v3027, %v3094
      %v3096 = vpop.f32.mrb[0].mxu0
      %v3097 = vpop.f32.mrb[0].mxu0
      %v3098 = vadd.f32 %v3027, %v3097
      %v3099 = vpop.f32.mrb[0].mxu0
      %3100 = vmatprep.mubr.bf16.mxu0 0
      %3101 = vmatmul.mubr.bf16.gmra.mrb[0].mxu0 %v3058
      %v3102 = vpop.f32.mrb[0].mxu0
      %v3103 = vadd.f32 %v3027, %v3102
      %v3104 = vpop.f32.mrb[0].mxu0
      %v3105 = vpop.f32.mrb[0].mxu0
      %v3106 = vadd.f32 %v3027, %v3105
      %v3107 = vpop.f32.mrb[0].mxu0
      %3108 = vdwg.mxu0
      %v3109 = vadd.f32 %v2924, %v3095
      %v3110 = vadd.f32 %v2925, %v3098
      %v3111 = vadd.f32 %v2926, %v3103
      %v3112 = vadd.f32 %v2927, %v3106
      %v3113 = vld [vmem:[%s18] sm:$0x1]
      %v3114 = vld [vmem:[%s19] sm:$0x1]
      %v3115 = vsel %vm717, %v3109, 0.0
      %3116 = vadd.xlane.f32.xlu0 %v3115
      %v3117 = vpop.xlane.xlu0 %3116
      %v3118 = vsel %vm717, %v3110, 0.0
      %3119 = vadd.xlane.f32.xlu0 %v3118
      %v3120 = vpop.xlane.xlu0 %3119
      %v3121 = vsel %vm717, %v3111, 0.0
      %3122 = vadd.xlane.f32.xlu0 %v3121
      %v3123 = vpop.xlane.xlu0 %3122
      %v3124 = vsel %vm717, %v3112, 0.0
      %3125 = vadd.xlane.f32.xlu0 %v3124
      %v3126 = vpop.xlane.xlu0 %3125
      %v3127 = vmul.f32 %v3117, %v2867
      %v3128 = vmul.f32 %v3120, %v2867
      %v3129 = vmul.f32 %v3123, %v2867
      %v3130 = vmul.f32 %v3126, %v2867
      %v3131 = vsub.f32 %v3109, %v3127
      %v3132 = vsub.f32 %v3110, %v3128
      %v3133 = vsub.f32 %v3111, %v3129
      %v3134 = vsub.f32 %v3112, %v3130
      %v3135 = vmul.f32 %v3131, %v3131
      %v3136 = vmul.f32 %v3132, %v3132
      %v3137 = vmul.f32 %v3133, %v3133
      %v3138 = vmul.f32 %v3134, %v3134
      %v3139 = vsel %vm717, %v3135, 0.0
      %3140 = vadd.xlane.f32.xlu0 %v3139
      %v3141 = vpop.xlane.xlu0 %3140
      %v3142 = vsel %vm717, %v3136, 0.0
      %3143 = vadd.xlane.f32.xlu0 %v3142
      %v3144 = vpop.xlane.xlu0 %3143
      %v3145 = vsel %vm717, %v3137, 0.0
      %3146 = vadd.xlane.f32.xlu0 %v3145
      %v3147 = vpop.xlane.xlu0 %3146
      %v3148 = vsel %vm717, %v3138, 0.0
      %3149 = vadd.xlane.f32.xlu0 %v3148
      %v3150 = vpop.xlane.xlu0 %3149
      %v3151 = vmul.f32 %v3141, %v2867
      %v3152 = vmul.f32 %v3144, %v2867
      %v3153 = vmul.f32 %v3147, %v2867
      %v3154 = vmul.f32 %v3150, %v2867
      %v3155 = vadd.f32 %v3151, 1e-05
      %v3156 = vadd.f32 %v3152, 1e-05
      %v3157 = vadd.f32 %v3153, 1e-05
      %v3158 = vadd.f32 %v3154, 1e-05
      %v3159 = vrsqrt.pop %v3155
      %v3160 = vrsqrt.pop %v3156
      %v3161 = vrsqrt.pop %v3157
      %v3162 = vrsqrt.pop %v3158
      %v3163 = vmul.f32 %v3131, %v3159
      %v3164 = vmul.f32 %v3132, %v3160
      %v3165 = vmul.f32 %v3133, %v3161
      %v3166 = vmul.f32 %v3134, %v3162
      %v3168 = vlaneseq
      %v3169 = vshrl.u32 %v3168, 7
      %v3170 = vsub.s32 0, %v3169
      %v3171 = vrot.slane %v3113, %v3170
      %v3173 = vmul.f32 %v3163, %v3171
      %v3174 = vmul.f32 %v3164, %v3171
      %v3175 = vmul.f32 %v3165, %v3171
      %v3176 = vmul.f32 %v3166, %v3171
      %v3178 = vlaneseq
      %v3179 = vshrl.u32 %v3178, 7
      %v3180 = vsub.s32 0, %v3179
      %v3181 = vrot.slane %v3114, %v3180
      %v3183 = vadd.f32 %v3173, %v3181
      %v3184 = vadd.f32 %v3174, %v3181
      %v3185 = vadd.f32 %v3175, %v3181
      %v3186 = vadd.f32 %v3176, %v3181
      %v3187 = vpack.c.bf16 %v3184, %v3183
      %v3188 = vpack.c.bf16 %v3186, %v3185
      %v3189 = vld [vmem:[%s2] sm:$0xf]
      %v3190 = vld [vmem:[%s2 + $0x4] sm:$0xf]
      %v3191 = vld [vmem:[%s2 + $0x8] sm:$0xf]
      %v3192 = vld [vmem:[%s2 + $0xc] sm:$0xf]
      %v3197 = vunpack.c.l.b16 %v3189
      %v3198 = vunpack.c.l.b16 %v3190
      %v3199 = vunpack.c.l.b16 %v3191
      %v3200 = vunpack.c.l.b16 %v3192
      %v3201 = vpack.c.b16 %v3198, %v3197
      %v3202 = vpack.c.b16 %v3200, %v3199
      %v3206 = vsel %vm717, %v3187, 0
      %v3209 = vsel %vm717, %v3188, 0
      %3211 = vmatprep.subr.bf16.mxu0 0
      %3212 = vmatpush1.bf16.msra.mxu0 %v3201
      %3213 = vmatprep.subr.bf16.mxu0 0
      %3214 = vmatpush1.bf16.msra.mxu0 %v3202
      %3215 = vmatprep.subr.bf16.mxu0 0
      %3216 = vmatpush1.bf16.msra.mxu0 0
      %3217 = vmatprep.subr.bf16.mxu0 0
      %3218 = vmatpush1.bf16.msra.mxu0 0
      %3219 = vmatprep.subr.bf16.mxu0 0
      %3220 = vmatpush1.bf16.msra.mxu0 0
      %3221 = vmatprep.subr.bf16.mxu0 0
      %3222 = vmatpush1.bf16.msra.mxu0 0
      %3223 = vmatprep.subr.bf16.mxu0 0
      %3224 = vmatpush1.bf16.msra.mxu0 0
      %3225 = vmatprep.subr.bf16.mxu0 0
      %3226 = vmatpush1.bf16.msra.mxu0 0
      %3227 = vmatprep.subr.bf16.mxu0 0
      %3228 = vmatpush1.bf16.msra.mxu0 0
      %3229 = vmatprep.subr.bf16.mxu0 0
      %3230 = vmatpush1.bf16.msra.mxu0 0
      %3231 = vmatprep.subr.bf16.mxu0 0
      %3232 = vmatpush1.bf16.msra.mxu0 0
      %3233 = vmatprep.subr.bf16.mxu0 0
      %3234 = vmatpush1.bf16.msra.mxu0 0
      %3235 = vmatprep.subr.bf16.mxu0 0
      %3236 = vmatpush1.bf16.msra.mxu0 0
      %3237 = vmatprep.subr.bf16.mxu0 0
      %3238 = vmatpush1.bf16.msra.mxu0 0
      %3239 = vmatprep.subr.bf16.mxu0 0
      %3240 = vmatpush1.bf16.msra.mxu0 0
      %3241 = vmatprep.subr.bf16.mxu0 0
      %3242 = vmatpush1.bf16.msra.mxu0 0
      %3243 = vmatprep.mubr.bf16.mxu0 0
      %3244 = vmatmul.mubr.bf16.gmra.mrb[0].mxu0 %v3206
      %v3245 = vpop.f32.mrb[0].mxu0
      %v3246 = vadd.f32 0.0, %v3245
      %v3247 = vpop.f32.mrb[0].mxu0
      %v3248 = vpop.f32.mrb[0].mxu0
      %v3249 = vadd.f32 0.0, %v3248
      %v3250 = vpop.f32.mrb[0].mxu0
      %3251 = vmatprep.mubr.bf16.mxu0 0
      %3252 = vmatmul.mubr.bf16.gmra.mrb[0].mxu0 %v3209
      %v3253 = vpop.f32.mrb[0].mxu0
      %v3254 = vadd.f32 0.0, %v3253
      %v3255 = vpop.f32.mrb[0].mxu0
      %v3256 = vpop.f32.mrb[0].mxu0
      %v3257 = vadd.f32 0.0, %v3256
      %v3258 = vpop.f32.mrb[0].mxu0
      %3259 = vdwg.mxu0
      %v3260 = vld [vmem:[%s1] sm:$0xf]
      %v3261 = vld [vmem:[%s3] sm:$0x1]
      %v3263 = vlaneseq
      %v3264 = vshrl.u32 %v3263, 7
      %v3265 = vsub.s32 0, %v3264
      %v3266 = vrot.slane %v3261, %v3265
      %v3272 = vrot.slane %v3249, 7
      %vm3273 = vcmask 1041409
      %v3274 = vsel %vm3273, %v3272, %v3246
      %v3275 = vrot.slane %v3254, 6
      %vm3276 = vcmask 1042434
      %v3277 = vsel %vm3276, %v3275, %v3274
      %v3278 = vrot.slane %v3257, 5
      %vm3279 = vcmask 1043459
      %v3280 = vsel %vm3279, %v3278, %v3277
      %vm3281 = vcmask 31744
      %v3283 = vsel %vm3281, %v3260, 0
      %v3285 = vsel %vm1193, %v3280, 0
      %3287 = vmatprep.subr.mxu0 0.0
      %3288 = vmatpush1.msra.mxu0 %v3285
      %3289 = vmatprep.subr.mxu0 0.0
      %3290 = vmatpush1.msra.mxu0 0.0
      %3291 = vmatprep.subr.mxu0 0.0
      %3292 = vmatpush1.msra.mxu0 0.0
      %3293 = vmatprep.subr.mxu0 0.0
      %3294 = vmatpush1.msra.mxu0 0.0
      %3295 = vmatprep.subr.mxu0 0.0
      %3296 = vmatpush1.msra.mxu0 0.0
      %3297 = vmatprep.subr.mxu0 0.0
      %3298 = vmatpush1.msra.mxu0 0.0
      %3299 = vmatprep.subr.mxu0 0.0
      %3300 = vmatpush1.msra.mxu0 0.0
      %3301 = vmatprep.subr.mxu0 0.0
      %3302 = vmatpush1.msra.mxu0 0.0
      %3303 = vmatprep.subr.mxu0 0.0
      %3304 = vmatpush1.msra.mxu0 0.0
      %3305 = vmatprep.subr.mxu0 0.0
      %3306 = vmatpush1.msra.mxu0 0.0
      %3307 = vmatprep.subr.mxu0 0.0
      %3308 = vmatpush1.msra.mxu0 0.0
      %3309 = vmatprep.subr.mxu0 0.0
      %3310 = vmatpush1.msra.mxu0 0.0
      %3311 = vmatprep.subr.mxu0 0.0
      %3312 = vmatpush1.msra.mxu0 0.0
      %3313 = vmatprep.subr.mxu0 0.0
      %3314 = vmatpush1.msra.mxu0 0.0
      %3315 = vmatprep.subr.mxu0 0.0
      %3316 = vmatpush1.msra.mxu0 0.0
      %3317 = vmatprep.subr.mxu0 0.0
      %3318 = vmatpush1.msra.mxu0 0.0
      %3319 = vmatprep.subr.mxu0 0.0
      %3320 = vmatpush1.msra.mxu0 0.0
      %3321 = vmatprep.subr.mxu0 0.0
      %3322 = vmatpush1.msra.mxu0 0.0
      %3323 = vmatprep.subr.mxu0 0.0
      %3324 = vmatpush1.msra.mxu0 0.0
      %3325 = vmatprep.subr.mxu0 0.0
      %3326 = vmatpush1.msra.mxu0 0.0
      %3327 = vmatprep.subr.mxu0 0.0
      %3328 = vmatpush1.msra.mxu0 0.0
      %3329 = vmatprep.subr.mxu0 0.0
      %3330 = vmatpush1.msra.mxu0 0.0
      %3331 = vmatprep.subr.mxu0 0.0
      %3332 = vmatpush1.msra.mxu0 0.0
      %3333 = vmatprep.subr.mxu0 0.0
      %3334 = vmatpush1.msra.mxu0 0.0
      %3335 = vmatprep.subr.mxu0 0.0
      %3336 = vmatpush1.msra.mxu0 0.0
      %3337 = vmatprep.subr.mxu0 0.0
      %3338 = vmatpush1.msra.mxu0 0.0
      %3339 = vmatprep.subr.mxu0 0.0
      %3340 = vmatpush1.msra.mxu0 0.0
      %3341 = vmatprep.subr.mxu0 0.0
      %3342 = vmatpush1.msra.mxu0 0.0
      %3343 = vmatprep.subr.mxu0 0.0
      %3344 = vmatpush1.msra.mxu0 0.0
      %3345 = vmatprep.subr.mxu0 0.0
      %3346 = vmatpush1.msra.mxu0 0.0
      %3347 = vmatprep.subr.mxu0 0.0
      %3348 = vmatpush1.msra.mxu0 0.0
      %3349 = vmatprep.subr.mxu0 0.0
      %3350 = vmatpush1.msra.mxu0 0.0
      %3351 = vmatprep.mubr.f32.mxu0 0.0
      %3352 = vmatmul.mubr.f32.gmra.mrb[0].mxu0 %v3283
      %v3353 = vpop.f32.mrb[0].mxu0
      %v3354 = vadd.f32 %v3266, %v3353
      %v3355 = vpop.f32.mrb[0].mxu0
      %3356 = vdwg.mxu0
      %v3357 = vmax.f32 %v3354, 0.0
      %v3362 = vrot.slane %v3184, 7
      %v3363 = vsel %vm3273, %v3362, %v3183
      %v3364 = vrot.slane %v3185, 6
      %v3365 = vsel %vm3276, %v3364, %v3363
      %v3366 = vrot.slane %v3186, 5
      %v3367 = vsel %vm3279, %v3366, %v3365
      %v3369 = vadd.f32 %v3357, %v3367
      %v3370 = vld [vmem:[%s20] sm:$0x1]
      %v3371 = vld [vmem:[%s21] sm:$0x1]
      %vm3372 = vcmask 257024
      %v3373 = vsel %vm3372, %v3369, 0.0
      %3374 = vadd.xlane.f32.xlu0 %v3373
      %v3375 = vpop.xlane.xlu0 %3374
      %v3376 = vmul.f32 %v3375, %v2867
      %v3377 = vsub.f32 %v3369, %v3376
      %v3378 = vmul.f32 %v3377, %v3377
      %v3379 = vsel %vm3372, %v3378, 0.0
      %3380 = vadd.xlane.f32.xlu0 %v3379
      %v3381 = vpop.xlane.xlu0 %3380
      %v3382 = vmul.f32 %v3381, %v2867
      %v3383 = vadd.f32 %v3382, 1e-05
      %v3384 = vrsqrt.pop %v3383
      %v3385 = vmul.f32 %v3377, %v3384
      %v3387 = vlaneseq
      %v3388 = vshrl.u32 %v3387, 7
      %v3389 = vsub.s32 0, %v3388
      %v3390 = vrot.slane %v3370, %v3389
      %v3392 = vmul.f32 %v3385, %v3390
      %v3394 = vlaneseq
      %v3395 = vshrl.u32 %v3394, 7
      %v3396 = vsub.s32 0, %v3395
      %v3397 = vrot.slane %v3371, %v3396
      %v3399 = vadd.f32 %v3392, %v3397
      %v3400 = vld [vmem:[%s3] sm:$0x1]
      %v3402 = vlaneseq
      %v3403 = vshrl.u32 %v3402, 7
      %v3404 = vsub.s32 0, %v3403
      %v3405 = vrot.slane %v3400, %v3404
      %v3407 = vrot.slane %v3246, 1
      %v3408 = vsel %vm3273, %v3249, %v3407
      %v3409 = vrot.slane %v3254, 7
      %v3410 = vsel %vm3276, %v3409, %v3408
      %v3411 = vrot.slane %v3257, 6
      %v3412 = vsel %vm3279, %v3411, %v3410
      %v3413 = vsel %vm1193, %v3412, 0
      %3415 = vmatprep.subr.mxu0 0.0
      %3416 = vmatpush1.msra.mxu0 %v3413
      %3417 = vmatprep.subr.mxu0 0.0
      %3418 = vmatpush1.msra.mxu0 0.0
      %3419 = vmatprep.subr.mxu0 0.0
      %3420 = vmatpush1.msra.mxu0 0.0
      %3421 = vmatprep.subr.mxu0 0.0
      %3422 = vmatpush1.msra.mxu0 0.0
      %3423 = vmatprep.subr.mxu0 0.0
      %3424 = vmatpush1.msra.mxu0 0.0
      %3425 = vmatprep.subr.mxu0 0.0
      %3426 = vmatpush1.msra.mxu0 0.0
      %3427 = vmatprep.subr.mxu0 0.0
      %3428 = vmatpush1.msra.mxu0 0.0
      %3429 = vmatprep.subr.mxu0 0.0
      %3430 = vmatpush1.msra.mxu0 0.0
      %3431 = vmatprep.subr.mxu0 0.0
      %3432 = vmatpush1.msra.mxu0 0.0
      %3433 = vmatprep.subr.mxu0 0.0
      %3434 = vmatpush1.msra.mxu0 0.0
      %3435 = vmatprep.subr.mxu0 0.0
      %3436 = vmatpush1.msra.mxu0 0.0
      %3437 = vmatprep.subr.mxu0 0.0
      %3438 = vmatpush1.msra.mxu0 0.0
      %3439 = vmatprep.subr.mxu0 0.0
      %3440 = vmatpush1.msra.mxu0 0.0
      %3441 = vmatprep.subr.mxu0 0.0
      %3442 = vmatpush1.msra.mxu0 0.0
      %3443 = vmatprep.subr.mxu0 0.0
      %3444 = vmatpush1.msra.mxu0 0.0
      %3445 = vmatprep.subr.mxu0 0.0
      %3446 = vmatpush1.msra.mxu0 0.0
      %3447 = vmatprep.subr.mxu0 0.0
      %3448 = vmatpush1.msra.mxu0 0.0
      %3449 = vmatprep.subr.mxu0 0.0
      %3450 = vmatpush1.msra.mxu0 0.0
      %3451 = vmatprep.subr.mxu0 0.0
      %3452 = vmatpush1.msra.mxu0 0.0
      %3453 = vmatprep.subr.mxu0 0.0
      %3454 = vmatpush1.msra.mxu0 0.0
      %3455 = vmatprep.subr.mxu0 0.0
      %3456 = vmatpush1.msra.mxu0 0.0
      %3457 = vmatprep.subr.mxu0 0.0
      %3458 = vmatpush1.msra.mxu0 0.0
      %3459 = vmatprep.subr.mxu0 0.0
      %3460 = vmatpush1.msra.mxu0 0.0
      %3461 = vmatprep.subr.mxu0 0.0
      %3462 = vmatpush1.msra.mxu0 0.0
      %3463 = vmatprep.subr.mxu0 0.0
      %3464 = vmatpush1.msra.mxu0 0.0
      %3465 = vmatprep.subr.mxu0 0.0
      %3466 = vmatpush1.msra.mxu0 0.0
      %3467 = vmatprep.subr.mxu0 0.0
      %3468 = vmatpush1.msra.mxu0 0.0
      %3469 = vmatprep.subr.mxu0 0.0
      %3470 = vmatpush1.msra.mxu0 0.0
      %3471 = vmatprep.subr.mxu0 0.0
      %3472 = vmatpush1.msra.mxu0 0.0
      %3473 = vmatprep.subr.mxu0 0.0
      %3474 = vmatpush1.msra.mxu0 0.0
      %3475 = vmatprep.subr.mxu0 0.0
      %3476 = vmatpush1.msra.mxu0 0.0
      %3477 = vmatprep.subr.mxu0 0.0
      %3478 = vmatpush1.msra.mxu0 0.0
      %3479 = vmatprep.mubr.f32.mxu0 0.0
      %3480 = vmatmul.mubr.f32.gmra.mrb[0].mxu0 %v3283
      %v3481 = vpop.f32.mrb[0].mxu0
      %v3482 = vadd.f32 %v3405, %v3481
      %v3483 = vpop.f32.mrb[0].mxu0
      %3484 = vdwg.mxu0
      %v3485 = vmax.f32 %v3482, 0.0
      %v3486 = vrot.slane %v3183, 1
      %v3487 = vsel %vm3273, %v3184, %v3486
      %v3488 = vrot.slane %v3185, 7
      %v3489 = vsel %vm3276, %v3488, %v3487
      %v3490 = vrot.slane %v3186, 6
      %v3491 = vsel %vm3279, %v3490, %v3489
      %v3493 = vadd.f32 %v3485, %v3491
      %v3494 = vld [vmem:[%s20] sm:$0x1]
      %v3495 = vld [vmem:[%s21] sm:$0x1]
      %v3496 = vsel %vm3372, %v3493, 0.0
      %3497 = vadd.xlane.f32.xlu0 %v3496
      %v3498 = vpop.xlane.xlu0 %3497
      %v3499 = vmul.f32 %v3498, %v2867
      %v3500 = vsub.f32 %v3493, %v3499
      %v3501 = vmul.f32 %v3500, %v3500
      %v3502 = vsel %vm3372, %v3501, 0.0
      %3503 = vadd.xlane.f32.xlu0 %v3502
      %v3504 = vpop.xlane.xlu0 %3503
      %v3505 = vmul.f32 %v3504, %v2867
      %v3506 = vadd.f32 %v3505, 1e-05
      %v3507 = vrsqrt.pop %v3506
      %v3508 = vmul.f32 %v3500, %v3507
      %v3510 = vlaneseq
      %v3511 = vshrl.u32 %v3510, 7
      %v3512 = vsub.s32 0, %v3511
      %v3513 = vrot.slane %v3494, %v3512
      %v3515 = vmul.f32 %v3508, %v3513
      %v3517 = vlaneseq
      %v3518 = vshrl.u32 %v3517, 7
      %v3519 = vsub.s32 0, %v3518
      %v3520 = vrot.slane %v3495, %v3519
      %v3522 = vadd.f32 %v3515, %v3520
      %v3525 = vunpack.c.l.s4 1966171168
      %v3526 = vunpack.c.0.s8 %v3525
      %v3527 = vlaneseq
      %v3528 = vshrl.u32 %v3527, 7
      %v3529 = vsub.s32 %v3526, %v3528
      %v3530 = vrot.slane %v3399, %v3529
      %v3531 = vcombine.high %v3530, %v3530
      %v3533 = vunpack.c.l.s4 1966171168
      %v3534 = vunpack.c.0.s8 %v3533
      %v3535 = vlaneseq
      %v3536 = vshrl.u32 %v3535, 7
      %v3537 = vsub.s32 %v3534, %v3536
      %v3538 = vrot.slane %v3530, %v3537
      %v3540 = vunpack.c.l.s4 1966171168
      %v3541 = vunpack.c.0.s8 %v3540
      %v3542 = vlaneseq
      %v3543 = vshrl.u32 %v3542, 7
      %v3544 = vsub.s32 %v3541, %v3543
      %v3545 = vrot.slane %v3531, %v3544
      %v3546 = vcombine.high %v3538, %v3538
      %v3547 = vcombine.high %v3545, %v3545
      %v3554 = vunpack.c.l.s4 1966171168
      %v3555 = vunpack.c.0.s8 %v3554
      %v3556 = vlaneseq
      %v3557 = vshrl.u32 %v3556, 7
      %v3558 = vsub.s32 %v3555, %v3557
      %v3559 = vrot.slane %v3522, %v3558
      %v3560 = vcombine.high %v3559, %v3559
      %v3562 = vunpack.c.l.s4 1966171168
      %v3563 = vunpack.c.0.s8 %v3562
      %v3564 = vlaneseq
      %v3565 = vshrl.u32 %v3564, 7
      %v3566 = vsub.s32 %v3563, %v3565
      %v3567 = vrot.slane %v3559, %v3566
      %v3569 = vunpack.c.l.s4 1966171168
      %v3570 = vunpack.c.0.s8 %v3569
      %v3571 = vlaneseq
      %v3572 = vshrl.u32 %v3571, 7
      %v3573 = vsub.s32 %v3570, %v3572
      %v3574 = vrot.slane %v3560, %v3573
      %v3575 = vcombine.high %v3567, %v3567
      %v3576 = vcombine.high %v3574, %v3574
      %v3577 = vlaneseq
      %v3578 = vshrl.u32 %v3577, 7
      %v3579 = vsub.s32 0, %v3578
      %v3580 = vrot.slane %v3567, %v3579
      %v3581 = vlaneseq
      %v3582 = vshrl.u32 %v3581, 7
      %v3583 = vsub.s32 0, %v3582
      %v3584 = vrot.slane %v3574, %v3583
      %v3585 = vlaneseq
      %v3586 = vshrl.u32 %v3585, 7
      %v3587 = vsub.s32 0, %v3586
      %v3588 = vrot.slane %v3575, %v3587
      %v3589 = vlaneseq
      %v3590 = vshrl.u32 %v3589, 7
      %v3591 = vsub.s32 0, %v3590
      %v3592 = vrot.slane %v3576, %v3591
      %vm3597 = vcmask 1040384
      %v3598 = vsel %vm3597, %v3538, %v3580
      %v3599 = vsel %vm3597, %v3545, %v3584
      %v3600 = vsel %vm3597, %v3546, %v3588
      %v3601 = vsel %vm3597, %v3547, %v3592
      %vm3602 = vcmask 261122
      %v3603 = vsel %vm3602, %v3183, 0.0
      %3604 = vadd.xlane.f32.xlu0 %v3603
      %v3605 = vpop.xlane.xlu0 %3604
      %v3606 = vsel %vm3602, %v3184, 0.0
      %3607 = vadd.xlane.f32.xlu0 %v3606
      %v3608 = vpop.xlane.xlu0 %3607
      %v3609 = vsel %vm3602, %v3185, 0.0
      %3610 = vadd.xlane.f32.xlu0 %v3609
      %v3611 = vpop.xlane.xlu0 %3610
      %v3612 = vsel %vm3602, %v3186, 0.0
      %3613 = vadd.xlane.f32.xlu0 %v3612
      %v3614 = vpop.xlane.xlu0 %3613
      %v3615 = vmul.f32 %v3605, %v2867
      %v3616 = vmul.f32 %v3608, %v2867
      %v3617 = vmul.f32 %v3611, %v2867
      %v3618 = vmul.f32 %v3614, %v2867
      %v3619 = vsub.f32 %v3183, %v3615
      %v3620 = vsub.f32 %v3184, %v3616
      %v3621 = vsub.f32 %v3185, %v3617
      %v3622 = vsub.f32 %v3186, %v3618
      %v3623 = vmul.f32 %v3619, %v3619
      %v3624 = vmul.f32 %v3620, %v3620
      %v3625 = vmul.f32 %v3621, %v3621
      %v3626 = vmul.f32 %v3622, %v3622
      %v3627 = vsel %vm3602, %v3623, 0.0
      %3628 = vadd.xlane.f32.xlu0 %v3627
      %v3629 = vpop.xlane.xlu0 %3628
      %v3630 = vsel %vm3602, %v3624, 0.0
      %3631 = vadd.xlane.f32.xlu0 %v3630
      %v3632 = vpop.xlane.xlu0 %3631
      %v3633 = vsel %vm3602, %v3625, 0.0
      %3634 = vadd.xlane.f32.xlu0 %v3633
      %v3635 = vpop.xlane.xlu0 %3634
      %v3636 = vsel %vm3602, %v3626, 0.0
      %3637 = vadd.xlane.f32.xlu0 %v3636
      %v3638 = vpop.xlane.xlu0 %3637
      %v3639 = vmul.f32 %v3629, %v2867
      %v3640 = vmul.f32 %v3632, %v2867
      %v3641 = vmul.f32 %v3635, %v2867
      %v3642 = vmul.f32 %v3638, %v2867
      %v3643 = vadd.f32 %v3639, 1e-05
      %v3644 = vadd.f32 %v3640, 1e-05
      %v3645 = vadd.f32 %v3641, 1e-05
      %v3646 = vadd.f32 %v3642, 1e-05
      %v3647 = vrsqrt.pop %v3643
      %v3648 = vrsqrt.pop %v3644
      %v3649 = vrsqrt.pop %v3645
      %v3650 = vrsqrt.pop %v3646
      %v3651 = vmul.f32 %v3619, %v3647
      %v3652 = vmul.f32 %v3620, %v3648
      %v3653 = vmul.f32 %v3621, %v3649
      %v3654 = vmul.f32 %v3622, %v3650
      %v3655 = vmul.f32 %v3651, %v3513
      %v3656 = vmul.f32 %v3652, %v3513
      %v3657 = vmul.f32 %v3653, %v3513
      %v3658 = vmul.f32 %v3654, %v3513
      %v3659 = vadd.f32 %v3655, %v3520
      %v3660 = vadd.f32 %v3656, %v3520
      %v3661 = vadd.f32 %v3657, %v3520
      %v3662 = vadd.f32 %v3658, %v3520
      %vm3663 = vcmask 1041408
      %v3664 = vsel %vm3663, %v3598, %v3659
      %v3665 = vsel %vm3663, %v3599, %v3660
      %v3666 = vsel %vm3663, %v3600, %v3661
      %v3667 = vsel %vm3663, %v3601, %v3662
      %3668 = vst.msk [vmem:[%s685] sm:$0xff] %vm717, %v3664
      %3669 = vst.msk [vmem:[%s685 + $0x8] sm:$0xff] %vm717, %v3665
      %3670 = vst.msk [vmem:[%s685 + $0x10] sm:$0xff] %vm717, %v3666
      %3671 = vst.msk [vmem:[%s685 + $0x18] sm:$0xff] %vm717, %v3667
      %s3672 = smul.u32 4, %s33
      %p3673 = scmp.lt.s32.totalorder %s3672, 7
      %s3674 = scalar_select %p3673, %s3672, 7
      %s3675 = smul.addr %s3674, 8
      %s3676 = scalar_lea.vmem %s22, %s3675
      // Predicated region
      $region109: #{tpu_custom_call.1} parent=107 // pred_check
        %p3677 = pneg %p518
      $region110: #{tpu_custom_call.1} parent=107 // pred_check_branch
        %3679 = sbr.rel (%p3677) target = $region112
      $region111: #{tpu_custom_call.1} parent=107 // pred_region
        %s3680 = smul.u32 4, %s33
      $region112: #{tpu_custom_call.1} parent=107 // pred_fallthru
        _
    $region108: #{tpu_custom_call.1} parent=5 // pred_fallthru
      _
    %p3681 = scmp.le.s32.totalorder 2, %s28
    // Predicated region
    $region113: #{tpu_custom_call.1} parent=5 // pred_check
      %p3682 = pneg %p3681
    $region114: #{tpu_custom_call.1} parent=5 // pred_check_branch
      %3684 = sbr.rel (%p3682) target = $region116
    $region115: #{tpu_custom_call.1} parent=5 // pred_region
      %s3685 = ssub.s32 %s28, 2
      // Predicated region
      $region117: #{tpu_custom_call.1} parent=115 // pred_check
        %p3686 = pneg %p524
      $region118: #{tpu_custom_call.1} parent=115 // pred_check_branch
        %3688 = sbr.rel (%p3686) target = $region120
      $region119: #{tpu_custom_call.1} parent=115 // pred_region
        %s3689 = smul.u32 4, %s34
        %p3690 = scmp.lt.s32.totalorder %s3689, 7
        %s3691 = scalar_select %p3690, %s3689, 7
        %s3692 = smul.addr %s3691, 8
        %s3693 = scalar_lea.vmem %s22, %s3692
      $region120: #{tpu_custom_call.1} parent=115 // pred_fallthru
        _
    $region116: #{tpu_custom_call.1} parent=5 // pred_fallthru
      _
  $region6: #{tpu_custom_call.1} parent=0 // loop_footer
    %s32 = sadd.s32 1, %s28
  $region7: #{tpu_custom_call.1} parent=0 // loop_footer_branch
    %27 = sbr.rel target = $region3
  $region8: #{tpu_custom_call.1} parent=0 // loop_exit
    _

</llo_original>
